<compile_context>
chip_gen: v6e
topology: v6e:2x2x1
jax: 0.10.0
libtpu: 0.0.40
codegen_flags: <defaults>
</compile_context>

<pallas_src>
import functools

import jax
import jax.numpy as jnp
import numpy as np
from jax.experimental import pallas as pl
from jax.experimental.pallas import tpu as pltpu

KSIZE = 4
STRIDES = [1, 2, 2, 2]      # blocks 1-4 ; final layer: stride 2, pad 1
PADS = [0, 1, 1, 1]
BN_EPS = 1e-5
LANE = 128


def _round_up(x, m):
    return (x + m - 1) // m * m


# --------------------------------------------------------------------------
# Pallas kernels
# --------------------------------------------------------------------------
def _convt_bn_relu_kernel(cols_ref, w_ref, gamma_ref, beta_ref, out_ref,
                          sum_ref, sq_ref, *, count):
    """One (cout-tile, phase) grid step: fused convT-matmul + BN + ReLU.

    cols_ref : (1, KC, Mp)  bf16   phase im2col slab (KC = taps * Cin)
    w_ref    : (1, TC, KC)  bf16   phase weight tile
    gamma/beta: (TC, 1)     f32
    out_ref  : (P, TC, Mp)  f32    resident across the phase (arbitrary) axis
    sum/sq   : (TC, 1)      f32    VMEM scratch, one-pass BN statistics
    Zero-padded M lanes / Cout rows produce exactly-zero conv outputs, so the
    statistics (divided by the true element count) are unaffected.
    """
    p = pl.program_id(1)

    @pl.when(p == 0)
    def _init():
        sum_ref[...] = jnp.zeros_like(sum_ref)
        sq_ref[...] = jnp.zeros_like(sq_ref)

    # Single fused MXU matmul: contraction over taps*Cin fills the MXU.
    acc = jnp.dot(w_ref[0], cols_ref[0], preferred_element_type=jnp.float32)
    out_ref[p] = acc
    sum_ref[...] += jnp.sum(acc, axis=1, keepdims=True)
    sq_ref[...] += jnp.sum(acc * acc, axis=1, keepdims=True)

    @pl.when(p == pl.num_programs(1) - 1)
    def _finalize():
        inv_n = 1.0 / count
        mean = sum_ref[...] * inv_n                                # (TC, 1)
        var = jnp.maximum(sq_ref[...] * inv_n - mean * mean, 0.0)
        scale = gamma_ref[...] * jax.lax.rsqrt(var + BN_EPS)
        shift = beta_ref[...] - mean * scale
        y = out_ref[...] * scale[None] + shift[None]               # (P,TC,Mp)
        out_ref[...] = jnp.maximum(y, 0.0)


def _convt_bias_tanh_kernel(cols_ref, w_ref, bias_ref, out_ref):
    """Final layer: fused convT-matmul + bias + tanh (no BN, per-phase store)."""
    acc = jnp.dot(w_ref[0], cols_ref[0], preferred_element_type=jnp.float32)
    out_ref[0] = jnp.tanh(acc + bias_ref[...])


# --------------------------------------------------------------------------
# Host-side glue: phase decomposition, weight packing, layer wrapper.
# --------------------------------------------------------------------------
def _phase_taps_1d(k, stride, pad):
    taps = []
    for r in range(stride):
        tr = [(ky, (r + pad - ky) // stride)
              for ky in range(k) if (r + pad - ky) % stride == 0]
        tr.sort(key=lambda kt: kt[1])
        taps.append(tr)
    return taps


def _phase_cols_weights(x_cnhw, w, stride, padding):
    """Sub-pixel decomposition: cols (P, KC, Mp) bf16, weights (P, Cout, KC) bf16."""
    assert KSIZE % stride == 0
    cin, n, h, wdim = x_cnhw.shape
    cout, k = w.shape[1], w.shape[2]
    h_out = (h - 1) * stride - 2 * padding + k
    w_out = (wdim - 1) * stride - 2 * padding + k
    ho, wo = h_out // stride, w_out // stride
    taps = _phase_taps_1d(k, stride, padding)
    tvals = [t for tr in taps for _, t in tr]
    pad_lo = max(0, -min(tvals))
    pad_hi_h = max(0, ho - 1 + max(tvals) - (h - 1))
    pad_hi_w = max(0, wo - 1 + max(tvals) - (wdim - 1))
    xp = jnp.pad(x_cnhw, ((0, 0), (0, 0), (pad_lo, pad_hi_h),
                          (pad_lo, pad_hi_w)))

    m = n * ho * wo
    mp = _round_up(m, LANE)
    t2 = len(taps[0]) ** 2
    kc = t2 * cin

    cols_list, w_list = [], []
    for r in range(stride):
        for c in range(stride):
            col_taps, w_taps = [], []
            for ky, ty in taps[r]:
                for kx, tx in taps[c]:
                    a, b = ty + pad_lo, tx + pad_lo
                    col_taps.append(xp[:, :, a:a + ho, b:b + wo])  # (Cin,N,ho,wo)
                    w_taps.append(w[:, :, ky, kx])                 # (Cin,Cout)
            cols_list.append(jnp.stack(col_taps, 0).reshape(kc, m))
            w_list.append(jnp.stack(w_taps, 0).transpose(2, 0, 1)
                          .reshape(cout, kc))
    cols_all = jnp.stack(cols_list, 0)                             # (P, KC, M)
    if mp > m:
        cols_all = jnp.pad(cols_all, ((0, 0), (0, 0), (0, mp - m)))
    w_all = jnp.stack(w_list, 0)                                   # (P, Cout, KC)
    return (cols_all.astype(jnp.bfloat16), w_all.astype(jnp.bfloat16),
            (n, cout, ho, wo, m, mp, kc))


def _convt_layer(x_cnhw, w, stride, padding, *, gamma=None, beta=None,
                 bias=None, final=False, tile_cout_max=128):
    cols, wmat, (n, cout, ho, wo, m, mp, kc) = _phase_cols_weights(
        x_cnhw, w, stride, padding)
    n_phase = stride * stride
    tile_cout = min(_round_up(cout, 8), tile_cout_max)
    cout_pad = _round_up(cout, tile_cout)
    n_ct = cout_pad // tile_cout
    if cout_pad > cout:
        wmat = jnp.pad(wmat, ((0, 0), (0, cout_pad - cout), (0, 0)))

    cols_spec = pl.BlockSpec((1, kc, mp), lambda i, p: (p, 0, 0))
    w_spec = pl.BlockSpec((1, tile_cout, kc), lambda i, p: (p, i, 0))
    vec_spec = pl.BlockSpec((tile_cout, 1), lambda i, p: (i, 0))

    # VMEM budget: double-buffered bf16 cols/weights + resident f32 out slab.
    vmem_bytes = (2 * kc * mp * 2 + 2 * tile_cout * kc * 2
                  + 2 * n_phase * tile_cout * mp * 4 + (2 << 20))
    vmem_limit = int(min(max(vmem_bytes, 32 << 20), 64 << 20))  # v7x-safe cap

    if final:
        bias2d = jnp.pad(bias.astype(jnp.float32).reshape(cout, 1),
                         ((0, cout_pad - cout), (0, 0)))
        out = pl.pallas_call(
            _convt_bias_tanh_kernel,
            out_shape=jax.ShapeDtypeStruct((n_phase, cout_pad, mp),
                                           jnp.float32),
            grid_spec=pltpu.PrefetchScalarGridSpec(
                num_scalar_prefetch=0, grid=(n_ct, n_phase),
                in_specs=[cols_spec, w_spec, vec_spec],
                out_specs=pl.BlockSpec((1, tile_cout, mp),
                                       lambda i, p: (p, i, 0))),
            compiler_params=pltpu.CompilerParams(
                dimension_semantics=("parallel", "parallel"),
                vmem_limit_bytes=vmem_limit),
        )(cols, wmat, bias2d)
    else:
        gamma2d = jnp.pad(gamma.astype(jnp.float32).reshape(cout, 1),
                          ((0, cout_pad - cout), (0, 0)), constant_values=1.0)
        beta2d = jnp.pad(beta.astype(jnp.float32).reshape(cout, 1),
                         ((0, cout_pad - cout), (0, 0)))
        kern = functools.partial(_convt_bn_relu_kernel,
                                 count=float(m * n_phase))
        out = pl.pallas_call(
            kern,
            out_shape=jax.ShapeDtypeStruct((n_phase, cout_pad, mp),
                                           jnp.float32),
            grid_spec=pltpu.PrefetchScalarGridSpec(
                num_scalar_prefetch=0, grid=(n_ct, n_phase),
                in_specs=[cols_spec, w_spec, vec_spec, vec_spec],
                out_specs=pl.BlockSpec((n_phase, tile_cout, mp),
                                       lambda i, p: (0, i, 0)),
                scratch_shapes=[pltpu.VMEM((tile_cout, 1), jnp.float32),
                                pltpu.VMEM((tile_cout, 1), jnp.float32)]),
            compiler_params=pltpu.CompilerParams(
                dimension_semantics=("parallel", "arbitrary"),
                vmem_limit_bytes=vmem_limit),
        )(cols, wmat, gamma2d, beta2d)

    # (P, Cout_pad, Mp) -> (Cout, N, H_out, W_out), interleaving the phases.
    out = out[:, :cout, :m].reshape(stride, stride, cout, n, ho, wo)
    return out.transpose(2, 3, 4, 0, 5, 1).reshape(cout, n, ho * stride,
                                                   wo * stride)


# --------------------------------------------------------------------------
# Generator forward (4 convT+BN+ReLU blocks, then convT+bias+tanh).
# --------------------------------------------------------------------------
def generator_forward(z, params):
    x = z.transpose(1, 0, 2, 3)                  # NCHW -> CNHW (channel-major)
    for (w, gamma, beta), s, p in zip(params["blocks"], STRIDES, PADS):
        x = _convt_layer(x, w, s, p, gamma=gamma, beta=beta)
    w5, b5 = params["final"]
    x = _convt_layer(x, w5, 2, 1, bias=b5, final=True)
    return x.transpose(1, 0, 2, 3)               # CNHW -> NCHW


def init_params(key, latent_dim, img_channels, features_g):
    dims = [latent_dim, features_g * 16, features_g * 8,
            features_g * 4, features_g * 2]
    blocks = []
    for i in range(4):
        key, sub = jax.random.split(key)
        w = 0.02 * jax.random.normal(sub, (dims[i], dims[i + 1], KSIZE, KSIZE),
                                     jnp.float32)
        gamma = jnp.ones((dims[i + 1],), jnp.float32)
        beta = jnp.zeros((dims[i + 1],), jnp.float32)
        blocks.append((w, gamma, beta))
    key, sub1, sub2 = jax.random.split(key, 3)
    w5 = 0.02 * jax.random.normal(sub1, (dims[4], img_channels, KSIZE, KSIZE),
                                  jnp.float32)
    b5 = 0.02 * jax.random.normal(sub2, (img_channels,), jnp.float32)
    return {"blocks": blocks, "final": (w5, b5)}


# --------------------------------------------------------------------------
# Reference (lax.conv_general_dilated, same bf16 matmul operands / f32 acc).
# --------------------------------------------------------------------------
def _convt_ref(x, w, stride, padding):
    k = w.shape[2]
    pad = k - 1 - padding
    rhs = jnp.flip(w, (2, 3)).transpose(1, 0, 2, 3).astype(jnp.bfloat16)
    return jax.lax.conv_general_dilated(
        x.astype(jnp.bfloat16), rhs, window_strides=(1, 1),
        padding=((pad, pad), (pad, pad)),
        lhs_dilation=(stride, stride),
        dimension_numbers=("NCHW", "OIHW", "NCHW"),
        preferred_element_type=jnp.float32)


def generator_forward_ref(z, params):
    x = z
    for (w, gamma, beta), s, p in zip(params["blocks"], STRIDES, PADS):
        y = _convt_ref(x, w, s, p)
        mean = y.mean(axis=(0, 2, 3), keepdims=True)
        var = jnp.square(y - mean).mean(axis=(0, 2, 3), keepdims=True)
        y = (y - mean) * jax.lax.rsqrt(var + BN_EPS)
        y = y * gamma.reshape(1, -1, 1, 1) + beta.reshape(1, -1, 1, 1)
        x = jnp.maximum(y, 0.0)
    w5, b5 = params["final"]
    return jnp.tanh(_convt_ref(x, w5, 2, 1) + b5.reshape(1, -1, 1, 1))


if __name__ == "__main__":
    latent_dim = 16
    features_g = 4
    img_channels = 3
    batch = 2

    key = jax.random.PRNGKey(0)
    key, pkey, zkey = jax.random.split(key, 3)
    params = init_params(pkey, latent_dim, img_channels, features_g)
    z = jax.random.normal(zkey, (batch, latent_dim, 1, 1), jnp.float32)

    fwd = jax.jit(generator_forward)
    out = jax.block_until_ready(fwd(z, params))
    assert out.shape == (batch, img_channels, 64, 64), out.shape

    ref = jax.block_until_ready(jax.jit(generator_forward_ref)(z, params))
    out_np, ref_np = np.asarray(out), np.asarray(ref)
    assert np.all(np.isfinite(out_np))
    max_diff = float(np.max(np.abs(out_np - ref_np)))
    assert np.allclose(out_np, ref_np, atol=5e-3, rtol=5e-3), (
        "max abs diff %g" % max_diff)

    print("KERNEL_OK")
</pallas_src>

<mosaic_0001>
module attributes {stable_mosaic.version = 11 : i64} {
  func.func @_convt_bn_relu_kernel(%arg0: i32, %arg1: i32, %arg2: memref<1x256x128xbf16, #tpu.memory_space<vmem>>, %arg3: memref<1x64x256xbf16, #tpu.memory_space<vmem>>, %arg4: memref<64x1xf32, #tpu.memory_space<vmem>>, %arg5: memref<64x1xf32, #tpu.memory_space<vmem>>, %arg6: memref<1x64x128xf32, #tpu.memory_space<vmem>>, %arg7: memref<64x1xf32, #tpu.memory_space<vmem>>, %arg8: memref<64x1xf32, #tpu.memory_space<vmem>>) attributes {dimension_semantics = [#tpu.dimension_semantics<parallel>, #tpu.dimension_semantics<arbitrary>], iteration_bounds = array<i64: 1, 1>, scalar_prefetch = 0 : i64, scratch_operands = 2 : i64, tpu.core_type = #tpu.core_type<tc>, window_params = [{transform_indices = @transform_0, window_bounds = array<i64: 1, 256, 128>}, {transform_indices = @transform_1, window_bounds = array<i64: 1, 64, 256>}, {transform_indices = @transform_2, window_bounds = array<i64: 64, 1>}, {transform_indices = @transform_3, window_bounds = array<i64: 64, 1>}, {transform_indices = @transform_4, window_bounds = array<i64: 1, 64, 128>}]} {
    %c0_i32 = arith.constant 0 : i32
    %0 = arith.cmpi eq, %arg1, %c0_i32 : i32
    %1 = arith.extui %0 : i1 to i32
    %c0_i32_0 = arith.constant 0 : i32
    %2 = arith.cmpi ne, %1, %c0_i32_0 : i32
    scf.if %2 {
      %cst_20 = arith.constant 0.000000e+00 : f32
      %26 = vector.broadcast %cst_20 : f32 to vector<64x1xf32>
      %c0_21 = arith.constant 0 : index
      %c0_22 = arith.constant 0 : index
      %27 = vector.load %arg7[%c0_21, %c0_22] : memref<64x1xf32, #tpu.memory_space<vmem>>, vector<64x1xf32>
      tpu.vector_store %arg7[%c0_21, %c0_22], %26 {strides = array<i32>} : memref<64x1xf32, #tpu.memory_space<vmem>>, vector<64x1xf32>,
      %cst_23 = arith.constant 0.000000e+00 : f32
      %28 = vector.broadcast %cst_23 : f32 to vector<64x1xf32>
      %c0_24 = arith.constant 0 : index
      %c0_25 = arith.constant 0 : index
      %29 = vector.load %arg8[%c0_24, %c0_25] : memref<64x1xf32, #tpu.memory_space<vmem>>, vector<64x1xf32>
      tpu.vector_store %arg8[%c0_24, %c0_25], %28 {strides = array<i32>} : memref<64x1xf32, #tpu.memory_space<vmem>>, vector<64x1xf32>,
    } else {
    }
    %c0 = arith.constant 0 : index
    %c0_1 = arith.constant 0 : index
    %c0_2 = arith.constant 0 : index
    %3 = vector.load %arg3[%c0, %c0_1, %c0_2] : memref<1x64x256xbf16, #tpu.memory_space<vmem>>, vector<1x64x256xbf16>
    %4 = vector.shape_cast %3 : vector<1x64x256xbf16> to vector<64x256xbf16>
    %c0_3 = arith.constant 0 : index
    %c0_4 = arith.constant 0 : index
    %c0_5 = arith.constant 0 : index
    %5 = vector.load %arg2[%c0_3, %c0_4, %c0_5] : memref<1x256x128xbf16, #tpu.memory_space<vmem>>, vector<1x256x128xbf16>
    %6 = vector.shape_cast %5 : vector<1x256x128xbf16> to vector<256x128xbf16>
    %cst = arith.constant dense<0.000000e+00> : vector<64x128xf32>
    %7 = tpu.matmul %4, %6, %cst {dimension_numbers = #tpu.dot_dimension_numbers<[1], [0], [0], [1], [0, 0, 1, 1], [], []>} : vector<64x256xbf16>, vector<256x128xbf16>, vector<64x128xf32> -> vector<64x128xf32>
    %8 = arith.index_cast %arg1 : i32 to index
    %c0_6 = arith.constant 0 : index
    %c0_7 = arith.constant 0 : index
    %9 = vector.load %arg6[%8, %c0_6, %c0_7] : memref<1x64x128xf32, #tpu.memory_space<vmem>>, vector<1x64x128xf32>
    %10 = vector.shape_cast %9 : vector<1x64x128xf32> to vector<64x128xf32>
    %11 = vector.shape_cast %7 : vector<64x128xf32> to vector<1x64x128xf32>
    tpu.vector_store %arg6[%8, %c0_6, %c0_7], %11 {strides = array<i32>} : memref<1x64x128xf32, #tpu.memory_space<vmem>>, vector<1x64x128xf32>,
    %c0_8 = arith.constant 0 : index
    %c0_9 = arith.constant 0 : index
    %12 = vector.load %arg7[%c0_8, %c0_9] : memref<64x1xf32, #tpu.memory_space<vmem>>, vector<64x1xf32>
    %cst_10 = arith.constant dense<0.000000e+00> : vector<64xf32>
    %13 = vector.multi_reduction <add>, %7, %cst_10 [1] : vector<64x128xf32> to vector<64xf32>
    %14 = vector.shape_cast %13 : vector<64xf32> to vector<64x1xf32>
    %15 = arith.addf %12, %14 : vector<64x1xf32>
    %c0_11 = arith.constant 0 : index
    %c0_12 = arith.constant 0 : index
    %16 = vector.load %arg7[%c0_11, %c0_12] : memref<64x1xf32, #tpu.memory_space<vmem>>, vector<64x1xf32>
    tpu.vector_store %arg7[%c0_11, %c0_12], %15 {strides = array<i32>} : memref<64x1xf32, #tpu.memory_space<vmem>>, vector<64x1xf32>,
    %c0_13 = arith.constant 0 : index
    %c0_14 = arith.constant 0 : index
    %17 = vector.load %arg8[%c0_13, %c0_14] : memref<64x1xf32, #tpu.memory_space<vmem>>, vector<64x1xf32>
    %18 = arith.mulf %7, %7 : vector<64x128xf32>
    %cst_15 = arith.constant dense<0.000000e+00> : vector<64xf32>
    %19 = vector.multi_reduction <add>, %18, %cst_15 [1] : vector<64x128xf32> to vector<64xf32>
    %20 = vector.shape_cast %19 : vector<64xf32> to vector<64x1xf32>
    %21 = arith.addf %17, %20 : vector<64x1xf32>
    %c0_16 = arith.constant 0 : index
    %c0_17 = arith.constant 0 : index
    %22 = vector.load %arg8[%c0_16, %c0_17] : memref<64x1xf32, #tpu.memory_space<vmem>>, vector<64x1xf32>
    tpu.vector_store %arg8[%c0_16, %c0_17], %21 {strides = array<i32>} : memref<64x1xf32, #tpu.memory_space<vmem>>, vector<64x1xf32>,
    %c0_i32_18 = arith.constant 0 : i32
    %23 = arith.cmpi eq, %arg1, %c0_i32_18 : i32
    %24 = arith.extui %23 : i1 to i32
    %c0_i32_19 = arith.constant 0 : i32
    %25 = arith.cmpi ne, %24, %c0_i32_19 : i32
    scf.if %25 {
      %c0_20 = arith.constant 0 : index
      %c0_21 = arith.constant 0 : index
      %26 = vector.load %arg7[%c0_20, %c0_21] : memref<64x1xf32, #tpu.memory_space<vmem>>, vector<64x1xf32>
      %cst_22 = arith.constant 3.125000e-02 : f32
      %27 = vector.broadcast %cst_22 : f32 to vector<64x1xf32>
      %28 = arith.mulf %26, %27 : vector<64x1xf32>
      %c0_23 = arith.constant 0 : index
      %c0_24 = arith.constant 0 : index
      %29 = vector.load %arg8[%c0_23, %c0_24] : memref<64x1xf32, #tpu.memory_space<vmem>>, vector<64x1xf32>
      %cst_25 = arith.constant 3.125000e-02 : f32
      %30 = vector.broadcast %cst_25 : f32 to vector<64x1xf32>
      %31 = arith.mulf %29, %30 : vector<64x1xf32>
      %32 = arith.mulf %28, %28 : vector<64x1xf32>
      %33 = arith.subf %31, %32 : vector<64x1xf32>
      %cst_26 = arith.constant 0.000000e+00 : f32
      %34 = vector.broadcast %cst_26 : f32 to vector<64x1xf32>
      %35 = arith.maximumf %33, %34 : vector<64x1xf32>
      %c0_27 = arith.constant 0 : index
      %c0_28 = arith.constant 0 : index
      %36 = vector.load %arg4[%c0_27, %c0_28] : memref<64x1xf32, #tpu.memory_space<vmem>>, vector<64x1xf32>
      %cst_29 = arith.constant 9.99999974E-6 : f32
      %37 = vector.broadcast %cst_29 : f32 to vector<64x1xf32>
      %38 = arith.addf %35, %37 : vector<64x1xf32>
      %39 = math.rsqrt %38 : vector<64x1xf32>
      %40 = arith.mulf %36, %39 : vector<64x1xf32>
      %c0_30 = arith.constant 0 : index
      %c0_31 = arith.constant 0 : index
      %41 = vector.load %arg5[%c0_30, %c0_31] : memref<64x1xf32, #tpu.memory_space<vmem>>, vector<64x1xf32>
      %42 = arith.mulf %28, %40 : vector<64x1xf32>
      %43 = arith.subf %41, %42 : vector<64x1xf32>
      %c0_32 = arith.constant 0 : index
      %c0_33 = arith.constant 0 : index
      %c0_34 = arith.constant 0 : index
      %44 = vector.load %arg6[%c0_32, %c0_33, %c0_34] : memref<1x64x128xf32, #tpu.memory_space<vmem>>, vector<1x64x128xf32>
      %45 = vector.shape_cast %40 : vector<64x1xf32> to vector<1x64x1xf32>
      %46 = vector.broadcast %45 : vector<1x64x1xf32> to vector<1x64x128xf32>
      %47 = arith.mulf %44, %46 : vector<1x64x128xf32>
      %48 = vector.shape_cast %43 : vector<64x1xf32> to vector<1x64x1xf32>
      %49 = vector.broadcast %48 : vector<1x64x1xf32> to vector<1x64x128xf32>
      %50 = arith.addf %47, %49 : vector<1x64x128xf32>
      %cst_35 = arith.constant 0.000000e+00 : f32
      %51 = vector.broadcast %cst_35 : f32 to vector<1x64x128xf32>
      %52 = arith.maximumf %50, %51 : vector<1x64x128xf32>
      %c0_36 = arith.constant 0 : index
      %c0_37 = arith.constant 0 : index
      %c0_38 = arith.constant 0 : index
      %53 = vector.load %arg6[%c0_36, %c0_37, %c0_38] : memref<1x64x128xf32, #tpu.memory_space<vmem>>, vector<1x64x128xf32>
      tpu.vector_store %arg6[%c0_36, %c0_37, %c0_38], %52 {strides = array<i32>} : memref<1x64x128xf32, #tpu.memory_space<vmem>>, vector<1x64x128xf32>,
    } else {
    }
    return
  }
  func.func @transform_0(%arg0: i32, %arg1: i32) -> (i32, i32, i32) {
    %c0_i32 = arith.constant 0 : i32
    %c0_i32_0 = arith.constant 0 : i32
    %c0_i32_1 = arith.constant 0 : i32
    return %arg1, %c0_i32, %c0_i32_0 : i32, i32, i32
  }
  func.func @transform_1(%arg0: i32, %arg1: i32) -> (i32, i32, i32) {
    %c0_i32 = arith.constant 0 : i32
    %c0_i32_0 = arith.constant 0 : i32
    return %arg1, %arg0, %c0_i32 : i32, i32, i32
  }
  func.func @transform_2(%arg0: i32, %arg1: i32) -> (i32, i32) {
    %c0_i32 = arith.constant 0 : i32
    %c0_i32_0 = arith.constant 0 : i32
    return %arg0, %c0_i32 : i32, i32
  }
  func.func @transform_3(%arg0: i32, %arg1: i32) -> (i32, i32) {
    %c0_i32 = arith.constant 0 : i32
    %c0_i32_0 = arith.constant 0 : i32
    return %arg0, %c0_i32 : i32, i32
  }
  func.func @transform_4(%arg0: i32, %arg1: i32) -> (i32, i32, i32) {
    %c0_i32 = arith.constant 0 : i32
    %c0_i32_0 = arith.constant 0 : i32
    %c0_i32_1 = arith.constant 0 : i32
    return %c0_i32, %arg0, %c0_i32_0 : i32, i32, i32
  }
}

module attributes {stable_mosaic.version = 11 : i64} {
  func.func @_convt_bn_relu_kernel(%arg0: i32, %arg1: i32, %arg2: memref<1x256x128xbf16, #tpu.memory_space<vmem>>, %arg3: memref<1x32x256xbf16, #tpu.memory_space<vmem>>, %arg4: memref<32x1xf32, #tpu.memory_space<vmem>>, %arg5: memref<32x1xf32, #tpu.memory_space<vmem>>, %arg6: memref<4x32x128xf32, #tpu.memory_space<vmem>>, %arg7: memref<32x1xf32, #tpu.memory_space<vmem>>, %arg8: memref<32x1xf32, #tpu.memory_space<vmem>>) attributes {dimension_semantics = [#tpu.dimension_semantics<parallel>, #tpu.dimension_semantics<arbitrary>], iteration_bounds = array<i64: 1, 4>, scalar_prefetch = 0 : i64, scratch_operands = 2 : i64, tpu.core_type = #tpu.core_type<tc>, window_params = [{transform_indices = @transform_0, window_bounds = array<i64: 1, 256, 128>}, {transform_indices = @transform_1, window_bounds = array<i64: 1, 32, 256>}, {transform_indices = @transform_2, window_bounds = array<i64: 32, 1>}, {transform_indices = @transform_3, window_bounds = array<i64: 32, 1>}, {transform_indices = @transform_4, window_bounds = array<i64: 4, 32, 128>}]} {
    %c0_i32 = arith.constant 0 : i32
    %0 = arith.cmpi eq, %arg1, %c0_i32 : i32
    %1 = arith.extui %0 : i1 to i32
    %c0_i32_0 = arith.constant 0 : i32
    %2 = arith.cmpi ne, %1, %c0_i32_0 : i32
    scf.if %2 {
      %cst_19 = arith.constant 0.000000e+00 : f32
      %26 = vector.broadcast %cst_19 : f32 to vector<32x1xf32>
      %c0_20 = arith.constant 0 : index
      %c0_21 = arith.constant 0 : index
      %27 = vector.load %arg7[%c0_20, %c0_21] : memref<32x1xf32, #tpu.memory_space<vmem>>, vector<32x1xf32>
      tpu.vector_store %arg7[%c0_20, %c0_21], %26 {strides = array<i32>} : memref<32x1xf32, #tpu.memory_space<vmem>>, vector<32x1xf32>,
      %cst_22 = arith.constant 0.000000e+00 : f32
      %28 = vector.broadcast %cst_22 : f32 to vector<32x1xf32>
      %c0_23 = arith.constant 0 : index
      %c0_24 = arith.constant 0 : index
      %29 = vector.load %arg8[%c0_23, %c0_24] : memref<32x1xf32, #tpu.memory_space<vmem>>, vector<32x1xf32>
      tpu.vector_store %arg8[%c0_23, %c0_24], %28 {strides = array<i32>} : memref<32x1xf32, #tpu.memory_space<vmem>>, vector<32x1xf32>,
    } else {
    }
    %c0 = arith.constant 0 : index
    %c0_1 = arith.constant 0 : index
    %c0_2 = arith.constant 0 : index
    %3 = vector.load %arg3[%c0, %c0_1, %c0_2] : memref<1x32x256xbf16, #tpu.memory_space<vmem>>, vector<1x32x256xbf16>
    %4 = vector.shape_cast %3 : vector<1x32x256xbf16> to vector<32x256xbf16>
    %c0_3 = arith.constant 0 : index
    %c0_4 = arith.constant 0 : index
    %c0_5 = arith.constant 0 : index
    %5 = vector.load %arg2[%c0_3, %c0_4, %c0_5] : memref<1x256x128xbf16, #tpu.memory_space<vmem>>, vector<1x256x128xbf16>
    %6 = vector.shape_cast %5 : vector<1x256x128xbf16> to vector<256x128xbf16>
    %cst = arith.constant dense<0.000000e+00> : vector<32x128xf32>
    %7 = tpu.matmul %4, %6, %cst {dimension_numbers = #tpu.dot_dimension_numbers<[1], [0], [0], [1], [0, 0, 1, 1], [], []>} : vector<32x256xbf16>, vector<256x128xbf16>, vector<32x128xf32> -> vector<32x128xf32>
    %8 = arith.index_cast %arg1 : i32 to index
    %c0_6 = arith.constant 0 : index
    %c0_7 = arith.constant 0 : index
    %9 = vector.load %arg6[%8, %c0_6, %c0_7] : memref<4x32x128xf32, #tpu.memory_space<vmem>>, vector<1x32x128xf32>
    %10 = vector.shape_cast %9 : vector<1x32x128xf32> to vector<32x128xf32>
    %11 = vector.shape_cast %7 : vector<32x128xf32> to vector<1x32x128xf32>
    tpu.vector_store %arg6[%8, %c0_6, %c0_7], %11 {strides = array<i32>} : memref<4x32x128xf32, #tpu.memory_space<vmem>>, vector<1x32x128xf32>,
    %c0_8 = arith.constant 0 : index
    %c0_9 = arith.constant 0 : index
    %12 = vector.load %arg7[%c0_8, %c0_9] : memref<32x1xf32, #tpu.memory_space<vmem>>, vector<32x1xf32>
    %cst_10 = arith.constant dense<0.000000e+00> : vector<32xf32>
    %13 = vector.multi_reduction <add>, %7, %cst_10 [1] : vector<32x128xf32> to vector<32xf32>
    %14 = vector.shape_cast %13 : vector<32xf32> to vector<32x1xf32>
    %15 = arith.addf %12, %14 : vector<32x1xf32>
    %c0_11 = arith.constant 0 : index
    %c0_12 = arith.constant 0 : index
    %16 = vector.load %arg7[%c0_11, %c0_12] : memref<32x1xf32, #tpu.memory_space<vmem>>, vector<32x1xf32>
    tpu.vector_store %arg7[%c0_11, %c0_12], %15 {strides = array<i32>} : memref<32x1xf32, #tpu.memory_space<vmem>>, vector<32x1xf32>,
    %c0_13 = arith.constant 0 : index
    %c0_14 = arith.constant 0 : index
    %17 = vector.load %arg8[%c0_13, %c0_14] : memref<32x1xf32, #tpu.memory_space<vmem>>, vector<32x1xf32>
    %18 = arith.mulf %7, %7 : vector<32x128xf32>
    %cst_15 = arith.constant dense<0.000000e+00> : vector<32xf32>
    %19 = vector.multi_reduction <add>, %18, %cst_15 [1] : vector<32x128xf32> to vector<32xf32>
    %20 = vector.shape_cast %19 : vector<32xf32> to vector<32x1xf32>
    %21 = arith.addf %17, %20 : vector<32x1xf32>
    %c0_16 = arith.constant 0 : index
    %c0_17 = arith.constant 0 : index
    %22 = vector.load %arg8[%c0_16, %c0_17] : memref<32x1xf32, #tpu.memory_space<vmem>>, vector<32x1xf32>
    tpu.vector_store %arg8[%c0_16, %c0_17], %21 {strides = array<i32>} : memref<32x1xf32, #tpu.memory_space<vmem>>, vector<32x1xf32>,
    %c3_i32 = arith.constant 3 : i32
    %23 = arith.cmpi eq, %arg1, %c3_i32 : i32
    %24 = arith.extui %23 : i1 to i32
    %c0_i32_18 = arith.constant 0 : i32
    %25 = arith.cmpi ne, %24, %c0_i32_18 : i32
    scf.if %25 {
      %c0_19 = arith.constant 0 : index
      %c0_20 = arith.constant 0 : index
      %26 = vector.load %arg7[%c0_19, %c0_20] : memref<32x1xf32, #tpu.memory_space<vmem>>, vector<32x1xf32>
      %cst_21 = arith.constant 7.812500e-03 : f32
      %27 = vector.broadcast %cst_21 : f32 to vector<32x1xf32>
      %28 = arith.mulf %26, %27 : vector<32x1xf32>
      %c0_22 = arith.constant 0 : index
      %c0_23 = arith.constant 0 : index
      %29 = vector.load %arg8[%c0_22, %c0_23] : memref<32x1xf32, #tpu.memory_space<vmem>>, vector<32x1xf32>
      %cst_24 = arith.constant 7.812500e-03 : f32
      %30 = vector.broadcast %cst_24 : f32 to vector<32x1xf32>
      %31 = arith.mulf %29, %30 : vector<32x1xf32>
      %32 = arith.mulf %28, %28 : vector<32x1xf32>
      %33 = arith.subf %31, %32 : vector<32x1xf32>
      %cst_25 = arith.constant 0.000000e+00 : f32
      %34 = vector.broadcast %cst_25 : f32 to vector<32x1xf32>
      %35 = arith.maximumf %33, %34 : vector<32x1xf32>
      %c0_26 = arith.constant 0 : index
      %c0_27 = arith.constant 0 : index
      %36 = vector.load %arg4[%c0_26, %c0_27] : memref<32x1xf32, #tpu.memory_space<vmem>>, vector<32x1xf32>
      %cst_28 = arith.constant 9.99999974E-6 : f32
      %37 = vector.broadcast %cst_28 : f32 to vector<32x1xf32>
      %38 = arith.addf %35, %37 : vector<32x1xf32>
      %39 = math.rsqrt %38 : vector<32x1xf32>
      %40 = arith.mulf %36, %39 : vector<32x1xf32>
      %c0_29 = arith.constant 0 : index
      %c0_30 = arith.constant 0 : index
      %41 = vector.load %arg5[%c0_29, %c0_30] : memref<32x1xf32, #tpu.memory_space<vmem>>, vector<32x1xf32>
      %42 = arith.mulf %28, %40 : vector<32x1xf32>
      %43 = arith.subf %41, %42 : vector<32x1xf32>
      %c0_31 = arith.constant 0 : index
      %c0_32 = arith.constant 0 : index
      %c0_33 = arith.constant 0 : index
      %44 = vector.load %arg6[%c0_31, %c0_32, %c0_33] : memref<4x32x128xf32, #tpu.memory_space<vmem>>, vector<4x32x128xf32>
      %45 = vector.shape_cast %40 : vector<32x1xf32> to vector<1x32x1xf32>
      %46 = vector.broadcast %45 : vector<1x32x1xf32> to vector<4x32x128xf32>
      %47 = arith.mulf %44, %46 : vector<4x32x128xf32>
      %48 = vector.shape_cast %43 : vector<32x1xf32> to vector<1x32x1xf32>
      %49 = vector.broadcast %48 : vector<1x32x1xf32> to vector<4x32x128xf32>
      %50 = arith.addf %47, %49 : vector<4x32x128xf32>
      %cst_34 = arith.constant 0.000000e+00 : f32
      %51 = vector.broadcast %cst_34 : f32 to vector<4x32x128xf32>
      %52 = arith.maximumf %50, %51 : vector<4x32x128xf32>
      %c0_35 = arith.constant 0 : index
      %c0_36 = arith.constant 0 : index
      %c0_37 = arith.constant 0 : index
      %53 = vector.load %arg6[%c0_35, %c0_36, %c0_37] : memref<4x32x128xf32, #tpu.memory_space<vmem>>, vector<4x32x128xf32>
      tpu.vector_store %arg6[%c0_35, %c0_36, %c0_37], %52 {strides = array<i32>} : memref<4x32x128xf32, #tpu.memory_space<vmem>>, vector<4x32x128xf32>,
    } else {
    }
    return
  }
  func.func @transform_0(%arg0: i32, %arg1: i32) -> (i32, i32, i32) {
    %c0_i32 = arith.constant 0 : i32
    %c0_i32_0 = arith.constant 0 : i32
    %c0_i32_1 = arith.constant 0 : i32
    return %arg1, %c0_i32, %c0_i32_0 : i32, i32, i32
  }
  func.func @transform_1(%arg0: i32, %arg1: i32) -> (i32, i32, i32) {
    %c0_i32 = arith.constant 0 : i32
    %c0_i32_0 = arith.constant 0 : i32
    return %arg1, %arg0, %c0_i32 : i32, i32, i32
  }
  func.func @transform_2(%arg0: i32, %arg1: i32) -> (i32, i32) {
    %c0_i32 = arith.constant 0 : i32
    %c0_i32_0 = arith.constant 0 : i32
    return %arg0, %c0_i32 : i32, i32
  }
  func.func @transform_3(%arg0: i32, %arg1: i32) -> (i32, i32) {
    %c0_i32 = arith.constant 0 : i32
    %c0_i32_0 = arith.constant 0 : i32
    return %arg0, %c0_i32 : i32, i32
  }
  func.func @transform_4(%arg0: i32, %arg1: i32) -> (i32, i32, i32) {
    %c0_i32 = arith.constant 0 : i32
    %c0_i32_0 = arith.constant 0 : i32
    %c0_i32_1 = arith.constant 0 : i32
    return %c0_i32, %arg0, %c0_i32_0 : i32, i32, i32
  }
}

module attributes {stable_mosaic.version = 11 : i64} {
  func.func @_convt_bn_relu_kernel(%arg0: i32, %arg1: i32, %arg2: memref<1x128x128xbf16, #tpu.memory_space<vmem>>, %arg3: memref<1x16x128xbf16, #tpu.memory_space<vmem>>, %arg4: memref<16x1xf32, #tpu.memory_space<vmem>>, %arg5: memref<16x1xf32, #tpu.memory_space<vmem>>, %arg6: memref<4x16x128xf32, #tpu.memory_space<vmem>>, %arg7: memref<16x1xf32, #tpu.memory_space<vmem>>, %arg8: memref<16x1xf32, #tpu.memory_space<vmem>>) attributes {dimension_semantics = [#tpu.dimension_semantics<parallel>, #tpu.dimension_semantics<arbitrary>], iteration_bounds = array<i64: 1, 4>, scalar_prefetch = 0 : i64, scratch_operands = 2 : i64, tpu.core_type = #tpu.core_type<tc>, window_params = [{transform_indices = @transform_0, window_bounds = array<i64: 1, 128, 128>}, {transform_indices = @transform_1, window_bounds = array<i64: 1, 16, 128>}, {transform_indices = @transform_2, window_bounds = array<i64: 16, 1>}, {transform_indices = @transform_3, window_bounds = array<i64: 16, 1>}, {transform_indices = @transform_4, window_bounds = array<i64: 4, 16, 128>}]} {
    %c0_i32 = arith.constant 0 : i32
    %0 = arith.cmpi eq, %arg1, %c0_i32 : i32
    %1 = arith.extui %0 : i1 to i32
    %c0_i32_0 = arith.constant 0 : i32
    %2 = arith.cmpi ne, %1, %c0_i32_0 : i32
    scf.if %2 {
      %cst_19 = arith.constant 0.000000e+00 : f32
      %26 = vector.broadcast %cst_19 : f32 to vector<16x1xf32>
      %c0_20 = arith.constant 0 : index
      %c0_21 = arith.constant 0 : index
      %27 = vector.load %arg7[%c0_20, %c0_21] : memref<16x1xf32, #tpu.memory_space<vmem>>, vector<16x1xf32>
      tpu.vector_store %arg7[%c0_20, %c0_21], %26 {strides = array<i32>} : memref<16x1xf32, #tpu.memory_space<vmem>>, vector<16x1xf32>,
      %cst_22 = arith.constant 0.000000e+00 : f32
      %28 = vector.broadcast %cst_22 : f32 to vector<16x1xf32>
      %c0_23 = arith.constant 0 : index
      %c0_24 = arith.constant 0 : index
      %29 = vector.load %arg8[%c0_23, %c0_24] : memref<16x1xf32, #tpu.memory_space<vmem>>, vector<16x1xf32>
      tpu.vector_store %arg8[%c0_23, %c0_24], %28 {strides = array<i32>} : memref<16x1xf32, #tpu.memory_space<vmem>>, vector<16x1xf32>,
    } else {
    }
    %c0 = arith.constant 0 : index
    %c0_1 = arith.constant 0 : index
    %c0_2 = arith.constant 0 : index
    %3 = vector.load %arg3[%c0, %c0_1, %c0_2] : memref<1x16x128xbf16, #tpu.memory_space<vmem>>, vector<1x16x128xbf16>
    %4 = vector.shape_cast %3 : vector<1x16x128xbf16> to vector<16x128xbf16>
    %c0_3 = arith.constant 0 : index
    %c0_4 = arith.constant 0 : index
    %c0_5 = arith.constant 0 : index
    %5 = vector.load %arg2[%c0_3, %c0_4, %c0_5] : memref<1x128x128xbf16, #tpu.memory_space<vmem>>, vector<1x128x128xbf16>
    %6 = vector.shape_cast %5 : vector<1x128x128xbf16> to vector<128x128xbf16>
    %cst = arith.constant dense<0.000000e+00> : vector<16x128xf32>
    %7 = tpu.matmul %4, %6, %cst {dimension_numbers = #tpu.dot_dimension_numbers<[1], [0], [0], [1], [0, 0, 1, 1], [], []>} : vector<16x128xbf16>, vector<128x128xbf16>, vector<16x128xf32> -> vector<16x128xf32>
    %8 = arith.index_cast %arg1 : i32 to index
    %c0_6 = arith.constant 0 : index
    %c0_7 = arith.constant 0 : index
    %9 = vector.load %arg6[%8, %c0_6, %c0_7] : memref<4x16x128xf32, #tpu.memory_space<vmem>>, vector<1x16x128xf32>
    %10 = vector.shape_cast %9 : vector<1x16x128xf32> to vector<16x128xf32>
    %11 = vector.shape_cast %7 : vector<16x128xf32> to vector<1x16x128xf32>
    tpu.vector_store %arg6[%8, %c0_6, %c0_7], %11 {strides = array<i32>} : memref<4x16x128xf32, #tpu.memory_space<vmem>>, vector<1x16x128xf32>,
    %c0_8 = arith.constant 0 : index
    %c0_9 = arith.constant 0 : index
    %12 = vector.load %arg7[%c0_8, %c0_9] : memref<16x1xf32, #tpu.memory_space<vmem>>, vector<16x1xf32>
    %cst_10 = arith.constant dense<0.000000e+00> : vector<16xf32>
    %13 = vector.multi_reduction <add>, %7, %cst_10 [1] : vector<16x128xf32> to vector<16xf32>
    %14 = vector.shape_cast %13 : vector<16xf32> to vector<16x1xf32>
    %15 = arith.addf %12, %14 : vector<16x1xf32>
    %c0_11 = arith.constant 0 : index
    %c0_12 = arith.constant 0 : index
    %16 = vector.load %arg7[%c0_11, %c0_12] : memref<16x1xf32, #tpu.memory_space<vmem>>, vector<16x1xf32>
    tpu.vector_store %arg7[%c0_11, %c0_12], %15 {strides = array<i32>} : memref<16x1xf32, #tpu.memory_space<vmem>>, vector<16x1xf32>,
    %c0_13 = arith.constant 0 : index
    %c0_14 = arith.constant 0 : index
    %17 = vector.load %arg8[%c0_13, %c0_14] : memref<16x1xf32, #tpu.memory_space<vmem>>, vector<16x1xf32>
    %18 = arith.mulf %7, %7 : vector<16x128xf32>
    %cst_15 = arith.constant dense<0.000000e+00> : vector<16xf32>
    %19 = vector.multi_reduction <add>, %18, %cst_15 [1] : vector<16x128xf32> to vector<16xf32>
    %20 = vector.shape_cast %19 : vector<16xf32> to vector<16x1xf32>
    %21 = arith.addf %17, %20 : vector<16x1xf32>
    %c0_16 = arith.constant 0 : index
    %c0_17 = arith.constant 0 : index
    %22 = vector.load %arg8[%c0_16, %c0_17] : memref<16x1xf32, #tpu.memory_space<vmem>>, vector<16x1xf32>
    tpu.vector_store %arg8[%c0_16, %c0_17], %21 {strides = array<i32>} : memref<16x1xf32, #tpu.memory_space<vmem>>, vector<16x1xf32>,
    %c3_i32 = arith.constant 3 : i32
    %23 = arith.cmpi eq, %arg1, %c3_i32 : i32
    %24 = arith.extui %23 : i1 to i32
    %c0_i32_18 = arith.constant 0 : i32
    %25 = arith.cmpi ne, %24, %c0_i32_18 : i32
    scf.if %25 {
      %c0_19 = arith.constant 0 : index
      %c0_20 = arith.constant 0 : index
      %26 = vector.load %arg7[%c0_19, %c0_20] : memref<16x1xf32, #tpu.memory_space<vmem>>, vector<16x1xf32>
      %cst_21 = arith.constant 0.001953125 : f32
      %27 = vector.broadcast %cst_21 : f32 to vector<16x1xf32>
      %28 = arith.mulf %26, %27 : vector<16x1xf32>
      %c0_22 = arith.constant 0 : index
      %c0_23 = arith.constant 0 : index
      %29 = vector.load %arg8[%c0_22, %c0_23] : memref<16x1xf32, #tpu.memory_space<vmem>>, vector<16x1xf32>
      %cst_24 = arith.constant 0.001953125 : f32
      %30 = vector.broadcast %cst_24 : f32 to vector<16x1xf32>
      %31 = arith.mulf %29, %30 : vector<16x1xf32>
      %32 = arith.mulf %28, %28 : vector<16x1xf32>
      %33 = arith.subf %31, %32 : vector<16x1xf32>
      %cst_25 = arith.constant 0.000000e+00 : f32
      %34 = vector.broadcast %cst_25 : f32 to vector<16x1xf32>
      %35 = arith.maximumf %33, %34 : vector<16x1xf32>
      %c0_26 = arith.constant 0 : index
      %c0_27 = arith.constant 0 : index
      %36 = vector.load %arg4[%c0_26, %c0_27] : memref<16x1xf32, #tpu.memory_space<vmem>>, vector<16x1xf32>
      %cst_28 = arith.constant 9.99999974E-6 : f32
      %37 = vector.broadcast %cst_28 : f32 to vector<16x1xf32>
      %38 = arith.addf %35, %37 : vector<16x1xf32>
      %39 = math.rsqrt %38 : vector<16x1xf32>
      %40 = arith.mulf %36, %39 : vector<16x1xf32>
      %c0_29 = arith.constant 0 : index
      %c0_30 = arith.constant 0 : index
      %41 = vector.load %arg5[%c0_29, %c0_30] : memref<16x1xf32, #tpu.memory_space<vmem>>, vector<16x1xf32>
      %42 = arith.mulf %28, %40 : vector<16x1xf32>
      %43 = arith.subf %41, %42 : vector<16x1xf32>
      %c0_31 = arith.constant 0 : index
      %c0_32 = arith.constant 0 : index
      %c0_33 = arith.constant 0 : index
      %44 = vector.load %arg6[%c0_31, %c0_32, %c0_33] : memref<4x16x128xf32, #tpu.memory_space<vmem>>, vector<4x16x128xf32>
      %45 = vector.shape_cast %40 : vector<16x1xf32> to vector<1x16x1xf32>
      %46 = vector.broadcast %45 : vector<1x16x1xf32> to vector<4x16x128xf32>
      %47 = arith.mulf %44, %46 : vector<4x16x128xf32>
      %48 = vector.shape_cast %43 : vector<16x1xf32> to vector<1x16x1xf32>
      %49 = vector.broadcast %48 : vector<1x16x1xf32> to vector<4x16x128xf32>
      %50 = arith.addf %47, %49 : vector<4x16x128xf32>
      %cst_34 = arith.constant 0.000000e+00 : f32
      %51 = vector.broadcast %cst_34 : f32 to vector<4x16x128xf32>
      %52 = arith.maximumf %50, %51 : vector<4x16x128xf32>
      %c0_35 = arith.constant 0 : index
      %c0_36 = arith.constant 0 : index
      %c0_37 = arith.constant 0 : index
      %53 = vector.load %arg6[%c0_35, %c0_36, %c0_37] : memref<4x16x128xf32, #tpu.memory_space<vmem>>, vector<4x16x128xf32>
      tpu.vector_store %arg6[%c0_35, %c0_36, %c0_37], %52 {strides = array<i32>} : memref<4x16x128xf32, #tpu.memory_space<vmem>>, vector<4x16x128xf32>,
    } else {
    }
    return
  }
  func.func @transform_0(%arg0: i32, %arg1: i32) -> (i32, i32, i32) {
    %c0_i32 = arith.constant 0 : i32
    %c0_i32_0 = arith.constant 0 : i32
    %c0_i32_1 = arith.constant 0 : i32
    return %arg1, %c0_i32, %c0_i32_0 : i32, i32, i32
  }
  func.func @transform_1(%arg0: i32, %arg1: i32) -> (i32, i32, i32) {
    %c0_i32 = arith.constant 0 : i32
    %c0_i32_0 = arith.constant 0 : i32
    return %arg1, %arg0, %c0_i32 : i32, i32, i32
  }
  func.func @transform_2(%arg0: i32, %arg1: i32) -> (i32, i32) {
    %c0_i32 = arith.constant 0 : i32
    %c0_i32_0 = arith.constant 0 : i32
    return %arg0, %c0_i32 : i32, i32
  }
  func.func @transform_3(%arg0: i32, %arg1: i32) -> (i32, i32) {
    %c0_i32 = arith.constant 0 : i32
    %c0_i32_0 = arith.constant 0 : i32
    return %arg0, %c0_i32 : i32, i32
  }
  func.func @transform_4(%arg0: i32, %arg1: i32) -> (i32, i32, i32) {
    %c0_i32 = arith.constant 0 : i32
    %c0_i32_0 = arith.constant 0 : i32
    %c0_i32_1 = arith.constant 0 : i32
    return %c0_i32, %arg0, %c0_i32_0 : i32, i32, i32
  }
}

module attributes {stable_mosaic.version = 11 : i64} {
  func.func @_convt_bn_relu_kernel(%arg0: i32, %arg1: i32, %arg2: memref<1x64x512xbf16, #tpu.memory_space<vmem>>, %arg3: memref<1x8x64xbf16, #tpu.memory_space<vmem>>, %arg4: memref<8x1xf32, #tpu.memory_space<vmem>>, %arg5: memref<8x1xf32, #tpu.memory_space<vmem>>, %arg6: memref<4x8x512xf32, #tpu.memory_space<vmem>>, %arg7: memref<8x1xf32, #tpu.memory_space<vmem>>, %arg8: memref<8x1xf32, #tpu.memory_space<vmem>>) attributes {dimension_semantics = [#tpu.dimension_semantics<parallel>, #tpu.dimension_semantics<arbitrary>], iteration_bounds = array<i64: 1, 4>, scalar_prefetch = 0 : i64, scratch_operands = 2 : i64, tpu.core_type = #tpu.core_type<tc>, window_params = [{transform_indices = @transform_0, window_bounds = array<i64: 1, 64, 512>}, {transform_indices = @transform_1, window_bounds = array<i64: 1, 8, 64>}, {transform_indices = @transform_2, window_bounds = array<i64: 8, 1>}, {transform_indices = @transform_3, window_bounds = array<i64: 8, 1>}, {transform_indices = @transform_4, window_bounds = array<i64: 4, 8, 512>}]} {
    %c0_i32 = arith.constant 0 : i32
    %0 = arith.cmpi eq, %arg1, %c0_i32 : i32
    %1 = arith.extui %0 : i1 to i32
    %c0_i32_0 = arith.constant 0 : i32
    %2 = arith.cmpi ne, %1, %c0_i32_0 : i32
    scf.if %2 {
      %cst_19 = arith.constant 0.000000e+00 : f32
      %26 = vector.broadcast %cst_19 : f32 to vector<8x1xf32>
      %c0_20 = arith.constant 0 : index
      %c0_21 = arith.constant 0 : index
      %27 = vector.load %arg7[%c0_20, %c0_21] : memref<8x1xf32, #tpu.memory_space<vmem>>, vector<8x1xf32>
      tpu.vector_store %arg7[%c0_20, %c0_21], %26 {strides = array<i32>} : memref<8x1xf32, #tpu.memory_space<vmem>>, vector<8x1xf32>,
      %cst_22 = arith.constant 0.000000e+00 : f32
      %28 = vector.broadcast %cst_22 : f32 to vector<8x1xf32>
      %c0_23 = arith.constant 0 : index
      %c0_24 = arith.constant 0 : index
      %29 = vector.load %arg8[%c0_23, %c0_24] : memref<8x1xf32, #tpu.memory_space<vmem>>, vector<8x1xf32>
      tpu.vector_store %arg8[%c0_23, %c0_24], %28 {strides = array<i32>} : memref<8x1xf32, #tpu.memory_space<vmem>>, vector<8x1xf32>,
    } else {
    }
    %c0 = arith.constant 0 : index
    %c0_1 = arith.constant 0 : index
    %c0_2 = arith.constant 0 : index
    %3 = vector.load %arg3[%c0, %c0_1, %c0_2] : memref<1x8x64xbf16, #tpu.memory_space<vmem>>, vector<1x8x64xbf16>
    %4 = vector.shape_cast %3 : vector<1x8x64xbf16> to vector<8x64xbf16>
    %c0_3 = arith.constant 0 : index
    %c0_4 = arith.constant 0 : index
    %c0_5 = arith.constant 0 : index
    %5 = vector.load %arg2[%c0_3, %c0_4, %c0_5] : memref<1x64x512xbf16, #tpu.memory_space<vmem>>, vector<1x64x512xbf16>
    %6 = vector.shape_cast %5 : vector<1x64x512xbf16> to vector<64x512xbf16>
    %cst = arith.constant dense<0.000000e+00> : vector<8x512xf32>
    %7 = tpu.matmul %4, %6, %cst {dimension_numbers = #tpu.dot_dimension_numbers<[1], [0], [0], [1], [0, 0, 1, 1], [], []>} : vector<8x64xbf16>, vector<64x512xbf16>, vector<8x512xf32> -> vector<8x512xf32>
    %8 = arith.index_cast %arg1 : i32 to index
    %c0_6 = arith.constant 0 : index
    %c0_7 = arith.constant 0 : index
    %9 = vector.load %arg6[%8, %c0_6, %c0_7] : memref<4x8x512xf32, #tpu.memory_space<vmem>>, vector<1x8x512xf32>
    %10 = vector.shape_cast %9 : vector<1x8x512xf32> to vector<8x512xf32>
    %11 = vector.shape_cast %7 : vector<8x512xf32> to vector<1x8x512xf32>
    tpu.vector_store %arg6[%8, %c0_6, %c0_7], %11 {strides = array<i32>} : memref<4x8x512xf32, #tpu.memory_space<vmem>>, vector<1x8x512xf32>,
    %c0_8 = arith.constant 0 : index
    %c0_9 = arith.constant 0 : index
    %12 = vector.load %arg7[%c0_8, %c0_9] : memref<8x1xf32, #tpu.memory_space<vmem>>, vector<8x1xf32>
    %cst_10 = arith.constant dense<0.000000e+00> : vector<8xf32>
    %13 = vector.multi_reduction <add>, %7, %cst_10 [1] : vector<8x512xf32> to vector<8xf32>
    %14 = vector.shape_cast %13 : vector<8xf32> to vector<8x1xf32>
    %15 = arith.addf %12, %14 : vector<8x1xf32>
    %c0_11 = arith.constant 0 : index
    %c0_12 = arith.constant 0 : index
    %16 = vector.load %arg7[%c0_11, %c0_12] : memref<8x1xf32, #tpu.memory_space<vmem>>, vector<8x1xf32>
    tpu.vector_store %arg7[%c0_11, %c0_12], %15 {strides = array<i32>} : memref<8x1xf32, #tpu.memory_space<vmem>>, vector<8x1xf32>,
    %c0_13 = arith.constant 0 : index
    %c0_14 = arith.constant 0 : index
    %17 = vector.load %arg8[%c0_13, %c0_14] : memref<8x1xf32, #tpu.memory_space<vmem>>, vector<8x1xf32>
    %18 = arith.mulf %7, %7 : vector<8x512xf32>
    %cst_15 = arith.constant dense<0.000000e+00> : vector<8xf32>
    %19 = vector.multi_reduction <add>, %18, %cst_15 [1] : vector<8x512xf32> to vector<8xf32>
    %20 = vector.shape_cast %19 : vector<8xf32> to vector<8x1xf32>
    %21 = arith.addf %17, %20 : vector<8x1xf32>
    %c0_16 = arith.constant 0 : index
    %c0_17 = arith.constant 0 : index
    %22 = vector.load %arg8[%c0_16, %c0_17] : memref<8x1xf32, #tpu.memory_space<vmem>>, vector<8x1xf32>
    tpu.vector_store %arg8[%c0_16, %c0_17], %21 {strides = array<i32>} : memref<8x1xf32, #tpu.memory_space<vmem>>, vector<8x1xf32>,
    %c3_i32 = arith.constant 3 : i32
    %23 = arith.cmpi eq, %arg1, %c3_i32 : i32
    %24 = arith.extui %23 : i1 to i32
    %c0_i32_18 = arith.constant 0 : i32
    %25 = arith.cmpi ne, %24, %c0_i32_18 : i32
    scf.if %25 {
      %c0_19 = arith.constant 0 : index
      %c0_20 = arith.constant 0 : index
      %26 = vector.load %arg7[%c0_19, %c0_20] : memref<8x1xf32, #tpu.memory_space<vmem>>, vector<8x1xf32>
      %cst_21 = arith.constant 4.8828125E-4 : f32
      %27 = vector.broadcast %cst_21 : f32 to vector<8x1xf32>
      %28 = arith.mulf %26, %27 : vector<8x1xf32>
      %c0_22 = arith.constant 0 : index
      %c0_23 = arith.constant 0 : index
      %29 = vector.load %arg8[%c0_22, %c0_23] : memref<8x1xf32, #tpu.memory_space<vmem>>, vector<8x1xf32>
      %cst_24 = arith.constant 4.8828125E-4 : f32
      %30 = vector.broadcast %cst_24 : f32 to vector<8x1xf32>
      %31 = arith.mulf %29, %30 : vector<8x1xf32>
      %32 = arith.mulf %28, %28 : vector<8x1xf32>
      %33 = arith.subf %31, %32 : vector<8x1xf32>
      %cst_25 = arith.constant 0.000000e+00 : f32
      %34 = vector.broadcast %cst_25 : f32 to vector<8x1xf32>
      %35 = arith.maximumf %33, %34 : vector<8x1xf32>
      %c0_26 = arith.constant 0 : index
      %c0_27 = arith.constant 0 : index
      %36 = vector.load %arg4[%c0_26, %c0_27] : memref<8x1xf32, #tpu.memory_space<vmem>>, vector<8x1xf32>
      %cst_28 = arith.constant 9.99999974E-6 : f32
      %37 = vector.broadcast %cst_28 : f32 to vector<8x1xf32>
      %38 = arith.addf %35, %37 : vector<8x1xf32>
      %39 = math.rsqrt %38 : vector<8x1xf32>
      %40 = arith.mulf %36, %39 : vector<8x1xf32>
      %c0_29 = arith.constant 0 : index
      %c0_30 = arith.constant 0 : index
      %41 = vector.load %arg5[%c0_29, %c0_30] : memref<8x1xf32, #tpu.memory_space<vmem>>, vector<8x1xf32>
      %42 = arith.mulf %28, %40 : vector<8x1xf32>
      %43 = arith.subf %41, %42 : vector<8x1xf32>
      %c0_31 = arith.constant 0 : index
      %c0_32 = arith.constant 0 : index
      %c0_33 = arith.constant 0 : index
      %44 = vector.load %arg6[%c0_31, %c0_32, %c0_33] : memref<4x8x512xf32, #tpu.memory_space<vmem>>, vector<4x8x512xf32>
      %45 = vector.shape_cast %40 : vector<8x1xf32> to vector<1x8x1xf32>
      %46 = vector.broadcast %45 : vector<1x8x1xf32> to vector<4x8x512xf32>
      %47 = arith.mulf %44, %46 : vector<4x8x512xf32>
      %48 = vector.shape_cast %43 : vector<8x1xf32> to vector<1x8x1xf32>
      %49 = vector.broadcast %48 : vector<1x8x1xf32> to vector<4x8x512xf32>
      %50 = arith.addf %47, %49 : vector<4x8x512xf32>
      %cst_34 = arith.constant 0.000000e+00 : f32
      %51 = vector.broadcast %cst_34 : f32 to vector<4x8x512xf32>
      %52 = arith.maximumf %50, %51 : vector<4x8x512xf32>
      %c0_35 = arith.constant 0 : index
      %c0_36 = arith.constant 0 : index
      %c0_37 = arith.constant 0 : index
      %53 = vector.load %arg6[%c0_35, %c0_36, %c0_37] : memref<4x8x512xf32, #tpu.memory_space<vmem>>, vector<4x8x512xf32>
      tpu.vector_store %arg6[%c0_35, %c0_36, %c0_37], %52 {strides = array<i32>} : memref<4x8x512xf32, #tpu.memory_space<vmem>>, vector<4x8x512xf32>,
    } else {
    }
    return
  }
  func.func @transform_0(%arg0: i32, %arg1: i32) -> (i32, i32, i32) {
    %c0_i32 = arith.constant 0 : i32
    %c0_i32_0 = arith.constant 0 : i32
    %c0_i32_1 = arith.constant 0 : i32
    return %arg1, %c0_i32, %c0_i32_0 : i32, i32, i32
  }
  func.func @transform_1(%arg0: i32, %arg1: i32) -> (i32, i32, i32) {
    %c0_i32 = arith.constant 0 : i32
    %c0_i32_0 = arith.constant 0 : i32
    return %arg1, %arg0, %c0_i32 : i32, i32, i32
  }
  func.func @transform_2(%arg0: i32, %arg1: i32) -> (i32, i32) {
    %c0_i32 = arith.constant 0 : i32
    %c0_i32_0 = arith.constant 0 : i32
    return %arg0, %c0_i32 : i32, i32
  }
  func.func @transform_3(%arg0: i32, %arg1: i32) -> (i32, i32) {
    %c0_i32 = arith.constant 0 : i32
    %c0_i32_0 = arith.constant 0 : i32
    return %arg0, %c0_i32 : i32, i32
  }
  func.func @transform_4(%arg0: i32, %arg1: i32) -> (i32, i32, i32) {
    %c0_i32 = arith.constant 0 : i32
    %c0_i32_0 = arith.constant 0 : i32
    %c0_i32_1 = arith.constant 0 : i32
    return %c0_i32, %arg0, %c0_i32_0 : i32, i32, i32
  }
}

module attributes {stable_mosaic.version = 11 : i64} {
  func.func @_convt_bias_tanh_kernel(%arg0: i32, %arg1: i32, %arg2: memref<1x32x2048xbf16, #tpu.memory_space<vmem>>, %arg3: memref<1x8x32xbf16, #tpu.memory_space<vmem>>, %arg4: memref<8x1xf32, #tpu.memory_space<vmem>>, %arg5: memref<1x8x2048xf32, #tpu.memory_space<vmem>>) attributes {dimension_semantics = [#tpu.dimension_semantics<parallel>, #tpu.dimension_semantics<parallel>], iteration_bounds = array<i64: 1, 4>, scalar_prefetch = 0 : i64, scratch_operands = 0 : i64, tpu.core_type = #tpu.core_type<tc>, window_params = [{transform_indices = @transform_0, window_bounds = array<i64: 1, 32, 2048>}, {transform_indices = @transform_1, window_bounds = array<i64: 1, 8, 32>}, {transform_indices = @transform_2, window_bounds = array<i64: 8, 1>}, {transform_indices = @transform_3, window_bounds = array<i64: 1, 8, 2048>}]} {
    %c0 = arith.constant 0 : index
    %c0_0 = arith.constant 0 : index
    %c0_1 = arith.constant 0 : index
    %0 = vector.load %arg3[%c0, %c0_0, %c0_1] : memref<1x8x32xbf16, #tpu.memory_space<vmem>>, vector<1x8x32xbf16>
    %1 = vector.shape_cast %0 : vector<1x8x32xbf16> to vector<8x32xbf16>
    %c0_2 = arith.constant 0 : index
    %c0_3 = arith.constant 0 : index
    %c0_4 = arith.constant 0 : index
    %2 = vector.load %arg2[%c0_2, %c0_3, %c0_4] : memref<1x32x2048xbf16, #tpu.memory_space<vmem>>, vector<1x32x2048xbf16>
    %3 = vector.shape_cast %2 : vector<1x32x2048xbf16> to vector<32x2048xbf16>
    %cst = arith.constant dense<0.000000e+00> : vector<8x2048xf32>
    %4 = tpu.matmul %1, %3, %cst {dimension_numbers = #tpu.dot_dimension_numbers<[1], [0], [0], [1], [0, 0, 1, 1], [], []>} : vector<8x32xbf16>, vector<32x2048xbf16>, vector<8x2048xf32> -> vector<8x2048xf32>
    %c0_5 = arith.constant 0 : index
    %c0_6 = arith.constant 0 : index
    %5 = vector.load %arg4[%c0_5, %c0_6] : memref<8x1xf32, #tpu.memory_space<vmem>>, vector<8x1xf32>
    %6 = vector.broadcast %5 : vector<8x1xf32> to vector<8x2048xf32>
    %7 = arith.addf %4, %6 : vector<8x2048xf32>
    %8 = math.tanh %7 : vector<8x2048xf32>
    %c0_7 = arith.constant 0 : index
    %c0_8 = arith.constant 0 : index
    %c0_9 = arith.constant 0 : index
    %9 = vector.load %arg5[%c0_7, %c0_8, %c0_9] : memref<1x8x2048xf32, #tpu.memory_space<vmem>>, vector<1x8x2048xf32>
    %10 = vector.shape_cast %9 : vector<1x8x2048xf32> to vector<8x2048xf32>
    %11 = vector.shape_cast %8 : vector<8x2048xf32> to vector<1x8x2048xf32>
    tpu.vector_store %arg5[%c0_7, %c0_8, %c0_9], %11 {strides = array<i32>} : memref<1x8x2048xf32, #tpu.memory_space<vmem>>, vector<1x8x2048xf32>,
    return
  }
  func.func @transform_0(%arg0: i32, %arg1: i32) -> (i32, i32, i32) {
    %c0_i32 = arith.constant 0 : i32
    %c0_i32_0 = arith.constant 0 : i32
    %c0_i32_1 = arith.constant 0 : i32
    return %arg1, %c0_i32, %c0_i32_0 : i32, i32, i32
  }
  func.func @transform_1(%arg0: i32, %arg1: i32) -> (i32, i32, i32) {
    %c0_i32 = arith.constant 0 : i32
    %c0_i32_0 = arith.constant 0 : i32
    return %arg1, %arg0, %c0_i32 : i32, i32, i32
  }
  func.func @transform_2(%arg0: i32, %arg1: i32) -> (i32, i32) {
    %c0_i32 = arith.constant 0 : i32
    %c0_i32_0 = arith.constant 0 : i32
    return %arg0, %c0_i32 : i32, i32
  }
  func.func @transform_3(%arg0: i32, %arg1: i32) -> (i32, i32, i32) {
    %c0_i32 = arith.constant 0 : i32
    %c0_i32_0 = arith.constant 0 : i32
    return %arg1, %arg0, %c0_i32 : i32, i32, i32
  }
}

</mosaic_0001>

<llo_original>
// kernel: generator_forward.5
$region0: #{generator_forward.5}
  #allocation0 [shape = 'u32[]', space=smem, size = 0x4, offset = 0x4, fixed_abs, tag = 'smem constant byte address 0x4 - core index']
  #allocation1 [shape = 'u32[144,128]{1,0:T(1,128)}', space=vmem, size = 0x12000, scoped, tag = 'internal scratch']
  #allocation2 [shape = 'f32[64,1]{1,0:T(8,128)}', space=vmem, size = 0x8000, scoped, tag = 'scratch operand']
  #allocation3 [shape = 'f32[64,1]{1,0:T(8,128)}', space=vmem, size = 0x8000, scoped, tag = 'scratch operand']
  %s0 = inlined_call_operand.vmem [shape: bf16[1,256,128], index: 0, kind: input, shape index: {}]
  %s1 = inlined_call_operand.vmem [shape: bf16[1,64,256], index: 1, kind: input, shape index: {}]
  %s2 = inlined_call_operand.vmem [shape: f32[64,1], index: 2, kind: input, shape index: {}]
  %s3 = inlined_call_operand.vmem [shape: f32[64,1], index: 3, kind: input, shape index: {}]
  %s4 = inlined_call_operand.vmem [shape: f32[1,64,128], index: 4, kind: output, shape index: {}]
  %s5 = sld [smem:[#allocation0]]
  $region34: #{generator_forward.5} parent=0
    _
  %s7 = ssub.s32 1, %s5
  %s8 = scalar_select 0, %s7, %s5
  // Predicated region
  $region2: #{generator_forward.5} parent=0 // pred_check
    _
  $region3: #{generator_forward.5} parent=0 // pred_check_branch
    %10 = sbr.rel (0) target = $region5
  $region4: #{generator_forward.5} parent=0 // pred_region
    _
  $region5: #{generator_forward.5} parent=0 // pred_fallthru
    _
  // Predicated region
  $region6: #{generator_forward.5} parent=0 // pred_check
    _
  $region7: #{generator_forward.5} parent=0 // pred_check_branch
    %12 = sbr.rel (0) target = $region9
  $region8: #{generator_forward.5} parent=0 // pred_region
    _
  $region9: #{generator_forward.5} parent=0 // pred_fallthru
    _
  // Predicated region
  $region10: #{generator_forward.5} parent=0 // pred_check
    _
  $region11: #{generator_forward.5} parent=0 // pred_check_branch
    %14 = sbr.rel (0) target = $region13
  $region12: #{generator_forward.5} parent=0 // pred_region
    _
  $region13: #{generator_forward.5} parent=0 // pred_fallthru
    _
  // Predicated region
  $region14: #{generator_forward.5} parent=0 // pred_check
    _
  $region15: #{generator_forward.5} parent=0 // pred_check_branch
    %16 = sbr.rel (0) target = $region17
  $region16: #{generator_forward.5} parent=0 // pred_region
    _
  $region17: #{generator_forward.5} parent=0 // pred_fallthru
    _
  %p18 = scmp.eq.s32.totalorder 0, 0
  // Predicated region
  $region18: #{generator_forward.5} parent=0 // pred_check
    %p19 = pneg %p18
  $region19: #{generator_forward.5} parent=0 // pred_check_branch
    %21 = sbr.rel (%p19) target = $region21
  $region20: #{generator_forward.5} parent=0 // pred_region
    %vm22 = vcmask 7168
    %23 = vst.msk [vmem:[#allocation2] sm:$0xff] %vm22, 0.0
    %24 = vst.msk [vmem:[#allocation2 + $0x8] sm:$0xff] %vm22, 0.0
    %25 = vst.msk [vmem:[#allocation2 + $0x10] sm:$0xff] %vm22, 0.0
    %26 = vst.msk [vmem:[#allocation2 + $0x18] sm:$0xff] %vm22, 0.0
    %27 = vst.msk [vmem:[#allocation2 + $0x20] sm:$0xff] %vm22, 0.0
    %28 = vst.msk [vmem:[#allocation2 + $0x28] sm:$0xff] %vm22, 0.0
    %29 = vst.msk [vmem:[#allocation2 + $0x30] sm:$0xff] %vm22, 0.0
    %30 = vst.msk [vmem:[#allocation2 + $0x38] sm:$0xff] %vm22, 0.0
    %31 = vst.msk [vmem:[#allocation3] sm:$0xff] %vm22, 0.0
    %32 = vst.msk [vmem:[#allocation3 + $0x8] sm:$0xff] %vm22, 0.0
    %33 = vst.msk [vmem:[#allocation3 + $0x10] sm:$0xff] %vm22, 0.0
    %34 = vst.msk [vmem:[#allocation3 + $0x18] sm:$0xff] %vm22, 0.0
    %35 = vst.msk [vmem:[#allocation3 + $0x20] sm:$0xff] %vm22, 0.0
    %36 = vst.msk [vmem:[#allocation3 + $0x28] sm:$0xff] %vm22, 0.0
    %37 = vst.msk [vmem:[#allocation3 + $0x30] sm:$0xff] %vm22, 0.0
    %38 = vst.msk [vmem:[#allocation3 + $0x38] sm:$0xff] %vm22, 0.0
  $region21: #{generator_forward.5} parent=0 // pred_fallthru
    _
  %v39 = vld [vmem:[%s1] sm:$0xff]
  %v40 = vld [vmem:[%s1 + $0x8] sm:$0xff]
  %v41 = vld [vmem:[%s1 + $0x10] sm:$0xff]
  %v42 = vld [vmem:[%s1 + $0x18] sm:$0xff]
  %v43 = vld [vmem:[%s1 + $0x20] sm:$0xff]
  %v44 = vld [vmem:[%s1 + $0x28] sm:$0xff]
  %v45 = vld [vmem:[%s1 + $0x30] sm:$0xff]
  %v46 = vld [vmem:[%s1 + $0x38] sm:$0xff]
  %v47 = vld [vmem:[%s0] sm:$0xf]
  %v48 = vld [vmem:[%s0 + $0x4] sm:$0xf]
  %v49 = vld [vmem:[%s0 + $0x8] sm:$0xf]
  %v50 = vld [vmem:[%s0 + $0xc] sm:$0xf]
  %v51 = vld [vmem:[%s0 + $0x10] sm:$0xf]
  %v52 = vld [vmem:[%s0 + $0x14] sm:$0xf]
  %v53 = vld [vmem:[%s0 + $0x18] sm:$0xf]
  %v54 = vld [vmem:[%s0 + $0x1c] sm:$0xf]
  %v55 = vld [vmem:[%s0 + $0x20] sm:$0xf]
  %v56 = vld [vmem:[%s0 + $0x24] sm:$0xf]
  %v57 = vld [vmem:[%s0 + $0x28] sm:$0xf]
  %v58 = vld [vmem:[%s0 + $0x2c] sm:$0xf]
  %v59 = vld [vmem:[%s0 + $0x30] sm:$0xf]
  %v60 = vld [vmem:[%s0 + $0x34] sm:$0xf]
  %v61 = vld [vmem:[%s0 + $0x38] sm:$0xf]
  %v62 = vld [vmem:[%s0 + $0x3c] sm:$0xf]
  %v63 = vld [vmem:[%s0 + $0x40] sm:$0xf]
  %v64 = vld [vmem:[%s0 + $0x44] sm:$0xf]
  %v65 = vld [vmem:[%s0 + $0x48] sm:$0xf]
  %v66 = vld [vmem:[%s0 + $0x4c] sm:$0xf]
  %v67 = vld [vmem:[%s0 + $0x50] sm:$0xf]
  %v68 = vld [vmem:[%s0 + $0x54] sm:$0xf]
  %v69 = vld [vmem:[%s0 + $0x58] sm:$0xf]
  %v70 = vld [vmem:[%s0 + $0x5c] sm:$0xf]
  %v71 = vld [vmem:[%s0 + $0x60] sm:$0xf]
  %v72 = vld [vmem:[%s0 + $0x64] sm:$0xf]
  %v73 = vld [vmem:[%s0 + $0x68] sm:$0xf]
  %v74 = vld [vmem:[%s0 + $0x6c] sm:$0xf]
  %v75 = vld [vmem:[%s0 + $0x70] sm:$0xf]
  %v76 = vld [vmem:[%s0 + $0x74] sm:$0xf]
  %v77 = vld [vmem:[%s0 + $0x78] sm:$0xf]
  %v78 = vld [vmem:[%s0 + $0x7c] sm:$0xf]
  %v87 = vunpack.c.l.b16 %v39
  %v88 = vunpack.c.h.b16 %v39
  %v89 = vunpack.c.l.b16 %v40
  %v90 = vunpack.c.h.b16 %v40
  %v91 = vunpack.c.l.b16 %v41
  %v92 = vunpack.c.h.b16 %v41
  %v93 = vunpack.c.l.b16 %v42
  %v94 = vunpack.c.h.b16 %v42
  %v95 = vunpack.c.l.b16 %v43
  %v96 = vunpack.c.h.b16 %v43
  %v97 = vunpack.c.l.b16 %v44
  %v98 = vunpack.c.h.b16 %v44
  %v99 = vunpack.c.l.b16 %v45
  %v100 = vunpack.c.h.b16 %v45
  %v101 = vunpack.c.l.b16 %v46
  %v102 = vunpack.c.h.b16 %v46
  %v103 = vpack.c.b16 %v89, %v87
  %v104 = vpack.c.b16 %v90, %v88
  %v105 = vpack.c.b16 %v93, %v91
  %v106 = vpack.c.b16 %v94, %v92
  %v107 = vpack.c.b16 %v97, %v95
  %v108 = vpack.c.b16 %v98, %v96
  %v109 = vpack.c.b16 %v101, %v99
  %v110 = vpack.c.b16 %v102, %v100
  %v151 = vunpack.c.l.b16 %v47
  %v152 = vunpack.c.l.b16 %v48
  %v153 = vunpack.c.l.b16 %v49
  %v154 = vunpack.c.l.b16 %v50
  %v155 = vunpack.c.l.b16 %v51
  %v156 = vunpack.c.l.b16 %v52
  %v157 = vunpack.c.l.b16 %v53
  %v158 = vunpack.c.l.b16 %v54
  %v159 = vunpack.c.l.b16 %v55
  %v160 = vunpack.c.l.b16 %v56
  %v161 = vunpack.c.l.b16 %v57
  %v162 = vunpack.c.l.b16 %v58
  %v163 = vunpack.c.l.b16 %v59
  %v164 = vunpack.c.l.b16 %v60
  %v165 = vunpack.c.l.b16 %v61
  %v166 = vunpack.c.l.b16 %v62
  %v167 = vunpack.c.l.b16 %v63
  %v168 = vunpack.c.l.b16 %v64
  %v169 = vunpack.c.l.b16 %v65
  %v170 = vunpack.c.l.b16 %v66
  %v171 = vunpack.c.l.b16 %v67
  %v172 = vunpack.c.l.b16 %v68
  %v173 = vunpack.c.l.b16 %v69
  %v174 = vunpack.c.l.b16 %v70
  %v175 = vunpack.c.l.b16 %v71
  %v176 = vunpack.c.l.b16 %v72
  %v177 = vunpack.c.l.b16 %v73
  %v178 = vunpack.c.l.b16 %v74
  %v179 = vunpack.c.l.b16 %v75
  %v180 = vunpack.c.l.b16 %v76
  %v181 = vunpack.c.l.b16 %v77
  %v182 = vunpack.c.l.b16 %v78
  %v183 = vpack.c.b16 %v152, %v151
  %v184 = vpack.c.b16 %v154, %v153
  %v185 = vpack.c.b16 %v156, %v155
  %v186 = vpack.c.b16 %v158, %v157
  %v187 = vpack.c.b16 %v160, %v159
  %v188 = vpack.c.b16 %v162, %v161
  %v189 = vpack.c.b16 %v164, %v163
  %v190 = vpack.c.b16 %v166, %v165
  %v191 = vpack.c.b16 %v168, %v167
  %v192 = vpack.c.b16 %v170, %v169
  %v193 = vpack.c.b16 %v172, %v171
  %v194 = vpack.c.b16 %v174, %v173
  %v195 = vpack.c.b16 %v176, %v175
  %v196 = vpack.c.b16 %v178, %v177
  %v197 = vpack.c.b16 %v180, %v179
  %v198 = vpack.c.b16 %v182, %v181
  %215 = vmatprep.subr.bf16.mxu0 0
  %216 = vmatpush1.bf16.msra.mxu0 %v190
  %217 = vmatprep.subr.bf16.mxu0 0
  %218 = vmatpush1.bf16.msra.mxu0 %v189
  %219 = vmatprep.subr.bf16.mxu0 0
  %220 = vmatpush1.bf16.msra.mxu0 %v188
  %221 = vmatprep.subr.bf16.mxu0 0
  %222 = vmatpush1.bf16.msra.mxu0 %v187
  %223 = vmatprep.subr.bf16.mxu0 0
  %224 = vmatpush1.bf16.msra.mxu0 %v186
  %225 = vmatprep.subr.bf16.mxu0 0
  %226 = vmatpush1.bf16.msra.mxu0 %v185
  %227 = vmatprep.subr.bf16.mxu0 0
  %228 = vmatpush1.bf16.msra.mxu0 %v184
  %229 = vmatprep.subr.bf16.mxu0 0
  %230 = vmatpush1.bf16.msra.mxu0 %v183
  %231 = vmatprep.subr.bf16.mxu0 0
  %232 = vmatpush2.bf16.msra.mxu0 %v198
  %233 = vmatprep.subr.bf16.mxu0 0
  %234 = vmatpush2.bf16.msra.mxu0 %v197
  %235 = vmatprep.subr.bf16.mxu0 0
  %236 = vmatpush2.bf16.msra.mxu0 %v196
  %237 = vmatprep.subr.bf16.mxu0 0
  %238 = vmatpush2.bf16.msra.mxu0 %v195
  %239 = vmatprep.subr.bf16.mxu0 0
  %240 = vmatpush2.bf16.msra.mxu0 %v194
  %241 = vmatprep.subr.bf16.mxu0 0
  %242 = vmatpush2.bf16.msra.mxu0 %v193
  %243 = vmatprep.subr.bf16.mxu0 0
  %244 = vmatpush2.bf16.msra.mxu0 %v192
  %245 = vmatprep.subr.bf16.mxu0 0
  %246 = vmatpush2.bf16.msra.mxu0 %v191
  %247 = vmatprep.mubr.bf16.mxu0 %v104
  %248 = vmatmul.mubr.bf16.gmra.mxu0 %v103
  %v249 = vpop.f32.mrf.mxu0
  %v250 = vadd.f32 0.0, %v249
  %v251 = vpop.f32.mrf.mxu0
  %v252 = vpop.f32.mrf.mxu0
  %v253 = vadd.f32 0.0, %v252
  %v254 = vpop.f32.mrf.mxu0
  %255 = vmatprep.mubr.bf16.mxu0 %v106
  %256 = vmatmul.mubr.bf16.gmra.mxu0 %v105
  %v257 = vpop.f32.mrf.mxu0
  %v258 = vadd.f32 0.0, %v257
  %v259 = vpop.f32.mrf.mxu0
  %v260 = vpop.f32.mrf.mxu0
  %v261 = vadd.f32 0.0, %v260
  %v262 = vpop.f32.mrf.mxu0
  %263 = vmatprep.mubr.bf16.mxu0 %v108
  %264 = vmatmul.mubr.bf16.gmra.mxu0 %v107
  %v265 = vpop.f32.mrf.mxu0
  %v266 = vadd.f32 0.0, %v265
  %v267 = vpop.f32.mrf.mxu0
  %v268 = vpop.f32.mrf.mxu0
  %v269 = vadd.f32 0.0, %v268
  %v270 = vpop.f32.mrf.mxu0
  %271 = vmatprep.mubr.bf16.mxu0 %v110
  %272 = vmatmul.mubr.bf16.gmra.mxu0 %v109
  %v273 = vpop.f32.mrf.mxu0
  %v274 = vadd.f32 0.0, %v273
  %v275 = vpop.f32.mrf.mxu0
  %v276 = vpop.f32.mrf.mxu0
  %v277 = vadd.f32 0.0, %v276
  %v278 = vpop.f32.mrf.mxu0
  %279 = vdwg.mxu0
  %s280 = smul.u32 0, 64
  %s281 = scalar_lea.vmem %s4, %s280
  %282 = vst [vmem:[%s281] sm:$0xff] %v250
  %283 = vst [vmem:[%s281 + $0x8] sm:$0xff] %v253
  %284 = vst [vmem:[%s281 + $0x10] sm:$0xff] %v258
  %285 = vst [vmem:[%s281 + $0x18] sm:$0xff] %v261
  %286 = vst [vmem:[%s281 + $0x20] sm:$0xff] %v266
  %287 = vst [vmem:[%s281 + $0x28] sm:$0xff] %v269
  %288 = vst [vmem:[%s281 + $0x30] sm:$0xff] %v274
  %289 = vst [vmem:[%s281 + $0x38] sm:$0xff] %v277
  %v290 = vld [vmem:[#allocation2] sm:$0xff]
  %v291 = vld [vmem:[#allocation2 + $0x8] sm:$0xff]
  %v292 = vld [vmem:[#allocation2 + $0x10] sm:$0xff]
  %v293 = vld [vmem:[#allocation2 + $0x18] sm:$0xff]
  %v294 = vld [vmem:[#allocation2 + $0x20] sm:$0xff]
  %v295 = vld [vmem:[#allocation2 + $0x28] sm:$0xff]
  %v296 = vld [vmem:[#allocation2 + $0x30] sm:$0xff]
  %v297 = vld [vmem:[#allocation2 + $0x38] sm:$0xff]
  %298 = vadd.xlane.f32.xlu0 %v250
  %v299 = vpop.xlane.xlu0 %298
  %300 = vadd.xlane.f32.xlu0 %v253
  %v301 = vpop.xlane.xlu0 %300
  %302 = vadd.xlane.f32.xlu0 %v258
  %v303 = vpop.xlane.xlu0 %302
  %304 = vadd.xlane.f32.xlu0 %v261
  %v305 = vpop.xlane.xlu0 %304
  %306 = vadd.xlane.f32.xlu0 %v266
  %v307 = vpop.xlane.xlu0 %306
  %308 = vadd.xlane.f32.xlu0 %v269
  %v309 = vpop.xlane.xlu0 %308
  %310 = vadd.xlane.f32.xlu0 %v274
  %v311 = vpop.xlane.xlu0 %310
  %312 = vadd.xlane.f32.xlu0 %v277
  %v313 = vpop.xlane.xlu0 %312
  %v314 = vadd.f32 %v290, %v299
  %v315 = vadd.f32 %v291, %v301
  %v316 = vadd.f32 %v292, %v303
  %v317 = vadd.f32 %v293, %v305
  %v318 = vadd.f32 %v294, %v307
  %v319 = vadd.f32 %v295, %v309
  %v320 = vadd.f32 %v296, %v311
  %v321 = vadd.f32 %v297, %v313
  %vm322 = vcmask 7168
  %323 = vst.msk [vmem:[#allocation2] sm:$0xff] %vm322, %v314
  %324 = vst.msk [vmem:[#allocation2 + $0x8] sm:$0xff] %vm322, %v315
  %325 = vst.msk [vmem:[#allocation2 + $0x10] sm:$0xff] %vm322, %v316
  %326 = vst.msk [vmem:[#allocation2 + $0x18] sm:$0xff] %vm322, %v317
  %327 = vst.msk [vmem:[#allocation2 + $0x20] sm:$0xff] %vm322, %v318
  %328 = vst.msk [vmem:[#allocation2 + $0x28] sm:$0xff] %vm322, %v319
  %329 = vst.msk [vmem:[#allocation2 + $0x30] sm:$0xff] %vm322, %v320
  %330 = vst.msk [vmem:[#allocation2 + $0x38] sm:$0xff] %vm322, %v321
  %v331 = vld [vmem:[#allocation3] sm:$0xff]
  %v332 = vld [vmem:[#allocation3 + $0x8] sm:$0xff]
  %v333 = vld [vmem:[#allocation3 + $0x10] sm:$0xff]
  %v334 = vld [vmem:[#allocation3 + $0x18] sm:$0xff]
  %v335 = vld [vmem:[#allocation3 + $0x20] sm:$0xff]
  %v336 = vld [vmem:[#allocation3 + $0x28] sm:$0xff]
  %v337 = vld [vmem:[#allocation3 + $0x30] sm:$0xff]
  %v338 = vld [vmem:[#allocation3 + $0x38] sm:$0xff]
  %v339 = vmul.f32 %v250, %v250
  %v340 = vmul.f32 %v253, %v253
  %v341 = vmul.f32 %v258, %v258
  %v342 = vmul.f32 %v261, %v261
  %v343 = vmul.f32 %v266, %v266
  %v344 = vmul.f32 %v269, %v269
  %v345 = vmul.f32 %v274, %v274
  %v346 = vmul.f32 %v277, %v277
  %347 = vadd.xlane.f32.xlu0 %v339
  %v348 = vpop.xlane.xlu0 %347
  %349 = vadd.xlane.f32.xlu0 %v340
  %v350 = vpop.xlane.xlu0 %349
  %351 = vadd.xlane.f32.xlu0 %v341
  %v352 = vpop.xlane.xlu0 %351
  %353 = vadd.xlane.f32.xlu0 %v342
  %v354 = vpop.xlane.xlu0 %353
  %355 = vadd.xlane.f32.xlu0 %v343
  %v356 = vpop.xlane.xlu0 %355
  %357 = vadd.xlane.f32.xlu0 %v344
  %v358 = vpop.xlane.xlu0 %357
  %359 = vadd.xlane.f32.xlu0 %v345
  %v360 = vpop.xlane.xlu0 %359
  %361 = vadd.xlane.f32.xlu0 %v346
  %v362 = vpop.xlane.xlu0 %361
  %v363 = vadd.f32 %v331, %v348
  %v364 = vadd.f32 %v332, %v350
  %v365 = vadd.f32 %v333, %v352
  %v366 = vadd.f32 %v334, %v354
  %v367 = vadd.f32 %v335, %v356
  %v368 = vadd.f32 %v336, %v358
  %v369 = vadd.f32 %v337, %v360
  %v370 = vadd.f32 %v338, %v362
  %371 = vst.msk [vmem:[#allocation3] sm:$0xff] %vm322, %v363
  %372 = vst.msk [vmem:[#allocation3 + $0x8] sm:$0xff] %vm322, %v364
  %373 = vst.msk [vmem:[#allocation3 + $0x10] sm:$0xff] %vm322, %v365
  %374 = vst.msk [vmem:[#allocation3 + $0x18] sm:$0xff] %vm322, %v366
  %375 = vst.msk [vmem:[#allocation3 + $0x20] sm:$0xff] %vm322, %v367
  %376 = vst.msk [vmem:[#allocation3 + $0x28] sm:$0xff] %vm322, %v368
  %377 = vst.msk [vmem:[#allocation3 + $0x30] sm:$0xff] %vm322, %v369
  %378 = vst.msk [vmem:[#allocation3 + $0x38] sm:$0xff] %vm322, %v370
  // Predicated region
  $region22: #{generator_forward.5} parent=0 // pred_check
    %p379 = pneg %p18
  $region23: #{generator_forward.5} parent=0 // pred_check_branch
    %381 = sbr.rel (%p379) target = $region25
  $region24: #{generator_forward.5} parent=0 // pred_region
    %v382 = vld [vmem:[#allocation2] sm:$0xff]
    %v383 = vld [vmem:[#allocation2 + $0x8] sm:$0xff]
    %v384 = vld [vmem:[#allocation2 + $0x10] sm:$0xff]
    %v385 = vld [vmem:[#allocation2 + $0x18] sm:$0xff]
    %v386 = vld [vmem:[#allocation2 + $0x20] sm:$0xff]
    %v387 = vld [vmem:[#allocation2 + $0x28] sm:$0xff]
    %v388 = vld [vmem:[#allocation2 + $0x30] sm:$0xff]
    %v389 = vld [vmem:[#allocation2 + $0x38] sm:$0xff]
    %v390 = vmul.f32 %v382, 0.03125
    %v391 = vmul.f32 %v383, 0.03125
    %v392 = vmul.f32 %v384, 0.03125
    %v393 = vmul.f32 %v385, 0.03125
    %v394 = vmul.f32 %v386, 0.03125
    %v395 = vmul.f32 %v387, 0.03125
    %v396 = vmul.f32 %v388, 0.03125
    %v397 = vmul.f32 %v389, 0.03125
    %v398 = vld [vmem:[#allocation3] sm:$0xff]
    %v399 = vld [vmem:[#allocation3 + $0x8] sm:$0xff]
    %v400 = vld [vmem:[#allocation3 + $0x10] sm:$0xff]
    %v401 = vld [vmem:[#allocation3 + $0x18] sm:$0xff]
    %v402 = vld [vmem:[#allocation3 + $0x20] sm:$0xff]
    %v403 = vld [vmem:[#allocation3 + $0x28] sm:$0xff]
    %v404 = vld [vmem:[#allocation3 + $0x30] sm:$0xff]
    %v405 = vld [vmem:[#allocation3 + $0x38] sm:$0xff]
    %v406 = vmul.f32 %v398, 0.03125
    %v407 = vmul.f32 %v399, 0.03125
    %v408 = vmul.f32 %v400, 0.03125
    %v409 = vmul.f32 %v401, 0.03125
    %v410 = vmul.f32 %v402, 0.03125
    %v411 = vmul.f32 %v403, 0.03125
    %v412 = vmul.f32 %v404, 0.03125
    %v413 = vmul.f32 %v405, 0.03125
    %v414 = vmul.f32 %v390, %v390
    %v415 = vmul.f32 %v391, %v391
    %v416 = vmul.f32 %v392, %v392
    %v417 = vmul.f32 %v393, %v393
    %v418 = vmul.f32 %v394, %v394
    %v419 = vmul.f32 %v395, %v395
    %v420 = vmul.f32 %v396, %v396
    %v421 = vmul.f32 %v397, %v397
    %v422 = vsub.f32 %v406, %v414
    %v423 = vsub.f32 %v407, %v415
    %v424 = vsub.f32 %v408, %v416
    %v425 = vsub.f32 %v409, %v417
    %v426 = vsub.f32 %v410, %v418
    %v427 = vsub.f32 %v411, %v419
    %v428 = vsub.f32 %v412, %v420
    %v429 = vsub.f32 %v413, %v421
    %v430 = vmax.f32 %v422, 0.0
    %v431 = vmax.f32 %v423, 0.0
    %v432 = vmax.f32 %v424, 0.0
    %v433 = vmax.f32 %v425, 0.0
    %v434 = vmax.f32 %v426, 0.0
    %v435 = vmax.f32 %v427, 0.0
    %v436 = vmax.f32 %v428, 0.0
    %v437 = vmax.f32 %v429, 0.0
    %v438 = vld [vmem:[%s2] sm:$0xff]
    %v439 = vld [vmem:[%s2 + $0x8] sm:$0xff]
    %v440 = vld [vmem:[%s2 + $0x10] sm:$0xff]
    %v441 = vld [vmem:[%s2 + $0x18] sm:$0xff]
    %v442 = vld [vmem:[%s2 + $0x20] sm:$0xff]
    %v443 = vld [vmem:[%s2 + $0x28] sm:$0xff]
    %v444 = vld [vmem:[%s2 + $0x30] sm:$0xff]
    %v445 = vld [vmem:[%s2 + $0x38] sm:$0xff]
    %v446 = vadd.f32 %v430, 1e-05
    %v447 = vadd.f32 %v431, 1e-05
    %v448 = vadd.f32 %v432, 1e-05
    %v449 = vadd.f32 %v433, 1e-05
    %v450 = vadd.f32 %v434, 1e-05
    %v451 = vadd.f32 %v435, 1e-05
    %v452 = vadd.f32 %v436, 1e-05
    %v453 = vadd.f32 %v437, 1e-05
    %v454 = vrsqrt.pop %v446
    %v455 = vrsqrt.pop %v447
    %v456 = vrsqrt.pop %v448
    %v457 = vrsqrt.pop %v449
    %v458 = vrsqrt.pop %v450
    %v459 = vrsqrt.pop %v451
    %v460 = vrsqrt.pop %v452
    %v461 = vrsqrt.pop %v453
    %v462 = vmul.f32 %v438, %v454
    %v463 = vmul.f32 %v439, %v455
    %v464 = vmul.f32 %v440, %v456
    %v465 = vmul.f32 %v441, %v457
    %v466 = vmul.f32 %v442, %v458
    %v467 = vmul.f32 %v443, %v459
    %v468 = vmul.f32 %v444, %v460
    %v469 = vmul.f32 %v445, %v461
    %v470 = vld [vmem:[%s3] sm:$0xff]
    %v471 = vld [vmem:[%s3 + $0x8] sm:$0xff]
    %v472 = vld [vmem:[%s3 + $0x10] sm:$0xff]
    %v473 = vld [vmem:[%s3 + $0x18] sm:$0xff]
    %v474 = vld [vmem:[%s3 + $0x20] sm:$0xff]
    %v475 = vld [vmem:[%s3 + $0x28] sm:$0xff]
    %v476 = vld [vmem:[%s3 + $0x30] sm:$0xff]
    %v477 = vld [vmem:[%s3 + $0x38] sm:$0xff]
    %v478 = vmul.f32 %v390, %v462
    %v479 = vmul.f32 %v391, %v463
    %v480 = vmul.f32 %v392, %v464
    %v481 = vmul.f32 %v393, %v465
    %v482 = vmul.f32 %v394, %v466
    %v483 = vmul.f32 %v395, %v467
    %v484 = vmul.f32 %v396, %v468
    %v485 = vmul.f32 %v397, %v469
    %v486 = vsub.f32 %v470, %v478
    %v487 = vsub.f32 %v471, %v479
    %v488 = vsub.f32 %v472, %v480
    %v489 = vsub.f32 %v473, %v481
    %v490 = vsub.f32 %v474, %v482
    %v491 = vsub.f32 %v475, %v483
    %v492 = vsub.f32 %v476, %v484
    %v493 = vsub.f32 %v477, %v485
    %v494 = vld [vmem:[%s4] sm:$0xff]
    %v495 = vld [vmem:[%s4 + $0x8] sm:$0xff]
    %v496 = vld [vmem:[%s4 + $0x10] sm:$0xff]
    %v497 = vld [vmem:[%s4 + $0x18] sm:$0xff]
    %v498 = vld [vmem:[%s4 + $0x20] sm:$0xff]
    %v499 = vld [vmem:[%s4 + $0x28] sm:$0xff]
    %v500 = vld [vmem:[%s4 + $0x30] sm:$0xff]
    %v501 = vld [vmem:[%s4 + $0x38] sm:$0xff]
    %503 = vset.pattern.permute.xlu0 0
    %504 = vperm.xlu0 %503, %v462
    %v505 = vpop.permute.xlu0 %504
    %508 = vset.pattern.permute.xlu0 0
    %509 = vperm.xlu0 %508, %v463
    %v510 = vpop.permute.xlu0 %509
    %513 = vset.pattern.permute.xlu0 0
    %514 = vperm.xlu0 %513, %v464
    %v515 = vpop.permute.xlu0 %514
    %518 = vset.pattern.permute.xlu0 0
    %519 = vperm.xlu0 %518, %v465
    %v520 = vpop.permute.xlu0 %519
    %523 = vset.pattern.permute.xlu0 0
    %524 = vperm.xlu0 %523, %v466
    %v525 = vpop.permute.xlu0 %524
    %528 = vset.pattern.permute.xlu0 0
    %529 = vperm.xlu0 %528, %v467
    %v530 = vpop.permute.xlu0 %529
    %533 = vset.pattern.permute.xlu0 0
    %534 = vperm.xlu0 %533, %v468
    %v535 = vpop.permute.xlu0 %534
    %538 = vset.pattern.permute.xlu0 0
    %539 = vperm.xlu0 %538, %v469
    %v540 = vpop.permute.xlu0 %539
    %v542 = vmul.f32 %v494, %v505
    %v543 = vmul.f32 %v495, %v510
    %v544 = vmul.f32 %v496, %v515
    %v545 = vmul.f32 %v497, %v520
    %v546 = vmul.f32 %v498, %v525
    %v547 = vmul.f32 %v499, %v530
    %v548 = vmul.f32 %v500, %v535
    %v549 = vmul.f32 %v501, %v540
    %551 = vset.pattern.permute.xlu0 0
    %552 = vperm.xlu0 %551, %v486
    %v553 = vpop.permute.xlu0 %552
    %556 = vset.pattern.permute.xlu0 0
    %557 = vperm.xlu0 %556, %v487
    %v558 = vpop.permute.xlu0 %557
    %561 = vset.pattern.permute.xlu0 0
    %562 = vperm.xlu0 %561, %v488
    %v563 = vpop.permute.xlu0 %562
    %566 = vset.pattern.permute.xlu0 0
    %567 = vperm.xlu0 %566, %v489
    %v568 = vpop.permute.xlu0 %567
    %571 = vset.pattern.permute.xlu0 0
    %572 = vperm.xlu0 %571, %v490
    %v573 = vpop.permute.xlu0 %572
    %576 = vset.pattern.permute.xlu0 0
    %577 = vperm.xlu0 %576, %v491
    %v578 = vpop.permute.xlu0 %577
    %581 = vset.pattern.permute.xlu0 0
    %582 = vperm.xlu0 %581, %v492
    %v583 = vpop.permute.xlu0 %582
    %586 = vset.pattern.permute.xlu0 0
    %587 = vperm.xlu0 %586, %v493
    %v588 = vpop.permute.xlu0 %587
    %v590 = vadd.f32 %v542, %v553
    %v591 = vadd.f32 %v543, %v558
    %v592 = vadd.f32 %v544, %v563
    %v593 = vadd.f32 %v545, %v568
    %v594 = vadd.f32 %v546, %v573
    %v595 = vadd.f32 %v547, %v578
    %v596 = vadd.f32 %v548, %v583
    %v597 = vadd.f32 %v549, %v588
    %v598 = vmax.f32 %v590, 0.0
    %v599 = vmax.f32 %v591, 0.0
    %v600 = vmax.f32 %v592, 0.0
    %v601 = vmax.f32 %v593, 0.0
    %v602 = vmax.f32 %v594, 0.0
    %v603 = vmax.f32 %v595, 0.0
    %v604 = vmax.f32 %v596, 0.0
    %v605 = vmax.f32 %v597, 0.0
    %606 = vst [vmem:[%s4] sm:$0xff] %v598
    %607 = vst [vmem:[%s4 + $0x8] sm:$0xff] %v599
    %608 = vst [vmem:[%s4 + $0x10] sm:$0xff] %v600
    %609 = vst [vmem:[%s4 + $0x18] sm:$0xff] %v601
    %610 = vst [vmem:[%s4 + $0x20] sm:$0xff] %v602
    %611 = vst [vmem:[%s4 + $0x28] sm:$0xff] %v603
    %612 = vst [vmem:[%s4 + $0x30] sm:$0xff] %v604
    %613 = vst [vmem:[%s4 + $0x38] sm:$0xff] %v605
  $region25: #{generator_forward.5} parent=0 // pred_fallthru
    _
  // Predicated region
  $region26: #{generator_forward.5} parent=0 // pred_check
    _
  $region27: #{generator_forward.5} parent=0 // pred_check_branch
    %615 = sbr.rel (0) target = $region29
  $region28: #{generator_forward.5} parent=0 // pred_region
    _
  $region29: #{generator_forward.5} parent=0 // pred_fallthru
    _
  // Predicated region
  $region30: #{generator_forward.5} parent=0 // pred_check
    _
  $region31: #{generator_forward.5} parent=0 // pred_check_branch
    %617 = sbr.rel (0) target = $region33
  $region32: #{generator_forward.5} parent=0 // pred_region
    _
  $region33: #{generator_forward.5} parent=0 // pred_fallthru
    _

// kernel: generator_forward.6
$region0: #{generator_forward.6}
  #allocation0 [shape = 'u32[]', space=smem, size = 0x4, offset = 0x4, fixed_abs, tag = 'smem constant byte address 0x4 - core index']
  #allocation1 [shape = 'u32[144,128]{1,0:T(1,128)}', space=vmem, size = 0x12000, scoped, tag = 'internal scratch']
  #allocation2 [shape = 'f32[32,1]{1,0:T(8,128)}', space=vmem, size = 0x4000, scoped, tag = 'scratch operand']
  #allocation3 [shape = 'f32[32,1]{1,0:T(8,128)}', space=vmem, size = 0x4000, scoped, tag = 'scratch operand']
  %s0 = inlined_call_operand.vmem [shape: bf16[4,256,128], index: 0, kind: input, shape index: {}]
  %s1 = inlined_call_operand.vmem [shape: bf16[4,32,256], index: 1, kind: input, shape index: {}]
  %s2 = inlined_call_operand.vmem [shape: f32[32,1], index: 2, kind: input, shape index: {}]
  %s3 = inlined_call_operand.vmem [shape: f32[32,1], index: 3, kind: input, shape index: {}]
  %s4 = inlined_call_operand.vmem [shape: f32[4,32,128], index: 4, kind: output, shape index: {}]
  %s5 = sld [smem:[#allocation0]]
  $region57: #{generator_forward.6} parent=0
    _
  %s7 = ssub.s32 1, %s5
  %s8 = scalar_select 0, %s7, %s5
  loop: start=0, step=1, limit=6
  $region2: #{generator_forward.6} parent=0 // loop_pre_header
    _
  $region3: #{generator_forward.6} parent=0 // loop_header
    %s10 = sphi 0, %s14
    %p11 = scmp.ge.s32.totalorder %s10, 6
    %s17 = sphi 0, %s29
    %s18 = sphi 0, %s25
    %s19 = sphi 0, %s17
    %s20 = sphi 0, %s18
    %s21 = sphi 0, %s19
    %s22 = sphi 0, %s20
    %s32 = sphi 0, %s34
    %s35 = sphi 0, %s32
    %s36 = sphi 0, %s35
    %s52 = sphi 0, %s36
    %s60 = sphi 0, %s62
    %s63 = sphi 0, %s60
    %s64 = sphi 0, %s63
    %s80 = sphi 0, %s64
    %s86 = sphi 0, %s88
    %s89 = sphi 0, %s86
    %s90 = sphi 0, %s89
    %s106 = sphi 0, %s90
    %s112 = sphi 0, %s114
    %s115 = sphi 0, %s112
    %s116 = sphi 0, %s115
    %s132 = sphi 0, %s116
    %s138 = sphi 0, %s140
    %s141 = sphi 0, %s138
    %s142 = sphi 0, %s141
    %s158 = sphi 0, %s142
  $region4: #{generator_forward.6} parent=0 // loop_header_branch
    %13 = sbr.rel (%p11) target = $region8
  $region5: #{generator_forward.6} parent=0 // loop_body
    %s15 = ssub.s32 %s10, 1
    %s16 = ssub.s32 %s10, 2
    %s23 = sadd.s32 1, %s18
    %p24 = scmp.ge.s32.totalorder %s23, 4
    %s25 = scalar_select %p24, 0, %s23
    %s26 = sadd.s32 1, %s17
    %s27 = scalar_select %p24, %s26, %s17
    %p28 = scmp.ge.s32.totalorder %s27, 1
    %s29 = scalar_select %p28, 0, %s27
    %s30 = ssub.s32 %s18, %s25
    %p31 = scmp.eq.s32.totalorder %s30, 0
    %s33 = sadd.s32 %s32, 1
    %s34 = scalar_select %p31, %s32, %s33
    %p37 = pneg %p31
    %p38 = scmp.eq.s32.totalorder %s10, 3
    %p39 = por %p37, %p38
    %p40 = scmp.ne.s32.totalorder %s32, %s35
    %p41 = scmp.eq.s32.totalorder %s10, 0
    %p42 = por %p40, %p41
    %p43 = scmp.ne.s32.totalorder %s32, %s35
    %p44 = scmp.eq.s32.totalorder %s15, 3
    %p45 = por %p43, %p44
    %p46 = scmp.ne.s32.totalorder %s35, %s36
    %p47 = scmp.eq.s32.totalorder %s15, 0
    %p48 = por %p46, %p47
    %p49 = scmp.ne.s32.totalorder %s35, %s36
    %p50 = scmp.eq.s32.totalorder %s16, 3
    %p51 = por %p49, %p50
    %p53 = scmp.ne.s32.totalorder %s36, %s52
    %p54 = scmp.eq.s32.totalorder %s16, 0
    %p55 = por %p53, %p54
    %s56 = ssub.s32 %s18, %s25
    %s57 = ssub.s32 %s17, %s29
    %s58 = sor.u32 %s56, %s57
    %p59 = scmp.eq.s32.totalorder %s58, 0
    %s61 = sadd.s32 %s60, 1
    %s62 = scalar_select %p59, %s60, %s61
    %p65 = pneg %p59
    %p66 = scmp.eq.s32.totalorder %s10, 3
    %p67 = por %p65, %p66
    %p68 = scmp.ne.s32.totalorder %s60, %s63
    %p69 = scmp.eq.s32.totalorder %s10, 0
    %p70 = por %p68, %p69
    %p71 = scmp.ne.s32.totalorder %s60, %s63
    %p72 = scmp.eq.s32.totalorder %s15, 3
    %p73 = por %p71, %p72
    %p74 = scmp.ne.s32.totalorder %s63, %s64
    %p75 = scmp.eq.s32.totalorder %s15, 0
    %p76 = por %p74, %p75
    %p77 = scmp.ne.s32.totalorder %s63, %s64
    %p78 = scmp.eq.s32.totalorder %s16, 3
    %p79 = por %p77, %p78
    %p81 = scmp.ne.s32.totalorder %s64, %s80
    %p82 = scmp.eq.s32.totalorder %s16, 0
    %p83 = por %p81, %p82
    %s84 = ssub.s32 %s17, %s29
    %p85 = scmp.eq.s32.totalorder %s84, 0
    %s87 = sadd.s32 %s86, 1
    %s88 = scalar_select %p85, %s86, %s87
    %p91 = pneg %p85
    %p92 = scmp.eq.s32.totalorder %s10, 3
    %p93 = por %p91, %p92
    %p94 = scmp.ne.s32.totalorder %s86, %s89
    %p95 = scmp.eq.s32.totalorder %s10, 0
    %p96 = por %p94, %p95
    %p97 = scmp.ne.s32.totalorder %s86, %s89
    %p98 = scmp.eq.s32.totalorder %s15, 3
    %p99 = por %p97, %p98
    %p100 = scmp.ne.s32.totalorder %s89, %s90
    %p101 = scmp.eq.s32.totalorder %s15, 0
    %p102 = por %p100, %p101
    %p103 = scmp.ne.s32.totalorder %s89, %s90
    %p104 = scmp.eq.s32.totalorder %s16, 3
    %p105 = por %p103, %p104
    %p107 = scmp.ne.s32.totalorder %s90, %s106
    %p108 = scmp.eq.s32.totalorder %s16, 0
    %p109 = por %p107, %p108
    %s110 = ssub.s32 %s17, %s29
    %p111 = scmp.eq.s32.totalorder %s110, 0
    %s113 = sadd.s32 %s112, 1
    %s114 = scalar_select %p111, %s112, %s113
    %p117 = pneg %p111
    %p118 = scmp.eq.s32.totalorder %s10, 3
    %p119 = por %p117, %p118
    %p120 = scmp.ne.s32.totalorder %s112, %s115
    %p121 = scmp.eq.s32.totalorder %s10, 0
    %p122 = por %p120, %p121
    %p123 = scmp.ne.s32.totalorder %s112, %s115
    %p124 = scmp.eq.s32.totalorder %s15, 3
    %p125 = por %p123, %p124
    %p126 = scmp.ne.s32.totalorder %s115, %s116
    %p127 = scmp.eq.s32.totalorder %s15, 0
    %p128 = por %p126, %p127
    %p129 = scmp.ne.s32.totalorder %s115, %s116
    %p130 = scmp.eq.s32.totalorder %s16, 3
    %p131 = por %p129, %p130
    %p133 = scmp.ne.s32.totalorder %s116, %s132
    %p134 = scmp.eq.s32.totalorder %s16, 0
    %p135 = por %p133, %p134
    %s136 = ssub.s32 %s17, %s29
    %p137 = scmp.eq.s32.totalorder %s136, 0
    %s139 = sadd.s32 %s138, 1
    %s140 = scalar_select %p137, %s138, %s139
    %p143 = pneg %p137
    %p144 = scmp.eq.s32.totalorder %s10, 3
    %p145 = por %p143, %p144
    %p146 = scmp.ne.s32.totalorder %s138, %s141
    %p147 = scmp.eq.s32.totalorder %s10, 0
    %p148 = por %p146, %p147
    %p149 = scmp.ne.s32.totalorder %s138, %s141
    %p150 = scmp.eq.s32.totalorder %s15, 3
    %p151 = por %p149, %p150
    %p152 = scmp.ne.s32.totalorder %s141, %s142
    %p153 = scmp.eq.s32.totalorder %s15, 0
    %p154 = por %p152, %p153
    %p155 = scmp.ne.s32.totalorder %s141, %s142
    %p156 = scmp.eq.s32.totalorder %s16, 3
    %p157 = por %p155, %p156
    %p159 = scmp.ne.s32.totalorder %s142, %s158
    %p160 = scmp.eq.s32.totalorder %s16, 0
    %p161 = por %p159, %p160
    %p162 = scmp.le.s32.totalorder 1, %s10
    %p163 = scmp.lt.s32.totalorder %s10, 5
    %p164 = pnand %p162, %p163
    %p165 = pneg %p164
    // Predicated region
    $region9: #{generator_forward.6} parent=5 // pred_check
      _
    $region10: #{generator_forward.6} parent=5 // pred_check_branch
      %167 = sbr.rel (%p164) target = $region12
    $region11: #{generator_forward.6} parent=5 // pred_region
      %s168 = ssub.s32 %s10, 1
      // Predicated region
      $region13: #{generator_forward.6} parent=11 // pred_check
        %p169 = pneg %p102
      $region14: #{generator_forward.6} parent=11 // pred_check_branch
        %171 = sbr.rel (%p169) target = $region16
      $region15: #{generator_forward.6} parent=11 // pred_region
        %s172 = smul.u32 4, %s19
        %p173 = scmp.lt.s32.totalorder %s172, 3
        %s174 = scalar_select %p173, %s172, 3
        %s175 = smul.addr %s174, 8
        %s176 = scalar_lea.vmem %s2, %s175
        %s177 = smul.u32 4, %s19
      $region16: #{generator_forward.6} parent=11 // pred_fallthru
        _
      // Predicated region
      $region17: #{generator_forward.6} parent=11 // pred_check
        %p178 = pneg %p128
      $region18: #{generator_forward.6} parent=11 // pred_check_branch
        %180 = sbr.rel (%p178) target = $region20
      $region19: #{generator_forward.6} parent=11 // pred_region
        %s181 = smul.u32 4, %s19
        %p182 = scmp.lt.s32.totalorder %s181, 3
        %s183 = scalar_select %p182, %s181, 3
        %s184 = smul.addr %s183, 8
        %s185 = scalar_lea.vmem %s3, %s184
        %s186 = smul.u32 4, %s19
      $region20: #{generator_forward.6} parent=11 // pred_fallthru
        _
    $region12: #{generator_forward.6} parent=5 // pred_fallthru
      _
    %p187 = scmp.lt.s32.totalorder %s10, 4
    // Predicated region
    $region21: #{generator_forward.6} parent=5 // pred_check
      %p188 = pneg %p187
    $region22: #{generator_forward.6} parent=5 // pred_check_branch
      %190 = sbr.rel (%p188) target = $region24
    $region23: #{generator_forward.6} parent=5 // pred_region
      // Predicated region
      $region25: #{generator_forward.6} parent=23 // pred_check
        %p191 = pneg %p42
      $region26: #{generator_forward.6} parent=23 // pred_check_branch
        %193 = sbr.rel (%p191) target = $region28
      $region27: #{generator_forward.6} parent=23 // pred_region
        %p194 = scmp.lt.s32.totalorder %s18, 3
        %s195 = scalar_select %p194, %s18, 3
        %s196 = smul.addr %s195, 32
        %s197 = smul.addr %s196, 4
        %s198 = scalar_lea.vmem %s0, %s197
      $region28: #{generator_forward.6} parent=23 // pred_fallthru
        _
      // Predicated region
      $region29: #{generator_forward.6} parent=23 // pred_check
        %p199 = pneg %p70
      $region30: #{generator_forward.6} parent=23 // pred_check_branch
        %201 = sbr.rel (%p199) target = $region32
      $region31: #{generator_forward.6} parent=23 // pred_region
        %s202 = smul.u32 4, %s17
        %p203 = scmp.lt.s32.totalorder %s18, 3
        %s204 = scalar_select %p203, %s18, 3
        %p205 = scmp.lt.s32.totalorder %s202, 3
        %s206 = scalar_select %p205, %s202, 3
        %s207 = smul.addr %s206, 2
        %s208 = smul.addr %s204, 8
        %s209 = sadd.s32 %s207, %s208
        %s210 = smul.addr %s209, 4
        %s211 = scalar_lea.vmem %s1, %s210
        %s212 = smul.u32 4, %s17
      $region32: #{generator_forward.6} parent=23 // pred_fallthru
        _
    $region24: #{generator_forward.6} parent=5 // pred_fallthru
      _
    %p213 = scmp.le.s32.totalorder 1, %s10
    %p214 = scmp.lt.s32.totalorder %s10, 5
    %p215 = pnand %p213, %p214
    %p216 = pneg %p215
    // Predicated region
    $region33: #{generator_forward.6} parent=5 // pred_check
      _
    $region34: #{generator_forward.6} parent=5 // pred_check_branch
      %218 = sbr.rel (%p215) target = $region36
    $region35: #{generator_forward.6} parent=5 // pred_region
      %s219 = ssub.s32 %s10, 1
      %p220 = scmp.lt.s32.totalorder %s20, 3
      %s221 = scalar_select %p220, %s20, 3
      %s222 = smul.addr %s221, 32
      %s223 = smul.addr %s222, 4
      %s224 = scalar_lea.vmem %s0, %s223
      %p225 = pneg %p48
      %p226 = pneg %p45
      %s227 = smul.u32 4, %s19
      %p228 = scmp.lt.s32.totalorder %s20, 3
      %s229 = scalar_select %p228, %s20, 3
      %p230 = scmp.lt.s32.totalorder %s227, 3
      %s231 = scalar_select %p230, %s227, 3
      %s232 = smul.addr %s231, 2
      %s233 = smul.addr %s229, 8
      %s234 = sadd.s32 %s232, %s233
      %s235 = smul.addr %s234, 4
      %s236 = scalar_lea.vmem %s1, %s235
      %p237 = pneg %p76
      %p238 = pneg %p73
      %s239 = smul.u32 4, %s19
      %p240 = scmp.lt.s32.totalorder %s239, 3
      %s241 = scalar_select %p240, %s239, 3
      %s242 = smul.addr %s241, 8
      %s243 = scalar_lea.vmem %s2, %s242
      %p244 = pneg %p102
      %p245 = pneg %p99
      %s246 = smul.u32 4, %s19
      %p247 = scmp.lt.s32.totalorder %s246, 3
      %s248 = scalar_select %p247, %s246, 3
      %s249 = smul.addr %s248, 8
      %s250 = scalar_lea.vmem %s3, %s249
      %p251 = pneg %p128
      %p252 = pneg %p125
      %p253 = pneg %p154
      %p254 = pneg %p151
      %s255 = smul.u32 4, %s19
      %p256 = scmp.lt.s32.totalorder %s255, 3
      %s257 = scalar_select %p256, %s255, 3
      %s258 = smul.addr %s257, 8
      %s259 = scalar_lea.vmem %s4, %s258
      %p260 = scmp.lt.s32.totalorder %s20, 3
      %s261 = scalar_select %p260, %s20, 3
      %s262 = smul.addr %s261, 32
      %s263 = smul.addr %s262, 4
      %s264 = scalar_lea.vmem %s0, %s263
      %s265 = smul.u32 4, %s19
      %p266 = scmp.lt.s32.totalorder %s20, 3
      %s267 = scalar_select %p266, %s20, 3
      %p268 = scmp.lt.s32.totalorder %s265, 3
      %s269 = scalar_select %p268, %s265, 3
      %s270 = smul.addr %s269, 2
      %s271 = smul.addr %s267, 8
      %s272 = sadd.s32 %s270, %s271
      %s273 = smul.addr %s272, 4
      %s274 = scalar_lea.vmem %s1, %s273
      %s275 = smul.u32 4, %s19
      %s276 = smul.u32 4, %s19
      %p277 = scmp.lt.s32.totalorder %s276, 3
      %s278 = scalar_select %p277, %s276, 3
      %s279 = smul.addr %s278, 8
      %s280 = scalar_lea.vmem %s2, %s279
      %s281 = smul.u32 4, %s19
      %s282 = smul.u32 4, %s19
      %p283 = scmp.lt.s32.totalorder %s282, 3
      %s284 = scalar_select %p283, %s282, 3
      %s285 = smul.addr %s284, 8
      %s286 = scalar_lea.vmem %s3, %s285
      %s287 = smul.u32 4, %s19
      %s288 = smul.u32 4, %s19
      %p289 = scmp.lt.s32.totalorder %s288, 3
      %s290 = scalar_select %p289, %s288, 3
      %s291 = smul.addr %s290, 8
      %s292 = scalar_lea.vmem %s4, %s291
      %s293 = smul.u32 4, %s19
      %p295 = scmp.eq.s32.totalorder %s20, 0
      // Predicated region
      $region37: #{generator_forward.6} parent=35 // pred_check
        %p296 = pneg %p295
      $region38: #{generator_forward.6} parent=35 // pred_check_branch
        %298 = sbr.rel (%p296) target = $region40
      $region39: #{generator_forward.6} parent=35 // pred_region
        %vm299 = vcmask 7168
        %300 = vst.msk [vmem:[#allocation2] sm:$0xff] %vm299, 0.0
        %301 = vst.msk [vmem:[#allocation2 + $0x8] sm:$0xff] %vm299, 0.0
        %302 = vst.msk [vmem:[#allocation2 + $0x10] sm:$0xff] %vm299, 0.0
        %303 = vst.msk [vmem:[#allocation2 + $0x18] sm:$0xff] %vm299, 0.0
        %304 = vst.msk [vmem:[#allocation3] sm:$0xff] %vm299, 0.0
        %305 = vst.msk [vmem:[#allocation3 + $0x8] sm:$0xff] %vm299, 0.0
        %306 = vst.msk [vmem:[#allocation3 + $0x10] sm:$0xff] %vm299, 0.0
        %307 = vst.msk [vmem:[#allocation3 + $0x18] sm:$0xff] %vm299, 0.0
      $region40: #{generator_forward.6} parent=35 // pred_fallthru
        _
      %v308 = vld [vmem:[%s274] sm:$0xff]
      %v309 = vld [vmem:[%s274 + $0x8] sm:$0xff]
      %v310 = vld [vmem:[%s274 + $0x10] sm:$0xff]
      %v311 = vld [vmem:[%s274 + $0x18] sm:$0xff]
      %v312 = vld [vmem:[%s264] sm:$0xf]
      %v313 = vld [vmem:[%s264 + $0x4] sm:$0xf]
      %v314 = vld [vmem:[%s264 + $0x8] sm:$0xf]
      %v315 = vld [vmem:[%s264 + $0xc] sm:$0xf]
      %v316 = vld [vmem:[%s264 + $0x10] sm:$0xf]
      %v317 = vld [vmem:[%s264 + $0x14] sm:$0xf]
      %v318 = vld [vmem:[%s264 + $0x18] sm:$0xf]
      %v319 = vld [vmem:[%s264 + $0x1c] sm:$0xf]
      %v320 = vld [vmem:[%s264 + $0x20] sm:$0xf]
      %v321 = vld [vmem:[%s264 + $0x24] sm:$0xf]
      %v322 = vld [vmem:[%s264 + $0x28] sm:$0xf]
      %v323 = vld [vmem:[%s264 + $0x2c] sm:$0xf]
      %v324 = vld [vmem:[%s264 + $0x30] sm:$0xf]
      %v325 = vld [vmem:[%s264 + $0x34] sm:$0xf]
      %v326 = vld [vmem:[%s264 + $0x38] sm:$0xf]
      %v327 = vld [vmem:[%s264 + $0x3c] sm:$0xf]
      %v328 = vld [vmem:[%s264 + $0x40] sm:$0xf]
      %v329 = vld [vmem:[%s264 + $0x44] sm:$0xf]
      %v330 = vld [vmem:[%s264 + $0x48] sm:$0xf]
      %v331 = vld [vmem:[%s264 + $0x4c] sm:$0xf]
      %v332 = vld [vmem:[%s264 + $0x50] sm:$0xf]
      %v333 = vld [vmem:[%s264 + $0x54] sm:$0xf]
      %v334 = vld [vmem:[%s264 + $0x58] sm:$0xf]
      %v335 = vld [vmem:[%s264 + $0x5c] sm:$0xf]
      %v336 = vld [vmem:[%s264 + $0x60] sm:$0xf]
      %v337 = vld [vmem:[%s264 + $0x64] sm:$0xf]
      %v338 = vld [vmem:[%s264 + $0x68] sm:$0xf]
      %v339 = vld [vmem:[%s264 + $0x6c] sm:$0xf]
      %v340 = vld [vmem:[%s264 + $0x70] sm:$0xf]
      %v341 = vld [vmem:[%s264 + $0x74] sm:$0xf]
      %v342 = vld [vmem:[%s264 + $0x78] sm:$0xf]
      %v343 = vld [vmem:[%s264 + $0x7c] sm:$0xf]
      %v348 = vunpack.c.l.b16 %v308
      %v349 = vunpack.c.h.b16 %v308
      %v350 = vunpack.c.l.b16 %v309
      %v351 = vunpack.c.h.b16 %v309
      %v352 = vunpack.c.l.b16 %v310
      %v353 = vunpack.c.h.b16 %v310
      %v354 = vunpack.c.l.b16 %v311
      %v355 = vunpack.c.h.b16 %v311
      %v356 = vpack.c.b16 %v350, %v348
      %v357 = vpack.c.b16 %v351, %v349
      %v358 = vpack.c.b16 %v354, %v352
      %v359 = vpack.c.b16 %v355, %v353
      %v396 = vunpack.c.l.b16 %v312
      %v397 = vunpack.c.l.b16 %v313
      %v398 = vunpack.c.l.b16 %v314
      %v399 = vunpack.c.l.b16 %v315
      %v400 = vunpack.c.l.b16 %v316
      %v401 = vunpack.c.l.b16 %v317
      %v402 = vunpack.c.l.b16 %v318
      %v403 = vunpack.c.l.b16 %v319
      %v404 = vunpack.c.l.b16 %v320
      %v405 = vunpack.c.l.b16 %v321
      %v406 = vunpack.c.l.b16 %v322
      %v407 = vunpack.c.l.b16 %v323
      %v408 = vunpack.c.l.b16 %v324
      %v409 = vunpack.c.l.b16 %v325
      %v410 = vunpack.c.l.b16 %v326
      %v411 = vunpack.c.l.b16 %v327
      %v412 = vunpack.c.l.b16 %v328
      %v413 = vunpack.c.l.b16 %v329
      %v414 = vunpack.c.l.b16 %v330
      %v415 = vunpack.c.l.b16 %v331
      %v416 = vunpack.c.l.b16 %v332
      %v417 = vunpack.c.l.b16 %v333
      %v418 = vunpack.c.l.b16 %v334
      %v419 = vunpack.c.l.b16 %v335
      %v420 = vunpack.c.l.b16 %v336
      %v421 = vunpack.c.l.b16 %v337
      %v422 = vunpack.c.l.b16 %v338
      %v423 = vunpack.c.l.b16 %v339
      %v424 = vunpack.c.l.b16 %v340
      %v425 = vunpack.c.l.b16 %v341
      %v426 = vunpack.c.l.b16 %v342
      %v427 = vunpack.c.l.b16 %v343
      %v428 = vpack.c.b16 %v397, %v396
      %v429 = vpack.c.b16 %v399, %v398
      %v430 = vpack.c.b16 %v401, %v400
      %v431 = vpack.c.b16 %v403, %v402
      %v432 = vpack.c.b16 %v405, %v404
      %v433 = vpack.c.b16 %v407, %v406
      %v434 = vpack.c.b16 %v409, %v408
      %v435 = vpack.c.b16 %v411, %v410
      %v436 = vpack.c.b16 %v413, %v412
      %v437 = vpack.c.b16 %v415, %v414
      %v438 = vpack.c.b16 %v417, %v416
      %v439 = vpack.c.b16 %v419, %v418
      %v440 = vpack.c.b16 %v421, %v420
      %v441 = vpack.c.b16 %v423, %v422
      %v442 = vpack.c.b16 %v425, %v424
      %v443 = vpack.c.b16 %v427, %v426
      %460 = vmatprep.subr.bf16.mxu0 0
      %461 = vmatpush1.bf16.msra.mxu0 %v435
      %462 = vmatprep.subr.bf16.mxu0 0
      %463 = vmatpush1.bf16.msra.mxu0 %v434
      %464 = vmatprep.subr.bf16.mxu0 0
      %465 = vmatpush1.bf16.msra.mxu0 %v433
      %466 = vmatprep.subr.bf16.mxu0 0
      %467 = vmatpush1.bf16.msra.mxu0 %v432
      %468 = vmatprep.subr.bf16.mxu0 0
      %469 = vmatpush1.bf16.msra.mxu0 %v431
      %470 = vmatprep.subr.bf16.mxu0 0
      %471 = vmatpush1.bf16.msra.mxu0 %v430
      %472 = vmatprep.subr.bf16.mxu0 0
      %473 = vmatpush1.bf16.msra.mxu0 %v429
      %474 = vmatprep.subr.bf16.mxu0 0
      %475 = vmatpush1.bf16.msra.mxu0 %v428
      %476 = vmatprep.subr.bf16.mxu0 0
      %477 = vmatpush2.bf16.msra.mxu0 %v443
      %478 = vmatprep.subr.bf16.mxu0 0
      %479 = vmatpush2.bf16.msra.mxu0 %v442
      %480 = vmatprep.subr.bf16.mxu0 0
      %481 = vmatpush2.bf16.msra.mxu0 %v441
      %482 = vmatprep.subr.bf16.mxu0 0
      %483 = vmatpush2.bf16.msra.mxu0 %v440
      %484 = vmatprep.subr.bf16.mxu0 0
      %485 = vmatpush2.bf16.msra.mxu0 %v439
      %486 = vmatprep.subr.bf16.mxu0 0
      %487 = vmatpush2.bf16.msra.mxu0 %v438
      %488 = vmatprep.subr.bf16.mxu0 0
      %489 = vmatpush2.bf16.msra.mxu0 %v437
      %490 = vmatprep.subr.bf16.mxu0 0
      %491 = vmatpush2.bf16.msra.mxu0 %v436
      %492 = vmatprep.mubr.bf16.mxu0 %v357
      %493 = vmatmul.mubr.bf16.gmra.mxu0 %v356
      %v494 = vpop.f32.mrf.mxu0
      %v495 = vadd.f32 0.0, %v494
      %v496 = vpop.f32.mrf.mxu0
      %v497 = vpop.f32.mrf.mxu0
      %v498 = vadd.f32 0.0, %v497
      %v499 = vpop.f32.mrf.mxu0
      %500 = vmatprep.mubr.bf16.mxu0 %v359
      %501 = vmatmul.mubr.bf16.gmra.mxu0 %v358
      %v502 = vpop.f32.mrf.mxu0
      %v503 = vadd.f32 0.0, %v502
      %v504 = vpop.f32.mrf.mxu0
      %v505 = vpop.f32.mrf.mxu0
      %v506 = vadd.f32 0.0, %v505
      %v507 = vpop.f32.mrf.mxu0
      %508 = vdwg.mxu0
      %s509 = smul.u32 %s20, 32
      %s510 = scalar_lea.vmem %s292, %s509
      %511 = vst [vmem:[%s510] sm:$0xff] %v495
      %512 = vst [vmem:[%s510 + $0x8] sm:$0xff] %v498
      %513 = vst [vmem:[%s510 + $0x10] sm:$0xff] %v503
      %514 = vst [vmem:[%s510 + $0x18] sm:$0xff] %v506
      %v515 = vld [vmem:[#allocation2] sm:$0xff]
      %v516 = vld [vmem:[#allocation2 + $0x8] sm:$0xff]
      %v517 = vld [vmem:[#allocation2 + $0x10] sm:$0xff]
      %v518 = vld [vmem:[#allocation2 + $0x18] sm:$0xff]
      %519 = vadd.xlane.f32.xlu0 %v495
      %v520 = vpop.xlane.xlu0 %519
      %521 = vadd.xlane.f32.xlu0 %v498
      %v522 = vpop.xlane.xlu0 %521
      %523 = vadd.xlane.f32.xlu0 %v503
      %v524 = vpop.xlane.xlu0 %523
      %525 = vadd.xlane.f32.xlu0 %v506
      %v526 = vpop.xlane.xlu0 %525
      %v527 = vadd.f32 %v515, %v520
      %v528 = vadd.f32 %v516, %v522
      %v529 = vadd.f32 %v517, %v524
      %v530 = vadd.f32 %v518, %v526
      %vm531 = vcmask 7168
      %532 = vst.msk [vmem:[#allocation2] sm:$0xff] %vm531, %v527
      %533 = vst.msk [vmem:[#allocation2 + $0x8] sm:$0xff] %vm531, %v528
      %534 = vst.msk [vmem:[#allocation2 + $0x10] sm:$0xff] %vm531, %v529
      %535 = vst.msk [vmem:[#allocation2 + $0x18] sm:$0xff] %vm531, %v530
      %v536 = vld [vmem:[#allocation3] sm:$0xff]
      %v537 = vld [vmem:[#allocation3 + $0x8] sm:$0xff]
      %v538 = vld [vmem:[#allocation3 + $0x10] sm:$0xff]
      %v539 = vld [vmem:[#allocation3 + $0x18] sm:$0xff]
      %v540 = vmul.f32 %v495, %v495
      %v541 = vmul.f32 %v498, %v498
      %v542 = vmul.f32 %v503, %v503
      %v543 = vmul.f32 %v506, %v506
      %544 = vadd.xlane.f32.xlu0 %v540
      %v545 = vpop.xlane.xlu0 %544
      %546 = vadd.xlane.f32.xlu0 %v541
      %v547 = vpop.xlane.xlu0 %546
      %548 = vadd.xlane.f32.xlu0 %v542
      %v549 = vpop.xlane.xlu0 %548
      %550 = vadd.xlane.f32.xlu0 %v543
      %v551 = vpop.xlane.xlu0 %550
      %v552 = vadd.f32 %v536, %v545
      %v553 = vadd.f32 %v537, %v547
      %v554 = vadd.f32 %v538, %v549
      %v555 = vadd.f32 %v539, %v551
      %556 = vst.msk [vmem:[#allocation3] sm:$0xff] %vm531, %v552
      %557 = vst.msk [vmem:[#allocation3 + $0x8] sm:$0xff] %vm531, %v553
      %558 = vst.msk [vmem:[#allocation3 + $0x10] sm:$0xff] %vm531, %v554
      %559 = vst.msk [vmem:[#allocation3 + $0x18] sm:$0xff] %vm531, %v555
      %p560 = scmp.eq.s32.totalorder %s20, 3
      // Predicated region
      $region41: #{generator_forward.6} parent=35 // pred_check
        %p561 = pneg %p560
      $region42: #{generator_forward.6} parent=35 // pred_check_branch
        %563 = sbr.rel (%p561) target = $region44
      $region43: #{generator_forward.6} parent=35 // pred_region
        %v564 = vld [vmem:[#allocation2] sm:$0xff]
        %v565 = vld [vmem:[#allocation2 + $0x8] sm:$0xff]
        %v566 = vld [vmem:[#allocation2 + $0x10] sm:$0xff]
        %v567 = vld [vmem:[#allocation2 + $0x18] sm:$0xff]
        %v568 = vmul.f32 %v564, 0.0078125
        %v569 = vmul.f32 %v565, 0.0078125
        %v570 = vmul.f32 %v566, 0.0078125
        %v571 = vmul.f32 %v567, 0.0078125
        %v572 = vld [vmem:[#allocation3] sm:$0xff]
        %v573 = vld [vmem:[#allocation3 + $0x8] sm:$0xff]
        %v574 = vld [vmem:[#allocation3 + $0x10] sm:$0xff]
        %v575 = vld [vmem:[#allocation3 + $0x18] sm:$0xff]
        %v576 = vmul.f32 %v572, 0.0078125
        %v577 = vmul.f32 %v573, 0.0078125
        %v578 = vmul.f32 %v574, 0.0078125
        %v579 = vmul.f32 %v575, 0.0078125
        %v580 = vmul.f32 %v568, %v568
        %v581 = vmul.f32 %v569, %v569
        %v582 = vmul.f32 %v570, %v570
        %v583 = vmul.f32 %v571, %v571
        %v584 = vsub.f32 %v576, %v580
        %v585 = vsub.f32 %v577, %v581
        %v586 = vsub.f32 %v578, %v582
        %v587 = vsub.f32 %v579, %v583
        %v588 = vmax.f32 %v584, 0.0
        %v589 = vmax.f32 %v585, 0.0
        %v590 = vmax.f32 %v586, 0.0
        %v591 = vmax.f32 %v587, 0.0
        %v592 = vld [vmem:[%s280] sm:$0xff]
        %v593 = vld [vmem:[%s280 + $0x8] sm:$0xff]
        %v594 = vld [vmem:[%s280 + $0x10] sm:$0xff]
        %v595 = vld [vmem:[%s280 + $0x18] sm:$0xff]
        %v596 = vadd.f32 %v588, 1e-05
        %v597 = vadd.f32 %v589, 1e-05
        %v598 = vadd.f32 %v590, 1e-05
        %v599 = vadd.f32 %v591, 1e-05
        %v600 = vrsqrt.pop %v596
        %v601 = vrsqrt.pop %v597
        %v602 = vrsqrt.pop %v598
        %v603 = vrsqrt.pop %v599
        %v604 = vmul.f32 %v592, %v600
        %v605 = vmul.f32 %v593, %v601
        %v606 = vmul.f32 %v594, %v602
        %v607 = vmul.f32 %v595, %v603
        %v608 = vld [vmem:[%s286] sm:$0xff]
        %v609 = vld [vmem:[%s286 + $0x8] sm:$0xff]
        %v610 = vld [vmem:[%s286 + $0x10] sm:$0xff]
        %v611 = vld [vmem:[%s286 + $0x18] sm:$0xff]
        %v612 = vmul.f32 %v568, %v604
        %v613 = vmul.f32 %v569, %v605
        %v614 = vmul.f32 %v570, %v606
        %v615 = vmul.f32 %v571, %v607
        %v616 = vsub.f32 %v608, %v612
        %v617 = vsub.f32 %v609, %v613
        %v618 = vsub.f32 %v610, %v614
        %v619 = vsub.f32 %v611, %v615
        %v620 = vld [vmem:[%s292] sm:$0xff]
        %v621 = vld [vmem:[%s292 + $0x8] sm:$0xff]
        %v622 = vld [vmem:[%s292 + $0x10] sm:$0xff]
        %v623 = vld [vmem:[%s292 + $0x18] sm:$0xff]
        %v624 = vld [vmem:[%s292 + $0x20] sm:$0xff]
        %v625 = vld [vmem:[%s292 + $0x28] sm:$0xff]
        %v626 = vld [vmem:[%s292 + $0x30] sm:$0xff]
        %v627 = vld [vmem:[%s292 + $0x38] sm:$0xff]
        %v628 = vld [vmem:[%s292 + $0x40] sm:$0xff]
        %v629 = vld [vmem:[%s292 + $0x48] sm:$0xff]
        %v630 = vld [vmem:[%s292 + $0x50] sm:$0xff]
        %v631 = vld [vmem:[%s292 + $0x58] sm:$0xff]
        %v632 = vld [vmem:[%s292 + $0x60] sm:$0xff]
        %v633 = vld [vmem:[%s292 + $0x68] sm:$0xff]
        %v634 = vld [vmem:[%s292 + $0x70] sm:$0xff]
        %v635 = vld [vmem:[%s292 + $0x78] sm:$0xff]
        %637 = vset.pattern.permute.xlu0 0
        %638 = vperm.xlu0 %637, %v604
        %v639 = vpop.permute.xlu0 %638
        %642 = vset.pattern.permute.xlu0 0
        %643 = vperm.xlu0 %642, %v605
        %v644 = vpop.permute.xlu0 %643
        %647 = vset.pattern.permute.xlu0 0
        %648 = vperm.xlu0 %647, %v606
        %v649 = vpop.permute.xlu0 %648
        %652 = vset.pattern.permute.xlu0 0
        %653 = vperm.xlu0 %652, %v607
        %v654 = vpop.permute.xlu0 %653
        %v656 = vmul.f32 %v620, %v639
        %v657 = vmul.f32 %v621, %v644
        %v658 = vmul.f32 %v622, %v649
        %v659 = vmul.f32 %v623, %v654
        %v660 = vmul.f32 %v624, %v639
        %v661 = vmul.f32 %v625, %v644
        %v662 = vmul.f32 %v626, %v649
        %v663 = vmul.f32 %v627, %v654
        %v664 = vmul.f32 %v628, %v639
        %v665 = vmul.f32 %v629, %v644
        %v666 = vmul.f32 %v630, %v649
        %v667 = vmul.f32 %v631, %v654
        %v668 = vmul.f32 %v632, %v639
        %v669 = vmul.f32 %v633, %v644
        %v670 = vmul.f32 %v634, %v649
        %v671 = vmul.f32 %v635, %v654
        %673 = vset.pattern.permute.xlu0 0
        %674 = vperm.xlu0 %673, %v616
        %v675 = vpop.permute.xlu0 %674
        %678 = vset.pattern.permute.xlu0 0
        %679 = vperm.xlu0 %678, %v617
        %v680 = vpop.permute.xlu0 %679
        %683 = vset.pattern.permute.xlu0 0
        %684 = vperm.xlu0 %683, %v618
        %v685 = vpop.permute.xlu0 %684
        %688 = vset.pattern.permute.xlu0 0
        %689 = vperm.xlu0 %688, %v619
        %v690 = vpop.permute.xlu0 %689
        %v692 = vadd.f32 %v656, %v675
        %v693 = vadd.f32 %v657, %v680
        %v694 = vadd.f32 %v658, %v685
        %v695 = vadd.f32 %v659, %v690
        %v696 = vadd.f32 %v660, %v675
        %v697 = vadd.f32 %v661, %v680
        %v698 = vadd.f32 %v662, %v685
        %v699 = vadd.f32 %v663, %v690
        %v700 = vadd.f32 %v664, %v675
        %v701 = vadd.f32 %v665, %v680
        %v702 = vadd.f32 %v666, %v685
        %v703 = vadd.f32 %v667, %v690
        %v704 = vadd.f32 %v668, %v675
        %v705 = vadd.f32 %v669, %v680
        %v706 = vadd.f32 %v670, %v685
        %v707 = vadd.f32 %v671, %v690
        %v708 = vmax.f32 %v692, 0.0
        %v709 = vmax.f32 %v693, 0.0
        %v710 = vmax.f32 %v694, 0.0
        %v711 = vmax.f32 %v695, 0.0
        %v712 = vmax.f32 %v696, 0.0
        %v713 = vmax.f32 %v697, 0.0
        %v714 = vmax.f32 %v698, 0.0
        %v715 = vmax.f32 %v699, 0.0
        %v716 = vmax.f32 %v700, 0.0
        %v717 = vmax.f32 %v701, 0.0
        %v718 = vmax.f32 %v702, 0.0
        %v719 = vmax.f32 %v703, 0.0
        %v720 = vmax.f32 %v704, 0.0
        %v721 = vmax.f32 %v705, 0.0
        %v722 = vmax.f32 %v706, 0.0
        %v723 = vmax.f32 %v707, 0.0
        %724 = vst [vmem:[%s292] sm:$0xff] %v708
        %725 = vst [vmem:[%s292 + $0x8] sm:$0xff] %v709
        %726 = vst [vmem:[%s292 + $0x10] sm:$0xff] %v710
        %727 = vst [vmem:[%s292 + $0x18] sm:$0xff] %v711
        %728 = vst [vmem:[%s292 + $0x20] sm:$0xff] %v712
        %729 = vst [vmem:[%s292 + $0x28] sm:$0xff] %v713
        %730 = vst [vmem:[%s292 + $0x30] sm:$0xff] %v714
        %731 = vst [vmem:[%s292 + $0x38] sm:$0xff] %v715
        %732 = vst [vmem:[%s292 + $0x40] sm:$0xff] %v716
        %733 = vst [vmem:[%s292 + $0x48] sm:$0xff] %v717
        %734 = vst [vmem:[%s292 + $0x50] sm:$0xff] %v718
        %735 = vst [vmem:[%s292 + $0x58] sm:$0xff] %v719
        %736 = vst [vmem:[%s292 + $0x60] sm:$0xff] %v720
        %737 = vst [vmem:[%s292 + $0x68] sm:$0xff] %v721
        %738 = vst [vmem:[%s292 + $0x70] sm:$0xff] %v722
        %739 = vst [vmem:[%s292 + $0x78] sm:$0xff] %v723
      $region44: #{generator_forward.6} parent=35 // pred_fallthru
        _
      %s740 = smul.u32 4, %s19
      %p741 = scmp.lt.s32.totalorder %s740, 3
      %s742 = scalar_select %p741, %s740, 3
      %s743 = smul.addr %s742, 8
      %s744 = scalar_lea.vmem %s4, %s743
      // Predicated region
      $region45: #{generator_forward.6} parent=35 // pred_check
        %p745 = pneg %p151
      $region46: #{generator_forward.6} parent=35 // pred_check_branch
        %747 = sbr.rel (%p745) target = $region48
      $region47: #{generator_forward.6} parent=35 // pred_region
        %s748 = smul.u32 4, %s19
      $region48: #{generator_forward.6} parent=35 // pred_fallthru
        _
      // Predicated region
      $region49: #{generator_forward.6} parent=35 // pred_check
        %p749 = pneg %p151
      $region50: #{generator_forward.6} parent=35 // pred_check_branch
        %751 = sbr.rel (%p749) target = $region52
      $region51: #{generator_forward.6} parent=35 // pred_region
        %s752 = smul.u32 4, %s19
        %p753 = scmp.lt.s32.totalorder %s752, 3
        %s754 = scalar_select %p753, %s752, 3
        %s755 = smul.addr %s754, 8
        %s756 = scalar_lea.vmem %s4, %s755
      $region52: #{generator_forward.6} parent=35 // pred_fallthru
        _
    $region36: #{generator_forward.6} parent=5 // pred_fallthru
      _
    %p757 = scmp.le.s32.totalorder 2, %s10
    // Predicated region
    $region53: #{generator_forward.6} parent=5 // pred_check
      %p758 = pneg %p757
    $region54: #{generator_forward.6} parent=5 // pred_check_branch
      %760 = sbr.rel (%p758) target = $region56
    $region55: #{generator_forward.6} parent=5 // pred_region
      %s761 = ssub.s32 %s10, 2
    $region56: #{generator_forward.6} parent=5 // pred_fallthru
      _
  $region6: #{generator_forward.6} parent=0 // loop_footer
    %s14 = sadd.s32 1, %s10
  $region7: #{generator_forward.6} parent=0 // loop_footer_branch
    %9 = sbr.rel target = $region3
  $region8: #{generator_forward.6} parent=0 // loop_exit
    _

// kernel: generator_forward.7
$region0: #{generator_forward.7}
  #allocation0 [shape = 'u32[]', space=smem, size = 0x4, offset = 0x4, fixed_abs, tag = 'smem constant byte address 0x4 - core index']
  #allocation1 [shape = 'u32[144,128]{1,0:T(1,128)}', space=vmem, size = 0x12000, scoped, tag = 'internal scratch']
  #allocation2 [shape = 'f32[16,1]{1,0:T(8,128)}', space=vmem, size = 0x2000, scoped, tag = 'scratch operand']
  #allocation3 [shape = 'f32[16,1]{1,0:T(8,128)}', space=vmem, size = 0x2000, scoped, tag = 'scratch operand']
  %s0 = inlined_call_operand.vmem [shape: bf16[4,128,128], index: 0, kind: input, shape index: {}]
  %s1 = inlined_call_operand.vmem [shape: bf16[4,16,128], index: 1, kind: input, shape index: {}]
  %s2 = inlined_call_operand.vmem [shape: f32[16,1], index: 2, kind: input, shape index: {}]
  %s3 = inlined_call_operand.vmem [shape: f32[16,1], index: 3, kind: input, shape index: {}]
  %s4 = inlined_call_operand.vmem [shape: f32[4,16,128], index: 4, kind: output, shape index: {}]
  %s5 = sld [smem:[#allocation0]]
  $region57: #{generator_forward.7} parent=0
    _
  %s7 = ssub.s32 1, %s5
  %s8 = scalar_select 0, %s7, %s5
  loop: start=0, step=1, limit=6
  $region2: #{generator_forward.7} parent=0 // loop_pre_header
    _
  $region3: #{generator_forward.7} parent=0 // loop_header
    %s10 = sphi 0, %s14
    %p11 = scmp.ge.s32.totalorder %s10, 6
    %s17 = sphi 0, %s29
    %s18 = sphi 0, %s25
    %s19 = sphi 0, %s17
    %s20 = sphi 0, %s18
    %s21 = sphi 0, %s19
    %s22 = sphi 0, %s20
    %s32 = sphi 0, %s34
    %s35 = sphi 0, %s32
    %s36 = sphi 0, %s35
    %s52 = sphi 0, %s36
    %s60 = sphi 0, %s62
    %s63 = sphi 0, %s60
    %s64 = sphi 0, %s63
    %s80 = sphi 0, %s64
    %s86 = sphi 0, %s88
    %s89 = sphi 0, %s86
    %s90 = sphi 0, %s89
    %s106 = sphi 0, %s90
    %s112 = sphi 0, %s114
    %s115 = sphi 0, %s112
    %s116 = sphi 0, %s115
    %s132 = sphi 0, %s116
    %s138 = sphi 0, %s140
    %s141 = sphi 0, %s138
    %s142 = sphi 0, %s141
    %s158 = sphi 0, %s142
  $region4: #{generator_forward.7} parent=0 // loop_header_branch
    %13 = sbr.rel (%p11) target = $region8
  $region5: #{generator_forward.7} parent=0 // loop_body
    %s15 = ssub.s32 %s10, 1
    %s16 = ssub.s32 %s10, 2
    %s23 = sadd.s32 1, %s18
    %p24 = scmp.ge.s32.totalorder %s23, 4
    %s25 = scalar_select %p24, 0, %s23
    %s26 = sadd.s32 1, %s17
    %s27 = scalar_select %p24, %s26, %s17
    %p28 = scmp.ge.s32.totalorder %s27, 1
    %s29 = scalar_select %p28, 0, %s27
    %s30 = ssub.s32 %s18, %s25
    %p31 = scmp.eq.s32.totalorder %s30, 0
    %s33 = sadd.s32 %s32, 1
    %s34 = scalar_select %p31, %s32, %s33
    %p37 = pneg %p31
    %p38 = scmp.eq.s32.totalorder %s10, 3
    %p39 = por %p37, %p38
    %p40 = scmp.ne.s32.totalorder %s32, %s35
    %p41 = scmp.eq.s32.totalorder %s10, 0
    %p42 = por %p40, %p41
    %p43 = scmp.ne.s32.totalorder %s32, %s35
    %p44 = scmp.eq.s32.totalorder %s15, 3
    %p45 = por %p43, %p44
    %p46 = scmp.ne.s32.totalorder %s35, %s36
    %p47 = scmp.eq.s32.totalorder %s15, 0
    %p48 = por %p46, %p47
    %p49 = scmp.ne.s32.totalorder %s35, %s36
    %p50 = scmp.eq.s32.totalorder %s16, 3
    %p51 = por %p49, %p50
    %p53 = scmp.ne.s32.totalorder %s36, %s52
    %p54 = scmp.eq.s32.totalorder %s16, 0
    %p55 = por %p53, %p54
    %s56 = ssub.s32 %s18, %s25
    %s57 = ssub.s32 %s17, %s29
    %s58 = sor.u32 %s56, %s57
    %p59 = scmp.eq.s32.totalorder %s58, 0
    %s61 = sadd.s32 %s60, 1
    %s62 = scalar_select %p59, %s60, %s61
    %p65 = pneg %p59
    %p66 = scmp.eq.s32.totalorder %s10, 3
    %p67 = por %p65, %p66
    %p68 = scmp.ne.s32.totalorder %s60, %s63
    %p69 = scmp.eq.s32.totalorder %s10, 0
    %p70 = por %p68, %p69
    %p71 = scmp.ne.s32.totalorder %s60, %s63
    %p72 = scmp.eq.s32.totalorder %s15, 3
    %p73 = por %p71, %p72
    %p74 = scmp.ne.s32.totalorder %s63, %s64
    %p75 = scmp.eq.s32.totalorder %s15, 0
    %p76 = por %p74, %p75
    %p77 = scmp.ne.s32.totalorder %s63, %s64
    %p78 = scmp.eq.s32.totalorder %s16, 3
    %p79 = por %p77, %p78
    %p81 = scmp.ne.s32.totalorder %s64, %s80
    %p82 = scmp.eq.s32.totalorder %s16, 0
    %p83 = por %p81, %p82
    %s84 = ssub.s32 %s17, %s29
    %p85 = scmp.eq.s32.totalorder %s84, 0
    %s87 = sadd.s32 %s86, 1
    %s88 = scalar_select %p85, %s86, %s87
    %p91 = pneg %p85
    %p92 = scmp.eq.s32.totalorder %s10, 3
    %p93 = por %p91, %p92
    %p94 = scmp.ne.s32.totalorder %s86, %s89
    %p95 = scmp.eq.s32.totalorder %s10, 0
    %p96 = por %p94, %p95
    %p97 = scmp.ne.s32.totalorder %s86, %s89
    %p98 = scmp.eq.s32.totalorder %s15, 3
    %p99 = por %p97, %p98
    %p100 = scmp.ne.s32.totalorder %s89, %s90
    %p101 = scmp.eq.s32.totalorder %s15, 0
    %p102 = por %p100, %p101
    %p103 = scmp.ne.s32.totalorder %s89, %s90
    %p104 = scmp.eq.s32.totalorder %s16, 3
    %p105 = por %p103, %p104
    %p107 = scmp.ne.s32.totalorder %s90, %s106
    %p108 = scmp.eq.s32.totalorder %s16, 0
    %p109 = por %p107, %p108
    %s110 = ssub.s32 %s17, %s29
    %p111 = scmp.eq.s32.totalorder %s110, 0
    %s113 = sadd.s32 %s112, 1
    %s114 = scalar_select %p111, %s112, %s113
    %p117 = pneg %p111
    %p118 = scmp.eq.s32.totalorder %s10, 3
    %p119 = por %p117, %p118
    %p120 = scmp.ne.s32.totalorder %s112, %s115
    %p121 = scmp.eq.s32.totalorder %s10, 0
    %p122 = por %p120, %p121
    %p123 = scmp.ne.s32.totalorder %s112, %s115
    %p124 = scmp.eq.s32.totalorder %s15, 3
    %p125 = por %p123, %p124
    %p126 = scmp.ne.s32.totalorder %s115, %s116
    %p127 = scmp.eq.s32.totalorder %s15, 0
    %p128 = por %p126, %p127
    %p129 = scmp.ne.s32.totalorder %s115, %s116
    %p130 = scmp.eq.s32.totalorder %s16, 3
    %p131 = por %p129, %p130
    %p133 = scmp.ne.s32.totalorder %s116, %s132
    %p134 = scmp.eq.s32.totalorder %s16, 0
    %p135 = por %p133, %p134
    %s136 = ssub.s32 %s17, %s29
    %p137 = scmp.eq.s32.totalorder %s136, 0
    %s139 = sadd.s32 %s138, 1
    %s140 = scalar_select %p137, %s138, %s139
    %p143 = pneg %p137
    %p144 = scmp.eq.s32.totalorder %s10, 3
    %p145 = por %p143, %p144
    %p146 = scmp.ne.s32.totalorder %s138, %s141
    %p147 = scmp.eq.s32.totalorder %s10, 0
    %p148 = por %p146, %p147
    %p149 = scmp.ne.s32.totalorder %s138, %s141
    %p150 = scmp.eq.s32.totalorder %s15, 3
    %p151 = por %p149, %p150
    %p152 = scmp.ne.s32.totalorder %s141, %s142
    %p153 = scmp.eq.s32.totalorder %s15, 0
    %p154 = por %p152, %p153
    %p155 = scmp.ne.s32.totalorder %s141, %s142
    %p156 = scmp.eq.s32.totalorder %s16, 3
    %p157 = por %p155, %p156
    %p159 = scmp.ne.s32.totalorder %s142, %s158
    %p160 = scmp.eq.s32.totalorder %s16, 0
    %p161 = por %p159, %p160
    %p162 = scmp.le.s32.totalorder 1, %s10
    %p163 = scmp.lt.s32.totalorder %s10, 5
    %p164 = pnand %p162, %p163
    %p165 = pneg %p164
    // Predicated region
    $region9: #{generator_forward.7} parent=5 // pred_check
      _
    $region10: #{generator_forward.7} parent=5 // pred_check_branch
      %167 = sbr.rel (%p164) target = $region12
    $region11: #{generator_forward.7} parent=5 // pred_region
      %s168 = ssub.s32 %s10, 1
      // Predicated region
      $region13: #{generator_forward.7} parent=11 // pred_check
        %p169 = pneg %p102
      $region14: #{generator_forward.7} parent=11 // pred_check_branch
        %171 = sbr.rel (%p169) target = $region16
      $region15: #{generator_forward.7} parent=11 // pred_region
        %s172 = smul.u32 2, %s19
        %p173 = scmp.lt.s32.totalorder %s172, 1
        %s174 = scalar_select %p173, %s172, 1
        %s175 = smul.addr %s174, 8
        %s176 = scalar_lea.vmem %s2, %s175
        %s177 = smul.u32 2, %s19
      $region16: #{generator_forward.7} parent=11 // pred_fallthru
        _
      // Predicated region
      $region17: #{generator_forward.7} parent=11 // pred_check
        %p178 = pneg %p128
      $region18: #{generator_forward.7} parent=11 // pred_check_branch
        %180 = sbr.rel (%p178) target = $region20
      $region19: #{generator_forward.7} parent=11 // pred_region
        %s181 = smul.u32 2, %s19
        %p182 = scmp.lt.s32.totalorder %s181, 1
        %s183 = scalar_select %p182, %s181, 1
        %s184 = smul.addr %s183, 8
        %s185 = scalar_lea.vmem %s3, %s184
        %s186 = smul.u32 2, %s19
      $region20: #{generator_forward.7} parent=11 // pred_fallthru
        _
    $region12: #{generator_forward.7} parent=5 // pred_fallthru
      _
    %p187 = scmp.lt.s32.totalorder %s10, 4
    // Predicated region
    $region21: #{generator_forward.7} parent=5 // pred_check
      %p188 = pneg %p187
    $region22: #{generator_forward.7} parent=5 // pred_check_branch
      %190 = sbr.rel (%p188) target = $region24
    $region23: #{generator_forward.7} parent=5 // pred_region
      // Predicated region
      $region25: #{generator_forward.7} parent=23 // pred_check
        %p191 = pneg %p42
      $region26: #{generator_forward.7} parent=23 // pred_check_branch
        %193 = sbr.rel (%p191) target = $region28
      $region27: #{generator_forward.7} parent=23 // pred_region
        %p194 = scmp.lt.s32.totalorder %s18, 3
        %s195 = scalar_select %p194, %s18, 3
        %s196 = smul.addr %s195, 16
        %s197 = smul.addr %s196, 4
        %s198 = scalar_lea.vmem %s0, %s197
      $region28: #{generator_forward.7} parent=23 // pred_fallthru
        _
      // Predicated region
      $region29: #{generator_forward.7} parent=23 // pred_check
        %p199 = pneg %p70
      $region30: #{generator_forward.7} parent=23 // pred_check_branch
        %201 = sbr.rel (%p199) target = $region32
      $region31: #{generator_forward.7} parent=23 // pred_region
        %s202 = smul.u32 2, %s17
        %p203 = scmp.lt.s32.totalorder %s18, 3
        %s204 = scalar_select %p203, %s18, 3
        %p205 = scmp.lt.s32.totalorder %s202, 1
        %s206 = scalar_select %p205, %s202, 1
        %s207 = smul.addr %s204, 2
        %s208 = sadd.s32 %s206, %s207
        %s209 = smul.addr %s208, 4
        %s210 = scalar_lea.vmem %s1, %s209
        %s211 = smul.u32 2, %s17
      $region32: #{generator_forward.7} parent=23 // pred_fallthru
        _
    $region24: #{generator_forward.7} parent=5 // pred_fallthru
      _
    %p212 = scmp.le.s32.totalorder 1, %s10
    %p213 = scmp.lt.s32.totalorder %s10, 5
    %p214 = pnand %p212, %p213
    %p215 = pneg %p214
    // Predicated region
    $region33: #{generator_forward.7} parent=5 // pred_check
      _
    $region34: #{generator_forward.7} parent=5 // pred_check_branch
      %217 = sbr.rel (%p214) target = $region36
    $region35: #{generator_forward.7} parent=5 // pred_region
      %s218 = ssub.s32 %s10, 1
      %p219 = scmp.lt.s32.totalorder %s20, 3
      %s220 = scalar_select %p219, %s20, 3
      %s221 = smul.addr %s220, 16
      %s222 = smul.addr %s221, 4
      %s223 = scalar_lea.vmem %s0, %s222
      %p224 = pneg %p48
      %p225 = pneg %p45
      %s226 = smul.u32 2, %s19
      %p227 = scmp.lt.s32.totalorder %s20, 3
      %s228 = scalar_select %p227, %s20, 3
      %p229 = scmp.lt.s32.totalorder %s226, 1
      %s230 = scalar_select %p229, %s226, 1
      %s231 = smul.addr %s228, 2
      %s232 = sadd.s32 %s230, %s231
      %s233 = smul.addr %s232, 4
      %s234 = scalar_lea.vmem %s1, %s233
      %p235 = pneg %p76
      %p236 = pneg %p73
      %s237 = smul.u32 2, %s19
      %p238 = scmp.lt.s32.totalorder %s237, 1
      %s239 = scalar_select %p238, %s237, 1
      %s240 = smul.addr %s239, 8
      %s241 = scalar_lea.vmem %s2, %s240
      %p242 = pneg %p102
      %p243 = pneg %p99
      %s244 = smul.u32 2, %s19
      %p245 = scmp.lt.s32.totalorder %s244, 1
      %s246 = scalar_select %p245, %s244, 1
      %s247 = smul.addr %s246, 8
      %s248 = scalar_lea.vmem %s3, %s247
      %p249 = pneg %p128
      %p250 = pneg %p125
      %p251 = pneg %p154
      %p252 = pneg %p151
      %s253 = smul.u32 2, %s19
      %p254 = scmp.lt.s32.totalorder %s253, 1
      %s255 = scalar_select %p254, %s253, 1
      %s256 = smul.addr %s255, 8
      %s257 = scalar_lea.vmem %s4, %s256
      %p258 = scmp.lt.s32.totalorder %s20, 3
      %s259 = scalar_select %p258, %s20, 3
      %s260 = smul.addr %s259, 16
      %s261 = smul.addr %s260, 4
      %s262 = scalar_lea.vmem %s0, %s261
      %s263 = smul.u32 2, %s19
      %p264 = scmp.lt.s32.totalorder %s20, 3
      %s265 = scalar_select %p264, %s20, 3
      %p266 = scmp.lt.s32.totalorder %s263, 1
      %s267 = scalar_select %p266, %s263, 1
      %s268 = smul.addr %s265, 2
      %s269 = sadd.s32 %s267, %s268
      %s270 = smul.addr %s269, 4
      %s271 = scalar_lea.vmem %s1, %s270
      %s272 = smul.u32 2, %s19
      %s273 = smul.u32 2, %s19
      %p274 = scmp.lt.s32.totalorder %s273, 1
      %s275 = scalar_select %p274, %s273, 1
      %s276 = smul.addr %s275, 8
      %s277 = scalar_lea.vmem %s2, %s276
      %s278 = smul.u32 2, %s19
      %s279 = smul.u32 2, %s19
      %p280 = scmp.lt.s32.totalorder %s279, 1
      %s281 = scalar_select %p280, %s279, 1
      %s282 = smul.addr %s281, 8
      %s283 = scalar_lea.vmem %s3, %s282
      %s284 = smul.u32 2, %s19
      %s285 = smul.u32 2, %s19
      %p286 = scmp.lt.s32.totalorder %s285, 1
      %s287 = scalar_select %p286, %s285, 1
      %s288 = smul.addr %s287, 8
      %s289 = scalar_lea.vmem %s4, %s288
      %s290 = smul.u32 2, %s19
      %p292 = scmp.eq.s32.totalorder %s20, 0
      // Predicated region
      $region37: #{generator_forward.7} parent=35 // pred_check
        %p293 = pneg %p292
      $region38: #{generator_forward.7} parent=35 // pred_check_branch
        %295 = sbr.rel (%p293) target = $region40
      $region39: #{generator_forward.7} parent=35 // pred_region
        %vm296 = vcmask 7168
        %297 = vst.msk [vmem:[#allocation2] sm:$0xff] %vm296, 0.0
        %298 = vst.msk [vmem:[#allocation2 + $0x8] sm:$0xff] %vm296, 0.0
        %299 = vst.msk [vmem:[#allocation3] sm:$0xff] %vm296, 0.0
        %300 = vst.msk [vmem:[#allocation3 + $0x8] sm:$0xff] %vm296, 0.0
      $region40: #{generator_forward.7} parent=35 // pred_fallthru
        _
      %v301 = vld [vmem:[%s271] sm:$0xf]
      %v302 = vld [vmem:[%s271 + $0x4] sm:$0xf]
      %v303 = vld [vmem:[%s262] sm:$0xf]
      %v304 = vld [vmem:[%s262 + $0x4] sm:$0xf]
      %v305 = vld [vmem:[%s262 + $0x8] sm:$0xf]
      %v306 = vld [vmem:[%s262 + $0xc] sm:$0xf]
      %v307 = vld [vmem:[%s262 + $0x10] sm:$0xf]
      %v308 = vld [vmem:[%s262 + $0x14] sm:$0xf]
      %v309 = vld [vmem:[%s262 + $0x18] sm:$0xf]
      %v310 = vld [vmem:[%s262 + $0x1c] sm:$0xf]
      %v311 = vld [vmem:[%s262 + $0x20] sm:$0xf]
      %v312 = vld [vmem:[%s262 + $0x24] sm:$0xf]
      %v313 = vld [vmem:[%s262 + $0x28] sm:$0xf]
      %v314 = vld [vmem:[%s262 + $0x2c] sm:$0xf]
      %v315 = vld [vmem:[%s262 + $0x30] sm:$0xf]
      %v316 = vld [vmem:[%s262 + $0x34] sm:$0xf]
      %v317 = vld [vmem:[%s262 + $0x38] sm:$0xf]
      %v318 = vld [vmem:[%s262 + $0x3c] sm:$0xf]
      %v321 = vunpack.c.l.b16 %v301
      %v322 = vunpack.c.l.b16 %v302
      %v323 = vpack.c.b16 %v322, %v321
      %v341 = vunpack.c.l.b16 %v303
      %v342 = vunpack.c.l.b16 %v304
      %v343 = vunpack.c.l.b16 %v305
      %v344 = vunpack.c.l.b16 %v306
      %v345 = vunpack.c.l.b16 %v307
      %v346 = vunpack.c.l.b16 %v308
      %v347 = vunpack.c.l.b16 %v309
      %v348 = vunpack.c.l.b16 %v310
      %v349 = vunpack.c.l.b16 %v311
      %v350 = vunpack.c.l.b16 %v312
      %v351 = vunpack.c.l.b16 %v313
      %v352 = vunpack.c.l.b16 %v314
      %v353 = vunpack.c.l.b16 %v315
      %v354 = vunpack.c.l.b16 %v316
      %v355 = vunpack.c.l.b16 %v317
      %v356 = vunpack.c.l.b16 %v318
      %v357 = vpack.c.b16 %v342, %v341
      %v358 = vpack.c.b16 %v344, %v343
      %v359 = vpack.c.b16 %v346, %v345
      %v360 = vpack.c.b16 %v348, %v347
      %v361 = vpack.c.b16 %v350, %v349
      %v362 = vpack.c.b16 %v352, %v351
      %v363 = vpack.c.b16 %v354, %v353
      %v364 = vpack.c.b16 %v356, %v355
      %373 = vmatprep.subr.bf16.mxu0 0
      %374 = vmatpush1.bf16.msra.mxu0 %v364
      %375 = vmatprep.subr.bf16.mxu0 0
      %376 = vmatpush1.bf16.msra.mxu0 %v363
      %377 = vmatprep.subr.bf16.mxu0 0
      %378 = vmatpush1.bf16.msra.mxu0 %v362
      %379 = vmatprep.subr.bf16.mxu0 0
      %380 = vmatpush1.bf16.msra.mxu0 %v361
      %381 = vmatprep.subr.bf16.mxu0 0
      %382 = vmatpush1.bf16.msra.mxu0 %v360
      %383 = vmatprep.subr.bf16.mxu0 0
      %384 = vmatpush1.bf16.msra.mxu0 %v359
      %385 = vmatprep.subr.bf16.mxu0 0
      %386 = vmatpush1.bf16.msra.mxu0 %v358
      %387 = vmatprep.subr.bf16.mxu0 0
      %388 = vmatpush1.bf16.msra.mxu0 %v357
      %389 = vmatprep.subr.bf16.mxu0 0
      %390 = vmatpush2.bf16.msra.mxu0 0
      %391 = vmatprep.subr.bf16.mxu0 0
      %392 = vmatpush2.bf16.msra.mxu0 0
      %393 = vmatprep.subr.bf16.mxu0 0
      %394 = vmatpush2.bf16.msra.mxu0 0
      %395 = vmatprep.subr.bf16.mxu0 0
      %396 = vmatpush2.bf16.msra.mxu0 0
      %397 = vmatprep.subr.bf16.mxu0 0
      %398 = vmatpush2.bf16.msra.mxu0 0
      %399 = vmatprep.subr.bf16.mxu0 0
      %400 = vmatpush2.bf16.msra.mxu0 0
      %401 = vmatprep.subr.bf16.mxu0 0
      %402 = vmatpush2.bf16.msra.mxu0 0
      %403 = vmatprep.subr.bf16.mxu0 0
      %404 = vmatpush2.bf16.msra.mxu0 0
      %405 = vmatprep.mubr.bf16.mxu0 0
      %406 = vmatmul.mubr.bf16.gmra.mxu0 %v323
      %v407 = vpop.f32.mrf.mxu0
      %v408 = vadd.f32 0.0, %v407
      %v409 = vpop.f32.mrf.mxu0
      %v410 = vpop.f32.mrf.mxu0
      %v411 = vadd.f32 0.0, %v410
      %v412 = vpop.f32.mrf.mxu0
      %413 = vdwg.mxu0
      %s414 = smul.u32 %s20, 16
      %s415 = scalar_lea.vmem %s289, %s414
      %416 = vst [vmem:[%s415] sm:$0xff] %v408
      %417 = vst [vmem:[%s415 + $0x8] sm:$0xff] %v411
      %v418 = vld [vmem:[#allocation2] sm:$0xff]
      %v419 = vld [vmem:[#allocation2 + $0x8] sm:$0xff]
      %420 = vadd.xlane.f32.xlu0 %v408
      %v421 = vpop.xlane.xlu0 %420
      %422 = vadd.xlane.f32.xlu0 %v411
      %v423 = vpop.xlane.xlu0 %422
      %v424 = vadd.f32 %v418, %v421
      %v425 = vadd.f32 %v419, %v423
      %vm426 = vcmask 7168
      %427 = vst.msk [vmem:[#allocation2] sm:$0xff] %vm426, %v424
      %428 = vst.msk [vmem:[#allocation2 + $0x8] sm:$0xff] %vm426, %v425
      %v429 = vld [vmem:[#allocation3] sm:$0xff]
      %v430 = vld [vmem:[#allocation3 + $0x8] sm:$0xff]
      %v431 = vmul.f32 %v408, %v408
      %v432 = vmul.f32 %v411, %v411
      %433 = vadd.xlane.f32.xlu0 %v431
      %v434 = vpop.xlane.xlu0 %433
      %435 = vadd.xlane.f32.xlu0 %v432
      %v436 = vpop.xlane.xlu0 %435
      %v437 = vadd.f32 %v429, %v434
      %v438 = vadd.f32 %v430, %v436
      %439 = vst.msk [vmem:[#allocation3] sm:$0xff] %vm426, %v437
      %440 = vst.msk [vmem:[#allocation3 + $0x8] sm:$0xff] %vm426, %v438
      %p441 = scmp.eq.s32.totalorder %s20, 3
      // Predicated region
      $region41: #{generator_forward.7} parent=35 // pred_check
        %p442 = pneg %p441
      $region42: #{generator_forward.7} parent=35 // pred_check_branch
        %444 = sbr.rel (%p442) target = $region44
      $region43: #{generator_forward.7} parent=35 // pred_region
        %v445 = vld [vmem:[#allocation2] sm:$0xff]
        %v446 = vld [vmem:[#allocation2 + $0x8] sm:$0xff]
        %v447 = vmul.f32 %v445, 0.001953125
        %v448 = vmul.f32 %v446, 0.001953125
        %v449 = vld [vmem:[#allocation3] sm:$0xff]
        %v450 = vld [vmem:[#allocation3 + $0x8] sm:$0xff]
        %v451 = vmul.f32 %v449, 0.001953125
        %v452 = vmul.f32 %v450, 0.001953125
        %v453 = vmul.f32 %v447, %v447
        %v454 = vmul.f32 %v448, %v448
        %v455 = vsub.f32 %v451, %v453
        %v456 = vsub.f32 %v452, %v454
        %v457 = vmax.f32 %v455, 0.0
        %v458 = vmax.f32 %v456, 0.0
        %v459 = vld [vmem:[%s277] sm:$0xff]
        %v460 = vld [vmem:[%s277 + $0x8] sm:$0xff]
        %v461 = vadd.f32 %v457, 1e-05
        %v462 = vadd.f32 %v458, 1e-05
        %v463 = vrsqrt.pop %v461
        %v464 = vrsqrt.pop %v462
        %v465 = vmul.f32 %v459, %v463
        %v466 = vmul.f32 %v460, %v464
        %v467 = vld [vmem:[%s283] sm:$0xff]
        %v468 = vld [vmem:[%s283 + $0x8] sm:$0xff]
        %v469 = vmul.f32 %v447, %v465
        %v470 = vmul.f32 %v448, %v466
        %v471 = vsub.f32 %v467, %v469
        %v472 = vsub.f32 %v468, %v470
        %v473 = vld [vmem:[%s289] sm:$0xff]
        %v474 = vld [vmem:[%s289 + $0x8] sm:$0xff]
        %v475 = vld [vmem:[%s289 + $0x10] sm:$0xff]
        %v476 = vld [vmem:[%s289 + $0x18] sm:$0xff]
        %v477 = vld [vmem:[%s289 + $0x20] sm:$0xff]
        %v478 = vld [vmem:[%s289 + $0x28] sm:$0xff]
        %v479 = vld [vmem:[%s289 + $0x30] sm:$0xff]
        %v480 = vld [vmem:[%s289 + $0x38] sm:$0xff]
        %482 = vset.pattern.permute.xlu0 0
        %483 = vperm.xlu0 %482, %v465
        %v484 = vpop.permute.xlu0 %483
        %487 = vset.pattern.permute.xlu0 0
        %488 = vperm.xlu0 %487, %v466
        %v489 = vpop.permute.xlu0 %488
        %v491 = vmul.f32 %v473, %v484
        %v492 = vmul.f32 %v474, %v489
        %v493 = vmul.f32 %v475, %v484
        %v494 = vmul.f32 %v476, %v489
        %v495 = vmul.f32 %v477, %v484
        %v496 = vmul.f32 %v478, %v489
        %v497 = vmul.f32 %v479, %v484
        %v498 = vmul.f32 %v480, %v489
        %500 = vset.pattern.permute.xlu0 0
        %501 = vperm.xlu0 %500, %v471
        %v502 = vpop.permute.xlu0 %501
        %505 = vset.pattern.permute.xlu0 0
        %506 = vperm.xlu0 %505, %v472
        %v507 = vpop.permute.xlu0 %506
        %v509 = vadd.f32 %v491, %v502
        %v510 = vadd.f32 %v492, %v507
        %v511 = vadd.f32 %v493, %v502
        %v512 = vadd.f32 %v494, %v507
        %v513 = vadd.f32 %v495, %v502
        %v514 = vadd.f32 %v496, %v507
        %v515 = vadd.f32 %v497, %v502
        %v516 = vadd.f32 %v498, %v507
        %v517 = vmax.f32 %v509, 0.0
        %v518 = vmax.f32 %v510, 0.0
        %v519 = vmax.f32 %v511, 0.0
        %v520 = vmax.f32 %v512, 0.0
        %v521 = vmax.f32 %v513, 0.0
        %v522 = vmax.f32 %v514, 0.0
        %v523 = vmax.f32 %v515, 0.0
        %v524 = vmax.f32 %v516, 0.0
        %525 = vst [vmem:[%s289] sm:$0xff] %v517
        %526 = vst [vmem:[%s289 + $0x8] sm:$0xff] %v518
        %527 = vst [vmem:[%s289 + $0x10] sm:$0xff] %v519
        %528 = vst [vmem:[%s289 + $0x18] sm:$0xff] %v520
        %529 = vst [vmem:[%s289 + $0x20] sm:$0xff] %v521
        %530 = vst [vmem:[%s289 + $0x28] sm:$0xff] %v522
        %531 = vst [vmem:[%s289 + $0x30] sm:$0xff] %v523
        %532 = vst [vmem:[%s289 + $0x38] sm:$0xff] %v524
      $region44: #{generator_forward.7} parent=35 // pred_fallthru
        _
      %s533 = smul.u32 2, %s19
      %p534 = scmp.lt.s32.totalorder %s533, 1
      %s535 = scalar_select %p534, %s533, 1
      %s536 = smul.addr %s535, 8
      %s537 = scalar_lea.vmem %s4, %s536
      // Predicated region
      $region45: #{generator_forward.7} parent=35 // pred_check
        %p538 = pneg %p151
      $region46: #{generator_forward.7} parent=35 // pred_check_branch
        %540 = sbr.rel (%p538) target = $region48
      $region47: #{generator_forward.7} parent=35 // pred_region
        %s541 = smul.u32 2, %s19
      $region48: #{generator_forward.7} parent=35 // pred_fallthru
        _
      // Predicated region
      $region49: #{generator_forward.7} parent=35 // pred_check
        %p542 = pneg %p151
      $region50: #{generator_forward.7} parent=35 // pred_check_branch
        %544 = sbr.rel (%p542) target = $region52
      $region51: #{generator_forward.7} parent=35 // pred_region
        %s545 = smul.u32 2, %s19
        %p546 = scmp.lt.s32.totalorder %s545, 1
        %s547 = scalar_select %p546, %s545, 1
        %s548 = smul.addr %s547, 8
        %s549 = scalar_lea.vmem %s4, %s548
      $region52: #{generator_forward.7} parent=35 // pred_fallthru
        _
    $region36: #{generator_forward.7} parent=5 // pred_fallthru
      _
    %p550 = scmp.le.s32.totalorder 2, %s10
    // Predicated region
    $region53: #{generator_forward.7} parent=5 // pred_check
      %p551 = pneg %p550
    $region54: #{generator_forward.7} parent=5 // pred_check_branch
      %553 = sbr.rel (%p551) target = $region56
    $region55: #{generator_forward.7} parent=5 // pred_region
      %s554 = ssub.s32 %s10, 2
    $region56: #{generator_forward.7} parent=5 // pred_fallthru
      _
  $region6: #{generator_forward.7} parent=0 // loop_footer
    %s14 = sadd.s32 1, %s10
  $region7: #{generator_forward.7} parent=0 // loop_footer_branch
    %9 = sbr.rel target = $region3
  $region8: #{generator_forward.7} parent=0 // loop_exit
    _

// kernel: generator_forward.8
$region0: #{generator_forward.8}
  #allocation0 [shape = 'u32[]', space=smem, size = 0x4, offset = 0x4, fixed_abs, tag = 'smem constant byte address 0x4 - core index']
  #allocation1 [shape = 'u32[144,128]{1,0:T(1,128)}', space=vmem, size = 0x12000, scoped, tag = 'internal scratch']
  #allocation2 [shape = 'f32[8,1]{1,0:T(8,128)}', space=vmem, size = 0x1000, scoped, tag = 'scratch operand']
  #allocation3 [shape = 'f32[8,1]{1,0:T(8,128)}', space=vmem, size = 0x1000, scoped, tag = 'scratch operand']
  %s0 = inlined_call_operand.vmem [shape: bf16[4,64,512], index: 0, kind: input, shape index: {}]
  %s1 = inlined_call_operand.vmem [shape: bf16[4,8,64], index: 1, kind: input, shape index: {}]
  %s2 = inlined_call_operand.vmem [shape: f32[8,1], index: 2, kind: input, shape index: {}]
  %s3 = inlined_call_operand.vmem [shape: f32[8,1], index: 3, kind: input, shape index: {}]
  %s4 = inlined_call_operand.vmem [shape: f32[4,8,512], index: 4, kind: output, shape index: {}]
  %s5 = sld [smem:[#allocation0]]
  $region57: #{generator_forward.8} parent=0
    _
  %s7 = ssub.s32 1, %s5
  %s8 = scalar_select 0, %s7, %s5
  loop: start=0, step=1, limit=6
  $region2: #{generator_forward.8} parent=0 // loop_pre_header
    _
  $region3: #{generator_forward.8} parent=0 // loop_header
    %s10 = sphi 0, %s14
    %p11 = scmp.ge.s32.totalorder %s10, 6
    %s17 = sphi 0, %s29
    %s18 = sphi 0, %s25
    %s19 = sphi 0, %s17
    %s20 = sphi 0, %s18
    %s21 = sphi 0, %s19
    %s22 = sphi 0, %s20
    %s32 = sphi 0, %s34
    %s35 = sphi 0, %s32
    %s36 = sphi 0, %s35
    %s52 = sphi 0, %s36
    %s60 = sphi 0, %s62
    %s63 = sphi 0, %s60
    %s64 = sphi 0, %s63
    %s80 = sphi 0, %s64
    %s86 = sphi 0, %s88
    %s89 = sphi 0, %s86
    %s90 = sphi 0, %s89
    %s106 = sphi 0, %s90
    %s112 = sphi 0, %s114
    %s115 = sphi 0, %s112
    %s116 = sphi 0, %s115
    %s132 = sphi 0, %s116
    %s138 = sphi 0, %s140
    %s141 = sphi 0, %s138
    %s142 = sphi 0, %s141
    %s158 = sphi 0, %s142
  $region4: #{generator_forward.8} parent=0 // loop_header_branch
    %13 = sbr.rel (%p11) target = $region8
  $region5: #{generator_forward.8} parent=0 // loop_body
    %s15 = ssub.s32 %s10, 1
    %s16 = ssub.s32 %s10, 2
    %s23 = sadd.s32 1, %s18
    %p24 = scmp.ge.s32.totalorder %s23, 4
    %s25 = scalar_select %p24, 0, %s23
    %s26 = sadd.s32 1, %s17
    %s27 = scalar_select %p24, %s26, %s17
    %p28 = scmp.ge.s32.totalorder %s27, 1
    %s29 = scalar_select %p28, 0, %s27
    %s30 = ssub.s32 %s18, %s25
    %p31 = scmp.eq.s32.totalorder %s30, 0
    %s33 = sadd.s32 %s32, 1
    %s34 = scalar_select %p31, %s32, %s33
    %p37 = pneg %p31
    %p38 = scmp.eq.s32.totalorder %s10, 3
    %p39 = por %p37, %p38
    %p40 = scmp.ne.s32.totalorder %s32, %s35
    %p41 = scmp.eq.s32.totalorder %s10, 0
    %p42 = por %p40, %p41
    %p43 = scmp.ne.s32.totalorder %s32, %s35
    %p44 = scmp.eq.s32.totalorder %s15, 3
    %p45 = por %p43, %p44
    %p46 = scmp.ne.s32.totalorder %s35, %s36
    %p47 = scmp.eq.s32.totalorder %s15, 0
    %p48 = por %p46, %p47
    %p49 = scmp.ne.s32.totalorder %s35, %s36
    %p50 = scmp.eq.s32.totalorder %s16, 3
    %p51 = por %p49, %p50
    %p53 = scmp.ne.s32.totalorder %s36, %s52
    %p54 = scmp.eq.s32.totalorder %s16, 0
    %p55 = por %p53, %p54
    %s56 = ssub.s32 %s18, %s25
    %s57 = ssub.s32 %s17, %s29
    %s58 = sor.u32 %s56, %s57
    %p59 = scmp.eq.s32.totalorder %s58, 0
    %s61 = sadd.s32 %s60, 1
    %s62 = scalar_select %p59, %s60, %s61
    %p65 = pneg %p59
    %p66 = scmp.eq.s32.totalorder %s10, 3
    %p67 = por %p65, %p66
    %p68 = scmp.ne.s32.totalorder %s60, %s63
    %p69 = scmp.eq.s32.totalorder %s10, 0
    %p70 = por %p68, %p69
    %p71 = scmp.ne.s32.totalorder %s60, %s63
    %p72 = scmp.eq.s32.totalorder %s15, 3
    %p73 = por %p71, %p72
    %p74 = scmp.ne.s32.totalorder %s63, %s64
    %p75 = scmp.eq.s32.totalorder %s15, 0
    %p76 = por %p74, %p75
    %p77 = scmp.ne.s32.totalorder %s63, %s64
    %p78 = scmp.eq.s32.totalorder %s16, 3
    %p79 = por %p77, %p78
    %p81 = scmp.ne.s32.totalorder %s64, %s80
    %p82 = scmp.eq.s32.totalorder %s16, 0
    %p83 = por %p81, %p82
    %s84 = ssub.s32 %s17, %s29
    %p85 = scmp.eq.s32.totalorder %s84, 0
    %s87 = sadd.s32 %s86, 1
    %s88 = scalar_select %p85, %s86, %s87
    %p91 = pneg %p85
    %p92 = scmp.eq.s32.totalorder %s10, 3
    %p93 = por %p91, %p92
    %p94 = scmp.ne.s32.totalorder %s86, %s89
    %p95 = scmp.eq.s32.totalorder %s10, 0
    %p96 = por %p94, %p95
    %p97 = scmp.ne.s32.totalorder %s86, %s89
    %p98 = scmp.eq.s32.totalorder %s15, 3
    %p99 = por %p97, %p98
    %p100 = scmp.ne.s32.totalorder %s89, %s90
    %p101 = scmp.eq.s32.totalorder %s15, 0
    %p102 = por %p100, %p101
    %p103 = scmp.ne.s32.totalorder %s89, %s90
    %p104 = scmp.eq.s32.totalorder %s16, 3
    %p105 = por %p103, %p104
    %p107 = scmp.ne.s32.totalorder %s90, %s106
    %p108 = scmp.eq.s32.totalorder %s16, 0
    %p109 = por %p107, %p108
    %s110 = ssub.s32 %s17, %s29
    %p111 = scmp.eq.s32.totalorder %s110, 0
    %s113 = sadd.s32 %s112, 1
    %s114 = scalar_select %p111, %s112, %s113
    %p117 = pneg %p111
    %p118 = scmp.eq.s32.totalorder %s10, 3
    %p119 = por %p117, %p118
    %p120 = scmp.ne.s32.totalorder %s112, %s115
    %p121 = scmp.eq.s32.totalorder %s10, 0
    %p122 = por %p120, %p121
    %p123 = scmp.ne.s32.totalorder %s112, %s115
    %p124 = scmp.eq.s32.totalorder %s15, 3
    %p125 = por %p123, %p124
    %p126 = scmp.ne.s32.totalorder %s115, %s116
    %p127 = scmp.eq.s32.totalorder %s15, 0
    %p128 = por %p126, %p127
    %p129 = scmp.ne.s32.totalorder %s115, %s116
    %p130 = scmp.eq.s32.totalorder %s16, 3
    %p131 = por %p129, %p130
    %p133 = scmp.ne.s32.totalorder %s116, %s132
    %p134 = scmp.eq.s32.totalorder %s16, 0
    %p135 = por %p133, %p134
    %s136 = ssub.s32 %s17, %s29
    %p137 = scmp.eq.s32.totalorder %s136, 0
    %s139 = sadd.s32 %s138, 1
    %s140 = scalar_select %p137, %s138, %s139
    %p143 = pneg %p137
    %p144 = scmp.eq.s32.totalorder %s10, 3
    %p145 = por %p143, %p144
    %p146 = scmp.ne.s32.totalorder %s138, %s141
    %p147 = scmp.eq.s32.totalorder %s10, 0
    %p148 = por %p146, %p147
    %p149 = scmp.ne.s32.totalorder %s138, %s141
    %p150 = scmp.eq.s32.totalorder %s15, 3
    %p151 = por %p149, %p150
    %p152 = scmp.ne.s32.totalorder %s141, %s142
    %p153 = scmp.eq.s32.totalorder %s15, 0
    %p154 = por %p152, %p153
    %p155 = scmp.ne.s32.totalorder %s141, %s142
    %p156 = scmp.eq.s32.totalorder %s16, 3
    %p157 = por %p155, %p156
    %p159 = scmp.ne.s32.totalorder %s142, %s158
    %p160 = scmp.eq.s32.totalorder %s16, 0
    %p161 = por %p159, %p160
    %p162 = scmp.le.s32.totalorder 1, %s10
    %p163 = scmp.lt.s32.totalorder %s10, 5
    %p164 = pnand %p162, %p163
    %p165 = pneg %p164
    // Predicated region
    $region9: #{generator_forward.8} parent=5 // pred_check
      _
    $region10: #{generator_forward.8} parent=5 // pred_check_branch
      %167 = sbr.rel (%p164) target = $region12
    $region11: #{generator_forward.8} parent=5 // pred_region
      %s168 = ssub.s32 %s10, 1
      // Predicated region
      $region13: #{generator_forward.8} parent=11 // pred_check
        %p169 = pneg %p102
      $region14: #{generator_forward.8} parent=11 // pred_check_branch
        %171 = sbr.rel (%p169) target = $region16
      $region15: #{generator_forward.8} parent=11 // pred_region
        %p172 = scmp.lt.s32.totalorder %s19, 0
        %s173 = scalar_select %p172, %s19, 0
        %s174 = smul.addr %s173, 8
        %s175 = scalar_lea.vmem %s2, %s174
      $region16: #{generator_forward.8} parent=11 // pred_fallthru
        _
      // Predicated region
      $region17: #{generator_forward.8} parent=11 // pred_check
        %p176 = pneg %p128
      $region18: #{generator_forward.8} parent=11 // pred_check_branch
        %178 = sbr.rel (%p176) target = $region20
      $region19: #{generator_forward.8} parent=11 // pred_region
        %p179 = scmp.lt.s32.totalorder %s19, 0
        %s180 = scalar_select %p179, %s19, 0
        %s181 = smul.addr %s180, 8
        %s182 = scalar_lea.vmem %s3, %s181
      $region20: #{generator_forward.8} parent=11 // pred_fallthru
        _
    $region12: #{generator_forward.8} parent=5 // pred_fallthru
      _
    %p183 = scmp.lt.s32.totalorder %s10, 4
    // Predicated region
    $region21: #{generator_forward.8} parent=5 // pred_check
      %p184 = pneg %p183
    $region22: #{generator_forward.8} parent=5 // pred_check_branch
      %186 = sbr.rel (%p184) target = $region24
    $region23: #{generator_forward.8} parent=5 // pred_region
      // Predicated region
      $region25: #{generator_forward.8} parent=23 // pred_check
        %p187 = pneg %p42
      $region26: #{generator_forward.8} parent=23 // pred_check_branch
        %189 = sbr.rel (%p187) target = $region28
      $region27: #{generator_forward.8} parent=23 // pred_region
        %p190 = scmp.lt.s32.totalorder %s18, 3
        %s191 = scalar_select %p190, %s18, 3
        %s192 = smul.addr %s191, 32
        %s193 = smul.addr %s192, 4
        %s194 = scalar_lea.vmem %s0, %s193
      $region28: #{generator_forward.8} parent=23 // pred_fallthru
        _
      // Predicated region
      $region29: #{generator_forward.8} parent=23 // pred_check
        %p195 = pneg %p70
      $region30: #{generator_forward.8} parent=23 // pred_check_branch
        %197 = sbr.rel (%p195) target = $region32
      $region31: #{generator_forward.8} parent=23 // pred_region
        %p198 = scmp.lt.s32.totalorder %s18, 3
        %s199 = scalar_select %p198, %s18, 3
        %p200 = scmp.lt.s32.totalorder %s17, 0
        %s201 = scalar_select %p200, %s17, 0
        %s202 = sadd.s32 %s201, %s199
        %s203 = smul.addr %s202, 4
        %s204 = scalar_lea.vmem %s1, %s203
      $region32: #{generator_forward.8} parent=23 // pred_fallthru
        _
    $region24: #{generator_forward.8} parent=5 // pred_fallthru
      _
    %p205 = scmp.le.s32.totalorder 1, %s10
    %p206 = scmp.lt.s32.totalorder %s10, 5
    %p207 = pnand %p205, %p206
    %p208 = pneg %p207
    // Predicated region
    $region33: #{generator_forward.8} parent=5 // pred_check
      _
    $region34: #{generator_forward.8} parent=5 // pred_check_branch
      %210 = sbr.rel (%p207) target = $region36
    $region35: #{generator_forward.8} parent=5 // pred_region
      %s211 = ssub.s32 %s10, 1
      %p212 = scmp.lt.s32.totalorder %s20, 3
      %s213 = scalar_select %p212, %s20, 3
      %s214 = smul.addr %s213, 32
      %s215 = smul.addr %s214, 4
      %s216 = scalar_lea.vmem %s0, %s215
      %p217 = pneg %p48
      %p218 = pneg %p45
      %p219 = scmp.lt.s32.totalorder %s20, 3
      %s220 = scalar_select %p219, %s20, 3
      %p221 = scmp.lt.s32.totalorder %s19, 0
      %s222 = scalar_select %p221, %s19, 0
      %s223 = sadd.s32 %s222, %s220
      %s224 = smul.addr %s223, 4
      %s225 = scalar_lea.vmem %s1, %s224
      %p226 = pneg %p76
      %p227 = pneg %p73
      %p228 = scmp.lt.s32.totalorder %s19, 0
      %s229 = scalar_select %p228, %s19, 0
      %s230 = smul.addr %s229, 8
      %s231 = scalar_lea.vmem %s2, %s230
      %p232 = pneg %p102
      %p233 = pneg %p99
      %p234 = scmp.lt.s32.totalorder %s19, 0
      %s235 = scalar_select %p234, %s19, 0
      %s236 = smul.addr %s235, 8
      %s237 = scalar_lea.vmem %s3, %s236
      %p238 = pneg %p128
      %p239 = pneg %p125
      %p240 = pneg %p154
      %p241 = pneg %p151
      %p242 = scmp.lt.s32.totalorder %s19, 0
      %s243 = scalar_select %p242, %s19, 0
      %s244 = smul.addr %s243, 4
      %s245 = smul.addr %s244, 8
      %s246 = scalar_lea.vmem %s4, %s245
      %p247 = scmp.lt.s32.totalorder %s20, 3
      %s248 = scalar_select %p247, %s20, 3
      %s249 = smul.addr %s248, 32
      %s250 = smul.addr %s249, 4
      %s251 = scalar_lea.vmem %s0, %s250
      %p252 = scmp.lt.s32.totalorder %s20, 3
      %s253 = scalar_select %p252, %s20, 3
      %p254 = scmp.lt.s32.totalorder %s19, 0
      %s255 = scalar_select %p254, %s19, 0
      %s256 = sadd.s32 %s255, %s253
      %s257 = smul.addr %s256, 4
      %s258 = scalar_lea.vmem %s1, %s257
      %p259 = scmp.lt.s32.totalorder %s19, 0
      %s260 = scalar_select %p259, %s19, 0
      %s261 = smul.addr %s260, 8
      %s262 = scalar_lea.vmem %s2, %s261
      %p263 = scmp.lt.s32.totalorder %s19, 0
      %s264 = scalar_select %p263, %s19, 0
      %s265 = smul.addr %s264, 8
      %s266 = scalar_lea.vmem %s3, %s265
      %p267 = scmp.lt.s32.totalorder %s19, 0
      %s268 = scalar_select %p267, %s19, 0
      %s269 = smul.addr %s268, 4
      %s270 = smul.addr %s269, 8
      %s271 = scalar_lea.vmem %s4, %s270
      %p273 = scmp.eq.s32.totalorder %s20, 0
      // Predicated region
      $region37: #{generator_forward.8} parent=35 // pred_check
        %p274 = pneg %p273
      $region38: #{generator_forward.8} parent=35 // pred_check_branch
        %276 = sbr.rel (%p274) target = $region40
      $region39: #{generator_forward.8} parent=35 // pred_region
        %vm277 = vcmask 7168
        %278 = vst.msk [vmem:[#allocation2] sm:$0xff] %vm277, 0.0
        %279 = vst.msk [vmem:[#allocation3] sm:$0xff] %vm277, 0.0
      $region40: #{generator_forward.8} parent=35 // pred_fallthru
        _
      %v280 = vld [vmem:[%s258] sm:$0xf]
      %v281 = vld [vmem:[%s251] sm:$0xff]
      %v282 = vld [vmem:[%s251 + $0x8] sm:$0xff]
      %v283 = vld [vmem:[%s251 + $0x10] sm:$0xff]
      %v284 = vld [vmem:[%s251 + $0x18] sm:$0xff]
      %v285 = vld [vmem:[%s251 + $0x20] sm:$0xff]
      %v286 = vld [vmem:[%s251 + $0x28] sm:$0xff]
      %v287 = vld [vmem:[%s251 + $0x30] sm:$0xff]
      %v288 = vld [vmem:[%s251 + $0x38] sm:$0xff]
      %v289 = vld [vmem:[%s251 + $0x40] sm:$0xff]
      %v290 = vld [vmem:[%s251 + $0x48] sm:$0xff]
      %v291 = vld [vmem:[%s251 + $0x50] sm:$0xff]
      %v292 = vld [vmem:[%s251 + $0x58] sm:$0xff]
      %v293 = vld [vmem:[%s251 + $0x60] sm:$0xff]
      %v294 = vld [vmem:[%s251 + $0x68] sm:$0xff]
      %v295 = vld [vmem:[%s251 + $0x70] sm:$0xff]
      %v296 = vld [vmem:[%s251 + $0x78] sm:$0xff]
      %v313 = vunpack.c.l.b16 %v281
      %v314 = vunpack.c.h.b16 %v281
      %v315 = vunpack.c.l.b16 %v282
      %v316 = vunpack.c.h.b16 %v282
      %v317 = vunpack.c.l.b16 %v283
      %v318 = vunpack.c.h.b16 %v283
      %v319 = vunpack.c.l.b16 %v284
      %v320 = vunpack.c.h.b16 %v284
      %v321 = vunpack.c.l.b16 %v285
      %v322 = vunpack.c.h.b16 %v285
      %v323 = vunpack.c.l.b16 %v286
      %v324 = vunpack.c.h.b16 %v286
      %v325 = vunpack.c.l.b16 %v287
      %v326 = vunpack.c.h.b16 %v287
      %v327 = vunpack.c.l.b16 %v288
      %v328 = vunpack.c.h.b16 %v288
      %v329 = vunpack.c.l.b16 %v289
      %v330 = vunpack.c.h.b16 %v289
      %v331 = vunpack.c.l.b16 %v290
      %v332 = vunpack.c.h.b16 %v290
      %v333 = vunpack.c.l.b16 %v291
      %v334 = vunpack.c.h.b16 %v291
      %v335 = vunpack.c.l.b16 %v292
      %v336 = vunpack.c.h.b16 %v292
      %v337 = vunpack.c.l.b16 %v293
      %v338 = vunpack.c.h.b16 %v293
      %v339 = vunpack.c.l.b16 %v294
      %v340 = vunpack.c.h.b16 %v294
      %v341 = vunpack.c.l.b16 %v295
      %v342 = vunpack.c.h.b16 %v295
      %v343 = vunpack.c.l.b16 %v296
      %v344 = vunpack.c.h.b16 %v296
      %v345 = vpack.c.b16 %v317, %v313
      %v346 = vpack.c.b16 %v318, %v314
      %v347 = vpack.c.b16 %v319, %v315
      %v348 = vpack.c.b16 %v320, %v316
      %v349 = vpack.c.b16 %v325, %v321
      %v350 = vpack.c.b16 %v326, %v322
      %v351 = vpack.c.b16 %v327, %v323
      %v352 = vpack.c.b16 %v328, %v324
      %v353 = vpack.c.b16 %v333, %v329
      %v354 = vpack.c.b16 %v334, %v330
      %v355 = vpack.c.b16 %v335, %v331
      %v356 = vpack.c.b16 %v336, %v332
      %v357 = vpack.c.b16 %v341, %v337
      %v358 = vpack.c.b16 %v342, %v338
      %v359 = vpack.c.b16 %v343, %v339
      %v360 = vpack.c.b16 %v344, %v340
      %vm377 = vcmask 523264
      %v379 = vsel %vm377, %v280, 0
      %381 = vmatprep.subr.bf16.mxu0 0
      %382 = vmatpush1.bf16.msra.mxu0 0
      %383 = vmatprep.subr.bf16.mxu0 0
      %384 = vmatpush1.bf16.msra.mxu0 0
      %385 = vmatprep.subr.bf16.mxu0 0
      %386 = vmatpush1.bf16.msra.mxu0 0
      %387 = vmatprep.subr.bf16.mxu0 0
      %388 = vmatpush1.bf16.msra.mxu0 0
      %389 = vmatprep.subr.bf16.mxu0 %v358
      %390 = vmatpush1.bf16.msra.mxu0 %v357
      %391 = vmatprep.subr.bf16.mxu0 %v354
      %392 = vmatpush1.bf16.msra.mxu0 %v353
      %393 = vmatprep.subr.bf16.mxu0 %v350
      %394 = vmatpush1.bf16.msra.mxu0 %v349
      %395 = vmatprep.subr.bf16.mxu0 %v346
      %396 = vmatpush1.bf16.msra.mxu0 %v345
      %397 = vmatprep.subr.bf16.mxu0 0
      %398 = vmatpush2.bf16.msra.mxu0 0
      %399 = vmatprep.subr.bf16.mxu0 0
      %400 = vmatpush2.bf16.msra.mxu0 0
      %401 = vmatprep.subr.bf16.mxu0 0
      %402 = vmatpush2.bf16.msra.mxu0 0
      %403 = vmatprep.subr.bf16.mxu0 0
      %404 = vmatpush2.bf16.msra.mxu0 0
      %405 = vmatprep.subr.bf16.mxu0 0
      %406 = vmatpush2.bf16.msra.mxu0 0
      %407 = vmatprep.subr.bf16.mxu0 0
      %408 = vmatpush2.bf16.msra.mxu0 0
      %409 = vmatprep.subr.bf16.mxu0 0
      %410 = vmatpush2.bf16.msra.mxu0 0
      %411 = vmatprep.subr.bf16.mxu0 0
      %412 = vmatpush2.bf16.msra.mxu0 0
      %413 = vmatprep.mubr.bf16.mxu0 0
      %414 = vmatmul.mubr.bf16.gmra.mxu0 %v379
      %v415 = vpop.f32.mrf.mxu0
      %v416 = vadd.f32 0.0, %v415
      %v417 = vpop.f32.mrf.mxu0
      %v418 = vadd.f32 0.0, %v417
      %v419 = vpop.f32.mrf.mxu0
      %v420 = vpop.f32.mrf.mxu0
      %421 = vdwg.mxu0
      %422 = vmatprep.subr.bf16.mxu0 0
      %423 = vmatpush1.bf16.msra.mxu0 0
      %424 = vmatprep.subr.bf16.mxu0 0
      %425 = vmatpush1.bf16.msra.mxu0 0
      %426 = vmatprep.subr.bf16.mxu0 0
      %427 = vmatpush1.bf16.msra.mxu0 0
      %428 = vmatprep.subr.bf16.mxu0 0
      %429 = vmatpush1.bf16.msra.mxu0 0
      %430 = vmatprep.subr.bf16.mxu0 %v360
      %431 = vmatpush1.bf16.msra.mxu0 %v359
      %432 = vmatprep.subr.bf16.mxu0 %v356
      %433 = vmatpush1.bf16.msra.mxu0 %v355
      %434 = vmatprep.subr.bf16.mxu0 %v352
      %435 = vmatpush1.bf16.msra.mxu0 %v351
      %436 = vmatprep.subr.bf16.mxu0 %v348
      %437 = vmatpush1.bf16.msra.mxu0 %v347
      %438 = vmatprep.subr.bf16.mxu0 0
      %439 = vmatpush2.bf16.msra.mxu0 0
      %440 = vmatprep.subr.bf16.mxu0 0
      %441 = vmatpush2.bf16.msra.mxu0 0
      %442 = vmatprep.subr.bf16.mxu0 0
      %443 = vmatpush2.bf16.msra.mxu0 0
      %444 = vmatprep.subr.bf16.mxu0 0
      %445 = vmatpush2.bf16.msra.mxu0 0
      %446 = vmatprep.subr.bf16.mxu0 0
      %447 = vmatpush2.bf16.msra.mxu0 0
      %448 = vmatprep.subr.bf16.mxu0 0
      %449 = vmatpush2.bf16.msra.mxu0 0
      %450 = vmatprep.subr.bf16.mxu0 0
      %451 = vmatpush2.bf16.msra.mxu0 0
      %452 = vmatprep.subr.bf16.mxu0 0
      %453 = vmatpush2.bf16.msra.mxu0 0
      %454 = vmatprep.mubr.bf16.mxu0 0
      %455 = vmatmul.mubr.bf16.gmra.mxu0 %v379
      %v456 = vpop.f32.mrf.mxu0
      %v457 = vadd.f32 0.0, %v456
      %v458 = vpop.f32.mrf.mxu0
      %v459 = vadd.f32 0.0, %v458
      %v460 = vpop.f32.mrf.mxu0
      %v461 = vpop.f32.mrf.mxu0
      %462 = vdwg.mxu0
      %s463 = smul.u32 %s20, 4
      %s464 = smul.addr %s463, 8
      %s465 = scalar_lea.vmem %s271, %s464
      %466 = vst [vmem:[%s465] sm:$0xff] %v416
      %467 = vst [vmem:[%s465 + $0x8] sm:$0xff] %v418
      %468 = vst [vmem:[%s465 + $0x10] sm:$0xff] %v457
      %469 = vst [vmem:[%s465 + $0x18] sm:$0xff] %v459
      %v470 = vld [vmem:[#allocation2] sm:$0xff]
      %v471 = vadd.f32 %v416, %v418
      %v472 = vadd.f32 %v471, %v457
      %v473 = vadd.f32 %v472, %v459
      %474 = vadd.xlane.f32.xlu0 %v473
      %v475 = vpop.xlane.xlu0 %474
      %v476 = vadd.f32 %v470, %v475
      %vm477 = vcmask 7168
      %478 = vst.msk [vmem:[#allocation2] sm:$0xff] %vm477, %v476
      %v479 = vld [vmem:[#allocation3] sm:$0xff]
      %v480 = vmul.f32 %v416, %v416
      %v481 = vmul.f32 %v418, %v418
      %v482 = vmul.f32 %v457, %v457
      %v483 = vmul.f32 %v459, %v459
      %v484 = vadd.f32 %v480, %v481
      %v485 = vadd.f32 %v484, %v482
      %v486 = vadd.f32 %v485, %v483
      %487 = vadd.xlane.f32.xlu0 %v486
      %v488 = vpop.xlane.xlu0 %487
      %v489 = vadd.f32 %v479, %v488
      %490 = vst.msk [vmem:[#allocation3] sm:$0xff] %vm477, %v489
      %p491 = scmp.eq.s32.totalorder %s20, 3
      // Predicated region
      $region41: #{generator_forward.8} parent=35 // pred_check
        %p492 = pneg %p491
      $region42: #{generator_forward.8} parent=35 // pred_check_branch
        %494 = sbr.rel (%p492) target = $region44
      $region43: #{generator_forward.8} parent=35 // pred_region
        %v495 = vld [vmem:[#allocation2] sm:$0xff]
        %v496 = vmul.f32 %v495, 0.00048828125
        %v497 = vld [vmem:[#allocation3] sm:$0xff]
        %v498 = vmul.f32 %v497, 0.00048828125
        %v499 = vmul.f32 %v496, %v496
        %v500 = vsub.f32 %v498, %v499
        %v501 = vmax.f32 %v500, 0.0
        %v502 = vld [vmem:[%s262] sm:$0xff]
        %v503 = vadd.f32 %v501, 1e-05
        %v504 = vrsqrt.pop %v503
        %v505 = vmul.f32 %v502, %v504
        %v506 = vld [vmem:[%s266] sm:$0xff]
        %v507 = vmul.f32 %v496, %v505
        %v508 = vsub.f32 %v506, %v507
        %v509 = vld [vmem:[%s271] sm:$0xff]
        %v510 = vld [vmem:[%s271 + $0x8] sm:$0xff]
        %v511 = vld [vmem:[%s271 + $0x10] sm:$0xff]
        %v512 = vld [vmem:[%s271 + $0x18] sm:$0xff]
        %v513 = vld [vmem:[%s271 + $0x20] sm:$0xff]
        %v514 = vld [vmem:[%s271 + $0x28] sm:$0xff]
        %v515 = vld [vmem:[%s271 + $0x30] sm:$0xff]
        %v516 = vld [vmem:[%s271 + $0x38] sm:$0xff]
        %v517 = vld [vmem:[%s271 + $0x40] sm:$0xff]
        %v518 = vld [vmem:[%s271 + $0x48] sm:$0xff]
        %v519 = vld [vmem:[%s271 + $0x50] sm:$0xff]
        %v520 = vld [vmem:[%s271 + $0x58] sm:$0xff]
        %v521 = vld [vmem:[%s271 + $0x60] sm:$0xff]
        %v522 = vld [vmem:[%s271 + $0x68] sm:$0xff]
        %v523 = vld [vmem:[%s271 + $0x70] sm:$0xff]
        %v524 = vld [vmem:[%s271 + $0x78] sm:$0xff]
        %526 = vset.pattern.permute.xlu0 0
        %527 = vperm.xlu0 %526, %v505
        %v528 = vpop.permute.xlu0 %527
        %v530 = vmul.f32 %v509, %v528
        %v531 = vmul.f32 %v510, %v528
        %v532 = vmul.f32 %v511, %v528
        %v533 = vmul.f32 %v512, %v528
        %v534 = vmul.f32 %v513, %v528
        %v535 = vmul.f32 %v514, %v528
        %v536 = vmul.f32 %v515, %v528
        %v537 = vmul.f32 %v516, %v528
        %v538 = vmul.f32 %v517, %v528
        %v539 = vmul.f32 %v518, %v528
        %v540 = vmul.f32 %v519, %v528
        %v541 = vmul.f32 %v520, %v528
        %v542 = vmul.f32 %v521, %v528
        %v543 = vmul.f32 %v522, %v528
        %v544 = vmul.f32 %v523, %v528
        %v545 = vmul.f32 %v524, %v528
        %547 = vset.pattern.permute.xlu0 0
        %548 = vperm.xlu0 %547, %v508
        %v549 = vpop.permute.xlu0 %548
        %v551 = vadd.f32 %v530, %v549
        %v552 = vadd.f32 %v531, %v549
        %v553 = vadd.f32 %v532, %v549
        %v554 = vadd.f32 %v533, %v549
        %v555 = vadd.f32 %v534, %v549
        %v556 = vadd.f32 %v535, %v549
        %v557 = vadd.f32 %v536, %v549
        %v558 = vadd.f32 %v537, %v549
        %v559 = vadd.f32 %v538, %v549
        %v560 = vadd.f32 %v539, %v549
        %v561 = vadd.f32 %v540, %v549
        %v562 = vadd.f32 %v541, %v549
        %v563 = vadd.f32 %v542, %v549
        %v564 = vadd.f32 %v543, %v549
        %v565 = vadd.f32 %v544, %v549
        %v566 = vadd.f32 %v545, %v549
        %v567 = vmax.f32 %v551, 0.0
        %v568 = vmax.f32 %v552, 0.0
        %v569 = vmax.f32 %v553, 0.0
        %v570 = vmax.f32 %v554, 0.0
        %v571 = vmax.f32 %v555, 0.0
        %v572 = vmax.f32 %v556, 0.0
        %v573 = vmax.f32 %v557, 0.0
        %v574 = vmax.f32 %v558, 0.0
        %v575 = vmax.f32 %v559, 0.0
        %v576 = vmax.f32 %v560, 0.0
        %v577 = vmax.f32 %v561, 0.0
        %v578 = vmax.f32 %v562, 0.0
        %v579 = vmax.f32 %v563, 0.0
        %v580 = vmax.f32 %v564, 0.0
        %v581 = vmax.f32 %v565, 0.0
        %v582 = vmax.f32 %v566, 0.0
        %583 = vst [vmem:[%s271] sm:$0xff] %v567
        %584 = vst [vmem:[%s271 + $0x8] sm:$0xff] %v568
        %585 = vst [vmem:[%s271 + $0x10] sm:$0xff] %v569
        %586 = vst [vmem:[%s271 + $0x18] sm:$0xff] %v570
        %587 = vst [vmem:[%s271 + $0x20] sm:$0xff] %v571
        %588 = vst [vmem:[%s271 + $0x28] sm:$0xff] %v572
        %589 = vst [vmem:[%s271 + $0x30] sm:$0xff] %v573
        %590 = vst [vmem:[%s271 + $0x38] sm:$0xff] %v574
        %591 = vst [vmem:[%s271 + $0x40] sm:$0xff] %v575
        %592 = vst [vmem:[%s271 + $0x48] sm:$0xff] %v576
        %593 = vst [vmem:[%s271 + $0x50] sm:$0xff] %v577
        %594 = vst [vmem:[%s271 + $0x58] sm:$0xff] %v578
        %595 = vst [vmem:[%s271 + $0x60] sm:$0xff] %v579
        %596 = vst [vmem:[%s271 + $0x68] sm:$0xff] %v580
        %597 = vst [vmem:[%s271 + $0x70] sm:$0xff] %v581
        %598 = vst [vmem:[%s271 + $0x78] sm:$0xff] %v582
      $region44: #{generator_forward.8} parent=35 // pred_fallthru
        _
      %p599 = scmp.lt.s32.totalorder %s19, 0
      %s600 = scalar_select %p599, %s19, 0
      %s601 = smul.addr %s600, 4
      %s602 = smul.addr %s601, 8
      %s603 = scalar_lea.vmem %s4, %s602
      // Predicated region
      $region45: #{generator_forward.8} parent=35 // pred_check
        %p604 = pneg %p151
      $region46: #{generator_forward.8} parent=35 // pred_check_branch
        %606 = sbr.rel (%p604) target = $region48
      $region47: #{generator_forward.8} parent=35 // pred_region
        _
      $region48: #{generator_forward.8} parent=35 // pred_fallthru
        _
      // Predicated region
      $region49: #{generator_forward.8} parent=35 // pred_check
        %p607 = pneg %p151
      $region50: #{generator_forward.8} parent=35 // pred_check_branch
        %609 = sbr.rel (%p607) target = $region52
      $region51: #{generator_forward.8} parent=35 // pred_region
        %p610 = scmp.lt.s32.totalorder %s19, 0
        %s611 = scalar_select %p610, %s19, 0
        %s612 = smul.addr %s611, 4
        %s613 = smul.addr %s612, 8
        %s614 = scalar_lea.vmem %s4, %s613
      $region52: #{generator_forward.8} parent=35 // pred_fallthru
        _
    $region36: #{generator_forward.8} parent=5 // pred_fallthru
      _
    %p615 = scmp.le.s32.totalorder 2, %s10
    // Predicated region
    $region53: #{generator_forward.8} parent=5 // pred_check
      %p616 = pneg %p615
    $region54: #{generator_forward.8} parent=5 // pred_check_branch
      %618 = sbr.rel (%p616) target = $region56
    $region55: #{generator_forward.8} parent=5 // pred_region
      %s619 = ssub.s32 %s10, 2
    $region56: #{generator_forward.8} parent=5 // pred_fallthru
      _
  $region6: #{generator_forward.8} parent=0 // loop_footer
    %s14 = sadd.s32 1, %s10
  $region7: #{generator_forward.8} parent=0 // loop_footer_branch
    %9 = sbr.rel target = $region3
  $region8: #{generator_forward.8} parent=0 // loop_exit
    _

// kernel: generator_forward.9
$region0: #{generator_forward.9}
  #allocation0 [shape = 'u32[]', space=smem, size = 0x4, offset = 0x4, fixed_abs, tag = 'smem constant byte address 0x4 - core index']
  #allocation1 [shape = 'u32[144,128]{1,0:T(1,128)}', space=vmem, size = 0x12000, scoped, tag = 'internal scratch']
  %s0 = inlined_call_operand.vmem [shape: bf16[4,32,2048], index: 0, kind: input, shape index: {}]
  %s1 = inlined_call_operand.vmem [shape: bf16[4,8,32], index: 1, kind: input, shape index: {}]
  %s2 = inlined_call_operand.vmem [shape: f32[8,1], index: 2, kind: input, shape index: {}]
  %s3 = inlined_call_operand.vmem [shape: f32[4,8,2048], index: 3, kind: output, shape index: {}]
  %s4 = sld [smem:[#allocation0]]
  $region45: #{generator_forward.9} parent=0
    _
  %s6 = ssub.s32 1, %s4
  %s7 = scalar_select 0, %s6, %s4
  loop: start=0, step=1, limit=6
  $region2: #{generator_forward.9} parent=0 // loop_pre_header
    _
  $region3: #{generator_forward.9} parent=0 // loop_header
    %s9 = sphi 0, %s13
    %p10 = scmp.ge.s32.totalorder %s9, 6
    %s16 = sphi 0, %s28
    %s17 = sphi 0, %s24
    %s18 = sphi 0, %s16
    %s19 = sphi 0, %s17
    %s20 = sphi 0, %s18
    %s21 = sphi 0, %s19
    %s31 = sphi 0, %s33
    %s34 = sphi 0, %s31
    %s35 = sphi 0, %s34
    %s51 = sphi 0, %s35
    %s59 = sphi 0, %s61
    %s62 = sphi 0, %s59
    %s63 = sphi 0, %s62
    %s79 = sphi 0, %s63
    %s85 = sphi 0, %s87
    %s88 = sphi 0, %s85
    %s89 = sphi 0, %s88
    %s105 = sphi 0, %s89
    %s113 = sphi 0, %s115
    %s116 = sphi 0, %s113
    %s117 = sphi 0, %s116
    %s133 = sphi 0, %s117
  $region4: #{generator_forward.9} parent=0 // loop_header_branch
    %12 = sbr.rel (%p10) target = $region8
  $region5: #{generator_forward.9} parent=0 // loop_body
    %s14 = ssub.s32 %s9, 1
    %s15 = ssub.s32 %s9, 2
    %s22 = sadd.s32 1, %s17
    %p23 = scmp.ge.s32.totalorder %s22, 4
    %s24 = scalar_select %p23, 0, %s22
    %s25 = sadd.s32 1, %s16
    %s26 = scalar_select %p23, %s25, %s16
    %p27 = scmp.ge.s32.totalorder %s26, 1
    %s28 = scalar_select %p27, 0, %s26
    %s29 = ssub.s32 %s17, %s24
    %p30 = scmp.eq.s32.totalorder %s29, 0
    %s32 = sadd.s32 %s31, 1
    %s33 = scalar_select %p30, %s31, %s32
    %p36 = pneg %p30
    %p37 = scmp.eq.s32.totalorder %s9, 3
    %p38 = por %p36, %p37
    %p39 = scmp.ne.s32.totalorder %s31, %s34
    %p40 = scmp.eq.s32.totalorder %s9, 0
    %p41 = por %p39, %p40
    %p42 = scmp.ne.s32.totalorder %s31, %s34
    %p43 = scmp.eq.s32.totalorder %s14, 3
    %p44 = por %p42, %p43
    %p45 = scmp.ne.s32.totalorder %s34, %s35
    %p46 = scmp.eq.s32.totalorder %s14, 0
    %p47 = por %p45, %p46
    %p48 = scmp.ne.s32.totalorder %s34, %s35
    %p49 = scmp.eq.s32.totalorder %s15, 3
    %p50 = por %p48, %p49
    %p52 = scmp.ne.s32.totalorder %s35, %s51
    %p53 = scmp.eq.s32.totalorder %s15, 0
    %p54 = por %p52, %p53
    %s55 = ssub.s32 %s17, %s24
    %s56 = ssub.s32 %s16, %s28
    %s57 = sor.u32 %s55, %s56
    %p58 = scmp.eq.s32.totalorder %s57, 0
    %s60 = sadd.s32 %s59, 1
    %s61 = scalar_select %p58, %s59, %s60
    %p64 = pneg %p58
    %p65 = scmp.eq.s32.totalorder %s9, 3
    %p66 = por %p64, %p65
    %p67 = scmp.ne.s32.totalorder %s59, %s62
    %p68 = scmp.eq.s32.totalorder %s9, 0
    %p69 = por %p67, %p68
    %p70 = scmp.ne.s32.totalorder %s59, %s62
    %p71 = scmp.eq.s32.totalorder %s14, 3
    %p72 = por %p70, %p71
    %p73 = scmp.ne.s32.totalorder %s62, %s63
    %p74 = scmp.eq.s32.totalorder %s14, 0
    %p75 = por %p73, %p74
    %p76 = scmp.ne.s32.totalorder %s62, %s63
    %p77 = scmp.eq.s32.totalorder %s15, 3
    %p78 = por %p76, %p77
    %p80 = scmp.ne.s32.totalorder %s63, %s79
    %p81 = scmp.eq.s32.totalorder %s15, 0
    %p82 = por %p80, %p81
    %s83 = ssub.s32 %s16, %s28
    %p84 = scmp.eq.s32.totalorder %s83, 0
    %s86 = sadd.s32 %s85, 1
    %s87 = scalar_select %p84, %s85, %s86
    %p90 = pneg %p84
    %p91 = scmp.eq.s32.totalorder %s9, 3
    %p92 = por %p90, %p91
    %p93 = scmp.ne.s32.totalorder %s85, %s88
    %p94 = scmp.eq.s32.totalorder %s9, 0
    %p95 = por %p93, %p94
    %p96 = scmp.ne.s32.totalorder %s85, %s88
    %p97 = scmp.eq.s32.totalorder %s14, 3
    %p98 = por %p96, %p97
    %p99 = scmp.ne.s32.totalorder %s88, %s89
    %p100 = scmp.eq.s32.totalorder %s14, 0
    %p101 = por %p99, %p100
    %p102 = scmp.ne.s32.totalorder %s88, %s89
    %p103 = scmp.eq.s32.totalorder %s15, 3
    %p104 = por %p102, %p103
    %p106 = scmp.ne.s32.totalorder %s89, %s105
    %p107 = scmp.eq.s32.totalorder %s15, 0
    %p108 = por %p106, %p107
    %s109 = ssub.s32 %s17, %s24
    %s110 = ssub.s32 %s16, %s28
    %s111 = sor.u32 %s109, %s110
    %p112 = scmp.eq.s32.totalorder %s111, 0
    %s114 = sadd.s32 %s113, 1
    %s115 = scalar_select %p112, %s113, %s114
    %p118 = pneg %p112
    %p119 = scmp.eq.s32.totalorder %s9, 3
    %p120 = por %p118, %p119
    %p121 = scmp.ne.s32.totalorder %s113, %s116
    %p122 = scmp.eq.s32.totalorder %s9, 0
    %p123 = por %p121, %p122
    %p124 = scmp.ne.s32.totalorder %s113, %s116
    %p125 = scmp.eq.s32.totalorder %s14, 3
    %p126 = por %p124, %p125
    %p127 = scmp.ne.s32.totalorder %s116, %s117
    %p128 = scmp.eq.s32.totalorder %s14, 0
    %p129 = por %p127, %p128
    %p130 = scmp.ne.s32.totalorder %s116, %s117
    %p131 = scmp.eq.s32.totalorder %s15, 3
    %p132 = por %p130, %p131
    %p134 = scmp.ne.s32.totalorder %s117, %s133
    %p135 = scmp.eq.s32.totalorder %s15, 0
    %p136 = por %p134, %p135
    %p137 = scmp.le.s32.totalorder 1, %s9
    %p138 = scmp.lt.s32.totalorder %s9, 5
    %p139 = pnand %p137, %p138
    %p140 = pneg %p139
    // Predicated region
    $region9: #{generator_forward.9} parent=5 // pred_check
      _
    $region10: #{generator_forward.9} parent=5 // pred_check_branch
      %142 = sbr.rel (%p139) target = $region12
    $region11: #{generator_forward.9} parent=5 // pred_region
      %s143 = ssub.s32 %s9, 1
      // Predicated region
      $region13: #{generator_forward.9} parent=11 // pred_check
        %p144 = pneg %p101
      $region14: #{generator_forward.9} parent=11 // pred_check_branch
        %146 = sbr.rel (%p144) target = $region16
      $region15: #{generator_forward.9} parent=11 // pred_region
        %p147 = scmp.lt.s32.totalorder %s18, 0
        %s148 = scalar_select %p147, %s18, 0
        %s149 = smul.addr %s148, 8
        %s150 = scalar_lea.vmem %s2, %s149
      $region16: #{generator_forward.9} parent=11 // pred_fallthru
        _
    $region12: #{generator_forward.9} parent=5 // pred_fallthru
      _
    %p151 = scmp.lt.s32.totalorder %s9, 4
    // Predicated region
    $region17: #{generator_forward.9} parent=5 // pred_check
      %p152 = pneg %p151
    $region18: #{generator_forward.9} parent=5 // pred_check_branch
      %154 = sbr.rel (%p152) target = $region20
    $region19: #{generator_forward.9} parent=5 // pred_region
      // Predicated region
      $region21: #{generator_forward.9} parent=19 // pred_check
        %p155 = pneg %p41
      $region22: #{generator_forward.9} parent=19 // pred_check_branch
        %157 = sbr.rel (%p155) target = $region24
      $region23: #{generator_forward.9} parent=19 // pred_region
        %p158 = scmp.lt.s32.totalorder %s17, 3
        %s159 = scalar_select %p158, %s17, 3
        %s160 = smul.addr %s159, 64
        %s161 = smul.addr %s160, 4
        %s162 = scalar_lea.vmem %s0, %s161
      $region24: #{generator_forward.9} parent=19 // pred_fallthru
        _
      // Predicated region
      $region25: #{generator_forward.9} parent=19 // pred_check
        %p163 = pneg %p69
      $region26: #{generator_forward.9} parent=19 // pred_check_branch
        %165 = sbr.rel (%p163) target = $region28
      $region27: #{generator_forward.9} parent=19 // pred_region
        %p166 = scmp.lt.s32.totalorder %s17, 3
        %s167 = scalar_select %p166, %s17, 3
        %p168 = scmp.lt.s32.totalorder %s16, 0
        %s169 = scalar_select %p168, %s16, 0
        %s170 = sadd.s32 %s169, %s167
        %s171 = smul.addr %s170, 4
        %s172 = scalar_lea.vmem %s1, %s171
      $region28: #{generator_forward.9} parent=19 // pred_fallthru
        _
    $region20: #{generator_forward.9} parent=5 // pred_fallthru
      _
    %p173 = scmp.le.s32.totalorder 1, %s9
    %p174 = scmp.lt.s32.totalorder %s9, 5
    %p175 = pnand %p173, %p174
    %p176 = pneg %p175
    // Predicated region
    $region29: #{generator_forward.9} parent=5 // pred_check
      _
    $region30: #{generator_forward.9} parent=5 // pred_check_branch
      %178 = sbr.rel (%p175) target = $region32
    $region31: #{generator_forward.9} parent=5 // pred_region
      %s179 = ssub.s32 %s9, 1
      %p180 = scmp.lt.s32.totalorder %s19, 3
      %s181 = scalar_select %p180, %s19, 3
      %s182 = smul.addr %s181, 64
      %s183 = smul.addr %s182, 4
      %s184 = scalar_lea.vmem %s0, %s183
      %p185 = pneg %p47
      %p186 = pneg %p44
      %p187 = scmp.lt.s32.totalorder %s19, 3
      %s188 = scalar_select %p187, %s19, 3
      %p189 = scmp.lt.s32.totalorder %s18, 0
      %s190 = scalar_select %p189, %s18, 0
      %s191 = sadd.s32 %s190, %s188
      %s192 = smul.addr %s191, 4
      %s193 = scalar_lea.vmem %s1, %s192
      %p194 = pneg %p75
      %p195 = pneg %p72
      %p196 = scmp.lt.s32.totalorder %s18, 0
      %s197 = scalar_select %p196, %s18, 0
      %s198 = smul.addr %s197, 8
      %s199 = scalar_lea.vmem %s2, %s198
      %p200 = pneg %p101
      %p201 = pneg %p98
      %p202 = pneg %p129
      %p203 = pneg %p126
      %p204 = scmp.lt.s32.totalorder %s19, 3
      %s205 = scalar_select %p204, %s19, 3
      %p206 = scmp.lt.s32.totalorder %s18, 0
      %s207 = scalar_select %p206, %s18, 0
      %s208 = smul.addr %s207, 16
      %s209 = smul.addr %s205, 16
      %s210 = sadd.s32 %s208, %s209
      %s211 = smul.addr %s210, 8
      %s212 = scalar_lea.vmem %s3, %s211
      %p213 = scmp.lt.s32.totalorder %s19, 3
      %s214 = scalar_select %p213, %s19, 3
      %s215 = smul.addr %s214, 64
      %s216 = smul.addr %s215, 4
      %s217 = scalar_lea.vmem %s0, %s216
      %p218 = scmp.lt.s32.totalorder %s19, 3
      %s219 = scalar_select %p218, %s19, 3
      %p220 = scmp.lt.s32.totalorder %s18, 0
      %s221 = scalar_select %p220, %s18, 0
      %s222 = sadd.s32 %s221, %s219
      %s223 = smul.addr %s222, 4
      %s224 = scalar_lea.vmem %s1, %s223
      %p225 = scmp.lt.s32.totalorder %s18, 0
      %s226 = scalar_select %p225, %s18, 0
      %s227 = smul.addr %s226, 8
      %s228 = scalar_lea.vmem %s2, %s227
      %p229 = scmp.lt.s32.totalorder %s19, 3
      %s230 = scalar_select %p229, %s19, 3
      %p231 = scmp.lt.s32.totalorder %s18, 0
      %s232 = scalar_select %p231, %s18, 0
      %s233 = smul.addr %s232, 16
      %s234 = smul.addr %s230, 16
      %s235 = sadd.s32 %s233, %s234
      %s236 = smul.addr %s235, 8
      %s237 = scalar_lea.vmem %s3, %s236
      %v239 = vld [vmem:[%s224] sm:$0xf]
      %v240 = vld [vmem:[%s217] sm:$0xff]
      %v241 = vld [vmem:[%s217 + $0x8] sm:$0xff]
      %v242 = vld [vmem:[%s217 + $0x10] sm:$0xff]
      %v243 = vld [vmem:[%s217 + $0x18] sm:$0xff]
      %v244 = vld [vmem:[%s217 + $0x20] sm:$0xff]
      %v245 = vld [vmem:[%s217 + $0x28] sm:$0xff]
      %v246 = vld [vmem:[%s217 + $0x30] sm:$0xff]
      %v247 = vld [vmem:[%s217 + $0x38] sm:$0xff]
      %v248 = vld [vmem:[%s217 + $0x40] sm:$0xff]
      %v249 = vld [vmem:[%s217 + $0x48] sm:$0xff]
      %v250 = vld [vmem:[%s217 + $0x50] sm:$0xff]
      %v251 = vld [vmem:[%s217 + $0x58] sm:$0xff]
      %v252 = vld [vmem:[%s217 + $0x60] sm:$0xff]
      %v253 = vld [vmem:[%s217 + $0x68] sm:$0xff]
      %v254 = vld [vmem:[%s217 + $0x70] sm:$0xff]
      %v255 = vld [vmem:[%s217 + $0x78] sm:$0xff]
      %v256 = vld [vmem:[%s217 + $0x80] sm:$0xff]
      %v257 = vld [vmem:[%s217 + $0x88] sm:$0xff]
      %v258 = vld [vmem:[%s217 + $0x90] sm:$0xff]
      %v259 = vld [vmem:[%s217 + $0x98] sm:$0xff]
      %v260 = vld [vmem:[%s217 + $0xa0] sm:$0xff]
      %v261 = vld [vmem:[%s217 + $0xa8] sm:$0xff]
      %v262 = vld [vmem:[%s217 + $0xb0] sm:$0xff]
      %v263 = vld [vmem:[%s217 + $0xb8] sm:$0xff]
      %v264 = vld [vmem:[%s217 + $0xc0] sm:$0xff]
      %v265 = vld [vmem:[%s217 + $0xc8] sm:$0xff]
      %v266 = vld [vmem:[%s217 + $0xd0] sm:$0xff]
      %v267 = vld [vmem:[%s217 + $0xd8] sm:$0xff]
      %v268 = vld [vmem:[%s217 + $0xe0] sm:$0xff]
      %v269 = vld [vmem:[%s217 + $0xe8] sm:$0xff]
      %v270 = vld [vmem:[%s217 + $0xf0] sm:$0xff]
      %v271 = vld [vmem:[%s217 + $0xf8] sm:$0xff]
      %v272 = vld [vmem:[%s228] sm:$0xff]
      %274 = vset.pattern.permute.xlu0 0
      %275 = vperm.xlu0 %274, %v272
      %v276 = vpop.permute.xlu0 %275
      %v310 = vunpack.c.l.b16 %v240
      %v311 = vunpack.c.h.b16 %v240
      %v312 = vunpack.c.l.b16 %v241
      %v313 = vunpack.c.h.b16 %v241
      %v314 = vunpack.c.l.b16 %v242
      %v315 = vunpack.c.h.b16 %v242
      %v316 = vunpack.c.l.b16 %v243
      %v317 = vunpack.c.h.b16 %v243
      %v318 = vunpack.c.l.b16 %v244
      %v319 = vunpack.c.h.b16 %v244
      %v320 = vunpack.c.l.b16 %v245
      %v321 = vunpack.c.h.b16 %v245
      %v322 = vunpack.c.l.b16 %v246
      %v323 = vunpack.c.h.b16 %v246
      %v324 = vunpack.c.l.b16 %v247
      %v325 = vunpack.c.h.b16 %v247
      %v326 = vunpack.c.l.b16 %v248
      %v327 = vunpack.c.h.b16 %v248
      %v328 = vunpack.c.l.b16 %v249
      %v329 = vunpack.c.h.b16 %v249
      %v330 = vunpack.c.l.b16 %v250
      %v331 = vunpack.c.h.b16 %v250
      %v332 = vunpack.c.l.b16 %v251
      %v333 = vunpack.c.h.b16 %v251
      %v334 = vunpack.c.l.b16 %v252
      %v335 = vunpack.c.h.b16 %v252
      %v336 = vunpack.c.l.b16 %v253
      %v337 = vunpack.c.h.b16 %v253
      %v338 = vunpack.c.l.b16 %v254
      %v339 = vunpack.c.h.b16 %v254
      %v340 = vunpack.c.l.b16 %v255
      %v341 = vunpack.c.h.b16 %v255
      %v342 = vunpack.c.l.b16 %v256
      %v343 = vunpack.c.h.b16 %v256
      %v344 = vunpack.c.l.b16 %v257
      %v345 = vunpack.c.h.b16 %v257
      %v346 = vunpack.c.l.b16 %v258
      %v347 = vunpack.c.h.b16 %v258
      %v348 = vunpack.c.l.b16 %v259
      %v349 = vunpack.c.h.b16 %v259
      %v350 = vunpack.c.l.b16 %v260
      %v351 = vunpack.c.h.b16 %v260
      %v352 = vunpack.c.l.b16 %v261
      %v353 = vunpack.c.h.b16 %v261
      %v354 = vunpack.c.l.b16 %v262
      %v355 = vunpack.c.h.b16 %v262
      %v356 = vunpack.c.l.b16 %v263
      %v357 = vunpack.c.h.b16 %v263
      %v358 = vunpack.c.l.b16 %v264
      %v359 = vunpack.c.h.b16 %v264
      %v360 = vunpack.c.l.b16 %v265
      %v361 = vunpack.c.h.b16 %v265
      %v362 = vunpack.c.l.b16 %v266
      %v363 = vunpack.c.h.b16 %v266
      %v364 = vunpack.c.l.b16 %v267
      %v365 = vunpack.c.h.b16 %v267
      %v366 = vunpack.c.l.b16 %v268
      %v367 = vunpack.c.h.b16 %v268
      %v368 = vunpack.c.l.b16 %v269
      %v369 = vunpack.c.h.b16 %v269
      %v370 = vunpack.c.l.b16 %v270
      %v371 = vunpack.c.h.b16 %v270
      %v372 = vunpack.c.l.b16 %v271
      %v373 = vunpack.c.h.b16 %v271
      %v374 = vpack.c.b16 %v326, %v310
      %v375 = vpack.c.b16 %v327, %v311
      %v376 = vpack.c.b16 %v328, %v312
      %v377 = vpack.c.b16 %v329, %v313
      %v378 = vpack.c.b16 %v330, %v314
      %v379 = vpack.c.b16 %v331, %v315
      %v380 = vpack.c.b16 %v332, %v316
      %v381 = vpack.c.b16 %v333, %v317
      %v382 = vpack.c.b16 %v334, %v318
      %v383 = vpack.c.b16 %v335, %v319
      %v384 = vpack.c.b16 %v336, %v320
      %v385 = vpack.c.b16 %v337, %v321
      %v386 = vpack.c.b16 %v338, %v322
      %v387 = vpack.c.b16 %v339, %v323
      %v388 = vpack.c.b16 %v340, %v324
      %v389 = vpack.c.b16 %v341, %v325
      %v390 = vpack.c.b16 %v358, %v342
      %v391 = vpack.c.b16 %v359, %v343
      %v392 = vpack.c.b16 %v360, %v344
      %v393 = vpack.c.b16 %v361, %v345
      %v394 = vpack.c.b16 %v362, %v346
      %v395 = vpack.c.b16 %v363, %v347
      %v396 = vpack.c.b16 %v364, %v348
      %v397 = vpack.c.b16 %v365, %v349
      %v398 = vpack.c.b16 %v366, %v350
      %v399 = vpack.c.b16 %v367, %v351
      %v400 = vpack.c.b16 %v368, %v352
      %v401 = vpack.c.b16 %v369, %v353
      %v402 = vpack.c.b16 %v370, %v354
      %v403 = vpack.c.b16 %v371, %v355
      %v404 = vpack.c.b16 %v372, %v356
      %v405 = vpack.c.b16 %v373, %v357
      %vm438 = vcmask 261120
      %v440 = vsel %vm438, %v239, 0
      %442 = vmatprep.subr.bf16.mxu0 0
      %443 = vmatpush1.bf16.msra.mxu0 0
      %444 = vmatprep.subr.bf16.mxu0 0
      %445 = vmatpush1.bf16.msra.mxu0 0
      %446 = vmatprep.subr.bf16.mxu0 0
      %447 = vmatpush1.bf16.msra.mxu0 0
      %448 = vmatprep.subr.bf16.mxu0 0
      %449 = vmatpush1.bf16.msra.mxu0 0
      %450 = vmatprep.subr.bf16.mxu0 0
      %451 = vmatpush1.bf16.msra.mxu0 0
      %452 = vmatprep.subr.bf16.mxu0 0
      %453 = vmatpush1.bf16.msra.mxu0 0
      %454 = vmatprep.subr.bf16.mxu0 %v391
      %455 = vmatpush1.bf16.msra.mxu0 %v390
      %456 = vmatprep.subr.bf16.mxu0 %v375
      %457 = vmatpush1.bf16.msra.mxu0 %v374
      %458 = vmatprep.subr.bf16.mxu0 0
      %459 = vmatpush2.bf16.msra.mxu0 0
      %460 = vmatprep.subr.bf16.mxu0 0
      %461 = vmatpush2.bf16.msra.mxu0 0
      %462 = vmatprep.subr.bf16.mxu0 0
      %463 = vmatpush2.bf16.msra.mxu0 0
      %464 = vmatprep.subr.bf16.mxu0 0
      %465 = vmatpush2.bf16.msra.mxu0 0
      %466 = vmatprep.subr.bf16.mxu0 0
      %467 = vmatpush2.bf16.msra.mxu0 0
      %468 = vmatprep.subr.bf16.mxu0 0
      %469 = vmatpush2.bf16.msra.mxu0 0
      %470 = vmatprep.subr.bf16.mxu0 0
      %471 = vmatpush2.bf16.msra.mxu0 0
      %472 = vmatprep.subr.bf16.mxu0 0
      %473 = vmatpush2.bf16.msra.mxu0 0
      %474 = vmatprep.mubr.bf16.mxu0 0
      %475 = vmatmul.mubr.bf16.gmra.mxu0 %v440
      %v476 = vpop.f32.mrf.mxu0
      %v477 = vadd.f32 %v276, %v476
      %v478 = vpop.f32.mrf.mxu0
      %v479 = vadd.f32 %v276, %v478
      %v480 = vpop.f32.mrf.mxu0
      %v481 = vpop.f32.mrf.mxu0
      %482 = vdwg.mxu0
      %483 = vmatprep.subr.bf16.mxu0 0
      %484 = vmatpush1.bf16.msra.mxu0 0
      %485 = vmatprep.subr.bf16.mxu0 0
      %486 = vmatpush1.bf16.msra.mxu0 0
      %487 = vmatprep.subr.bf16.mxu0 0
      %488 = vmatpush1.bf16.msra.mxu0 0
      %489 = vmatprep.subr.bf16.mxu0 0
      %490 = vmatpush1.bf16.msra.mxu0 0
      %491 = vmatprep.subr.bf16.mxu0 0
      %492 = vmatpush1.bf16.msra.mxu0 0
      %493 = vmatprep.subr.bf16.mxu0 0
      %494 = vmatpush1.bf16.msra.mxu0 0
      %495 = vmatprep.subr.bf16.mxu0 %v393
      %496 = vmatpush1.bf16.msra.mxu0 %v392
      %497 = vmatprep.subr.bf16.mxu0 %v377
      %498 = vmatpush1.bf16.msra.mxu0 %v376
      %499 = vmatprep.subr.bf16.mxu0 0
      %500 = vmatpush2.bf16.msra.mxu0 0
      %501 = vmatprep.subr.bf16.mxu0 0
      %502 = vmatpush2.bf16.msra.mxu0 0
      %503 = vmatprep.subr.bf16.mxu0 0
      %504 = vmatpush2.bf16.msra.mxu0 0
      %505 = vmatprep.subr.bf16.mxu0 0
      %506 = vmatpush2.bf16.msra.mxu0 0
      %507 = vmatprep.subr.bf16.mxu0 0
      %508 = vmatpush2.bf16.msra.mxu0 0
      %509 = vmatprep.subr.bf16.mxu0 0
      %510 = vmatpush2.bf16.msra.mxu0 0
      %511 = vmatprep.subr.bf16.mxu0 0
      %512 = vmatpush2.bf16.msra.mxu0 0
      %513 = vmatprep.subr.bf16.mxu0 0
      %514 = vmatpush2.bf16.msra.mxu0 0
      %515 = vmatprep.mubr.bf16.mxu0 0
      %516 = vmatmul.mubr.bf16.gmra.mxu0 %v440
      %v517 = vpop.f32.mrf.mxu0
      %v518 = vadd.f32 %v276, %v517
      %v519 = vpop.f32.mrf.mxu0
      %v520 = vadd.f32 %v276, %v519
      %v521 = vpop.f32.mrf.mxu0
      %v522 = vpop.f32.mrf.mxu0
      %523 = vdwg.mxu0
      %524 = vmatprep.subr.bf16.mxu0 0
      %525 = vmatpush1.bf16.msra.mxu0 0
      %526 = vmatprep.subr.bf16.mxu0 0
      %527 = vmatpush1.bf16.msra.mxu0 0
      %528 = vmatprep.subr.bf16.mxu0 0
      %529 = vmatpush1.bf16.msra.mxu0 0
      %530 = vmatprep.subr.bf16.mxu0 0
      %531 = vmatpush1.bf16.msra.mxu0 0
      %532 = vmatprep.subr.bf16.mxu0 0
      %533 = vmatpush1.bf16.msra.mxu0 0
      %534 = vmatprep.subr.bf16.mxu0 0
      %535 = vmatpush1.bf16.msra.mxu0 0
      %536 = vmatprep.subr.bf16.mxu0 %v395
      %537 = vmatpush1.bf16.msra.mxu0 %v394
      %538 = vmatprep.subr.bf16.mxu0 %v379
      %539 = vmatpush1.bf16.msra.mxu0 %v378
      %540 = vmatprep.subr.bf16.mxu0 0
      %541 = vmatpush2.bf16.msra.mxu0 0
      %542 = vmatprep.subr.bf16.mxu0 0
      %543 = vmatpush2.bf16.msra.mxu0 0
      %544 = vmatprep.subr.bf16.mxu0 0
      %545 = vmatpush2.bf16.msra.mxu0 0
      %546 = vmatprep.subr.bf16.mxu0 0
      %547 = vmatpush2.bf16.msra.mxu0 0
      %548 = vmatprep.subr.bf16.mxu0 0
      %549 = vmatpush2.bf16.msra.mxu0 0
      %550 = vmatprep.subr.bf16.mxu0 0
      %551 = vmatpush2.bf16.msra.mxu0 0
      %552 = vmatprep.subr.bf16.mxu0 0
      %553 = vmatpush2.bf16.msra.mxu0 0
      %554 = vmatprep.subr.bf16.mxu0 0
      %555 = vmatpush2.bf16.msra.mxu0 0
      %556 = vmatprep.mubr.bf16.mxu0 0
      %557 = vmatmul.mubr.bf16.gmra.mxu0 %v440
      %v558 = vpop.f32.mrf.mxu0
      %v559 = vadd.f32 %v276, %v558
      %v560 = vpop.f32.mrf.mxu0
      %v561 = vadd.f32 %v276, %v560
      %v562 = vpop.f32.mrf.mxu0
      %v563 = vpop.f32.mrf.mxu0
      %564 = vdwg.mxu0
      %565 = vmatprep.subr.bf16.mxu0 0
      %566 = vmatpush1.bf16.msra.mxu0 0
      %567 = vmatprep.subr.bf16.mxu0 0
      %568 = vmatpush1.bf16.msra.mxu0 0
      %569 = vmatprep.subr.bf16.mxu0 0
      %570 = vmatpush1.bf16.msra.mxu0 0
      %571 = vmatprep.subr.bf16.mxu0 0
      %572 = vmatpush1.bf16.msra.mxu0 0
      %573 = vmatprep.subr.bf16.mxu0 0
      %574 = vmatpush1.bf16.msra.mxu0 0
      %575 = vmatprep.subr.bf16.mxu0 0
      %576 = vmatpush1.bf16.msra.mxu0 0
      %577 = vmatprep.subr.bf16.mxu0 %v397
      %578 = vmatpush1.bf16.msra.mxu0 %v396
      %579 = vmatprep.subr.bf16.mxu0 %v381
      %580 = vmatpush1.bf16.msra.mxu0 %v380
      %581 = vmatprep.subr.bf16.mxu0 0
      %582 = vmatpush2.bf16.msra.mxu0 0
      %583 = vmatprep.subr.bf16.mxu0 0
      %584 = vmatpush2.bf16.msra.mxu0 0
      %585 = vmatprep.subr.bf16.mxu0 0
      %586 = vmatpush2.bf16.msra.mxu0 0
      %587 = vmatprep.subr.bf16.mxu0 0
      %588 = vmatpush2.bf16.msra.mxu0 0
      %589 = vmatprep.subr.bf16.mxu0 0
      %590 = vmatpush2.bf16.msra.mxu0 0
      %591 = vmatprep.subr.bf16.mxu0 0
      %592 = vmatpush2.bf16.msra.mxu0 0
      %593 = vmatprep.subr.bf16.mxu0 0
      %594 = vmatpush2.bf16.msra.mxu0 0
      %595 = vmatprep.subr.bf16.mxu0 0
      %596 = vmatpush2.bf16.msra.mxu0 0
      %597 = vmatprep.mubr.bf16.mxu0 0
      %598 = vmatmul.mubr.bf16.gmra.mxu0 %v440
      %v599 = vpop.f32.mrf.mxu0
      %v600 = vadd.f32 %v276, %v599
      %v601 = vpop.f32.mrf.mxu0
      %v602 = vadd.f32 %v276, %v601
      %v603 = vpop.f32.mrf.mxu0
      %v604 = vpop.f32.mrf.mxu0
      %605 = vdwg.mxu0
      %606 = vmatprep.subr.bf16.mxu0 0
      %607 = vmatpush1.bf16.msra.mxu0 0
      %608 = vmatprep.subr.bf16.mxu0 0
      %609 = vmatpush1.bf16.msra.mxu0 0
      %610 = vmatprep.subr.bf16.mxu0 0
      %611 = vmatpush1.bf16.msra.mxu0 0
      %612 = vmatprep.subr.bf16.mxu0 0
      %613 = vmatpush1.bf16.msra.mxu0 0
      %614 = vmatprep.subr.bf16.mxu0 0
      %615 = vmatpush1.bf16.msra.mxu0 0
      %616 = vmatprep.subr.bf16.mxu0 0
      %617 = vmatpush1.bf16.msra.mxu0 0
      %618 = vmatprep.subr.bf16.mxu0 %v399
      %619 = vmatpush1.bf16.msra.mxu0 %v398
      %620 = vmatprep.subr.bf16.mxu0 %v383
      %621 = vmatpush1.bf16.msra.mxu0 %v382
      %622 = vmatprep.subr.bf16.mxu0 0
      %623 = vmatpush2.bf16.msra.mxu0 0
      %624 = vmatprep.subr.bf16.mxu0 0
      %625 = vmatpush2.bf16.msra.mxu0 0
      %626 = vmatprep.subr.bf16.mxu0 0
      %627 = vmatpush2.bf16.msra.mxu0 0
      %628 = vmatprep.subr.bf16.mxu0 0
      %629 = vmatpush2.bf16.msra.mxu0 0
      %630 = vmatprep.subr.bf16.mxu0 0
      %631 = vmatpush2.bf16.msra.mxu0 0
      %632 = vmatprep.subr.bf16.mxu0 0
      %633 = vmatpush2.bf16.msra.mxu0 0
      %634 = vmatprep.subr.bf16.mxu0 0
      %635 = vmatpush2.bf16.msra.mxu0 0
      %636 = vmatprep.subr.bf16.mxu0 0
      %637 = vmatpush2.bf16.msra.mxu0 0
      %638 = vmatprep.mubr.bf16.mxu0 0
      %639 = vmatmul.mubr.bf16.gmra.mxu0 %v440
      %v640 = vpop.f32.mrf.mxu0
      %v641 = vadd.f32 %v276, %v640
      %v642 = vpop.f32.mrf.mxu0
      %v643 = vadd.f32 %v276, %v642
      %v644 = vpop.f32.mrf.mxu0
      %v645 = vpop.f32.mrf.mxu0
      %646 = vdwg.mxu0
      %647 = vmatprep.subr.bf16.mxu0 0
      %648 = vmatpush1.bf16.msra.mxu0 0
      %649 = vmatprep.subr.bf16.mxu0 0
      %650 = vmatpush1.bf16.msra.mxu0 0
      %651 = vmatprep.subr.bf16.mxu0 0
      %652 = vmatpush1.bf16.msra.mxu0 0
      %653 = vmatprep.subr.bf16.mxu0 0
      %654 = vmatpush1.bf16.msra.mxu0 0
      %655 = vmatprep.subr.bf16.mxu0 0
      %656 = vmatpush1.bf16.msra.mxu0 0
      %657 = vmatprep.subr.bf16.mxu0 0
      %658 = vmatpush1.bf16.msra.mxu0 0
      %659 = vmatprep.subr.bf16.mxu0 %v401
      %660 = vmatpush1.bf16.msra.mxu0 %v400
      %661 = vmatprep.subr.bf16.mxu0 %v385
      %662 = vmatpush1.bf16.msra.mxu0 %v384
      %663 = vmatprep.subr.bf16.mxu0 0
      %664 = vmatpush2.bf16.msra.mxu0 0
      %665 = vmatprep.subr.bf16.mxu0 0
      %666 = vmatpush2.bf16.msra.mxu0 0
      %667 = vmatprep.subr.bf16.mxu0 0
      %668 = vmatpush2.bf16.msra.mxu0 0
      %669 = vmatprep.subr.bf16.mxu0 0
      %670 = vmatpush2.bf16.msra.mxu0 0
      %671 = vmatprep.subr.bf16.mxu0 0
      %672 = vmatpush2.bf16.msra.mxu0 0
      %673 = vmatprep.subr.bf16.mxu0 0
      %674 = vmatpush2.bf16.msra.mxu0 0
      %675 = vmatprep.subr.bf16.mxu0 0
      %676 = vmatpush2.bf16.msra.mxu0 0
      %677 = vmatprep.subr.bf16.mxu0 0
      %678 = vmatpush2.bf16.msra.mxu0 0
      %679 = vmatprep.mubr.bf16.mxu0 0
      %680 = vmatmul.mubr.bf16.gmra.mxu0 %v440
      %v681 = vpop.f32.mrf.mxu0
      %v682 = vadd.f32 %v276, %v681
      %v683 = vpop.f32.mrf.mxu0
      %v684 = vadd.f32 %v276, %v683
      %v685 = vpop.f32.mrf.mxu0
      %v686 = vpop.f32.mrf.mxu0
      %687 = vdwg.mxu0
      %688 = vmatprep.subr.bf16.mxu0 0
      %689 = vmatpush1.bf16.msra.mxu0 0
      %690 = vmatprep.subr.bf16.mxu0 0
      %691 = vmatpush1.bf16.msra.mxu0 0
      %692 = vmatprep.subr.bf16.mxu0 0
      %693 = vmatpush1.bf16.msra.mxu0 0
      %694 = vmatprep.subr.bf16.mxu0 0
      %695 = vmatpush1.bf16.msra.mxu0 0
      %696 = vmatprep.subr.bf16.mxu0 0
      %697 = vmatpush1.bf16.msra.mxu0 0
      %698 = vmatprep.subr.bf16.mxu0 0
      %699 = vmatpush1.bf16.msra.mxu0 0
      %700 = vmatprep.subr.bf16.mxu0 %v403
      %701 = vmatpush1.bf16.msra.mxu0 %v402
      %702 = vmatprep.subr.bf16.mxu0 %v387
      %703 = vmatpush1.bf16.msra.mxu0 %v386
      %704 = vmatprep.subr.bf16.mxu0 0
      %705 = vmatpush2.bf16.msra.mxu0 0
      %706 = vmatprep.subr.bf16.mxu0 0
      %707 = vmatpush2.bf16.msra.mxu0 0
      %708 = vmatprep.subr.bf16.mxu0 0
      %709 = vmatpush2.bf16.msra.mxu0 0
      %710 = vmatprep.subr.bf16.mxu0 0
      %711 = vmatpush2.bf16.msra.mxu0 0
      %712 = vmatprep.subr.bf16.mxu0 0
      %713 = vmatpush2.bf16.msra.mxu0 0
      %714 = vmatprep.subr.bf16.mxu0 0
      %715 = vmatpush2.bf16.msra.mxu0 0
      %716 = vmatprep.subr.bf16.mxu0 0
      %717 = vmatpush2.bf16.msra.mxu0 0
      %718 = vmatprep.subr.bf16.mxu0 0
      %719 = vmatpush2.bf16.msra.mxu0 0
      %720 = vmatprep.mubr.bf16.mxu0 0
      %721 = vmatmul.mubr.bf16.gmra.mxu0 %v440
      %v722 = vpop.f32.mrf.mxu0
      %v723 = vadd.f32 %v276, %v722
      %v724 = vpop.f32.mrf.mxu0
      %v725 = vadd.f32 %v276, %v724
      %v726 = vpop.f32.mrf.mxu0
      %v727 = vpop.f32.mrf.mxu0
      %728 = vdwg.mxu0
      %729 = vmatprep.subr.bf16.mxu0 0
      %730 = vmatpush1.bf16.msra.mxu0 0
      %731 = vmatprep.subr.bf16.mxu0 0
      %732 = vmatpush1.bf16.msra.mxu0 0
      %733 = vmatprep.subr.bf16.mxu0 0
      %734 = vmatpush1.bf16.msra.mxu0 0
      %735 = vmatprep.subr.bf16.mxu0 0
      %736 = vmatpush1.bf16.msra.mxu0 0
      %737 = vmatprep.subr.bf16.mxu0 0
      %738 = vmatpush1.bf16.msra.mxu0 0
      %739 = vmatprep.subr.bf16.mxu0 0
      %740 = vmatpush1.bf16.msra.mxu0 0
      %741 = vmatprep.subr.bf16.mxu0 %v405
      %742 = vmatpush1.bf16.msra.mxu0 %v404
      %743 = vmatprep.subr.bf16.mxu0 %v389
      %744 = vmatpush1.bf16.msra.mxu0 %v388
      %745 = vmatprep.subr.bf16.mxu0 0
      %746 = vmatpush2.bf16.msra.mxu0 0
      %747 = vmatprep.subr.bf16.mxu0 0
      %748 = vmatpush2.bf16.msra.mxu0 0
      %749 = vmatprep.subr.bf16.mxu0 0
      %750 = vmatpush2.bf16.msra.mxu0 0
      %751 = vmatprep.subr.bf16.mxu0 0
      %752 = vmatpush2.bf16.msra.mxu0 0
      %753 = vmatprep.subr.bf16.mxu0 0
      %754 = vmatpush2.bf16.msra.mxu0 0
      %755 = vmatprep.subr.bf16.mxu0 0
      %756 = vmatpush2.bf16.msra.mxu0 0
      %757 = vmatprep.subr.bf16.mxu0 0
      %758 = vmatpush2.bf16.msra.mxu0 0
      %759 = vmatprep.subr.bf16.mxu0 0
      %760 = vmatpush2.bf16.msra.mxu0 0
      %761 = vmatprep.mubr.bf16.mxu0 0
      %762 = vmatmul.mubr.bf16.gmra.mxu0 %v440
      %v763 = vpop.f32.mrf.mxu0
      %v764 = vadd.f32 %v276, %v763
      %v765 = vpop.f32.mrf.mxu0
      %v766 = vadd.f32 %v276, %v765
      %v767 = vpop.f32.mrf.mxu0
      %v768 = vpop.f32.mrf.mxu0
      %769 = vdwg.mxu0
      %v770 = vtanh.pop %v477
      %v771 = vtanh.pop %v479
      %v772 = vtanh.pop %v518
      %v773 = vtanh.pop %v520
      %v774 = vtanh.pop %v559
      %v775 = vtanh.pop %v561
      %v776 = vtanh.pop %v600
      %v777 = vtanh.pop %v602
      %v778 = vtanh.pop %v641
      %v779 = vtanh.pop %v643
      %v780 = vtanh.pop %v682
      %v781 = vtanh.pop %v684
      %v782 = vtanh.pop %v723
      %v783 = vtanh.pop %v725
      %v784 = vtanh.pop %v764
      %v785 = vtanh.pop %v766
      %786 = vst [vmem:[%s237] sm:$0xff] %v770
      %787 = vst [vmem:[%s237 + $0x8] sm:$0xff] %v771
      %788 = vst [vmem:[%s237 + $0x10] sm:$0xff] %v772
      %789 = vst [vmem:[%s237 + $0x18] sm:$0xff] %v773
      %790 = vst [vmem:[%s237 + $0x20] sm:$0xff] %v774
      %791 = vst [vmem:[%s237 + $0x28] sm:$0xff] %v775
      %792 = vst [vmem:[%s237 + $0x30] sm:$0xff] %v776
      %793 = vst [vmem:[%s237 + $0x38] sm:$0xff] %v777
      %794 = vst [vmem:[%s237 + $0x40] sm:$0xff] %v778
      %795 = vst [vmem:[%s237 + $0x48] sm:$0xff] %v779
      %796 = vst [vmem:[%s237 + $0x50] sm:$0xff] %v780
      %797 = vst [vmem:[%s237 + $0x58] sm:$0xff] %v781
      %798 = vst [vmem:[%s237 + $0x60] sm:$0xff] %v782
      %799 = vst [vmem:[%s237 + $0x68] sm:$0xff] %v783
      %800 = vst [vmem:[%s237 + $0x70] sm:$0xff] %v784
      %801 = vst [vmem:[%s237 + $0x78] sm:$0xff] %v785
      %p802 = scmp.lt.s32.totalorder %s19, 3
      %s803 = scalar_select %p802, %s19, 3
      %p804 = scmp.lt.s32.totalorder %s18, 0
      %s805 = scalar_select %p804, %s18, 0
      %s806 = smul.addr %s805, 16
      %s807 = smul.addr %s803, 16
      %s808 = sadd.s32 %s806, %s807
      %s809 = smul.addr %s808, 8
      %s810 = scalar_lea.vmem %s3, %s809
      // Predicated region
      $region33: #{generator_forward.9} parent=31 // pred_check
        %p811 = pneg %p126
      $region34: #{generator_forward.9} parent=31 // pred_check_branch
        %813 = sbr.rel (%p811) target = $region36
      $region35: #{generator_forward.9} parent=31 // pred_region
        _
      $region36: #{generator_forward.9} parent=31 // pred_fallthru
        _
    $region32: #{generator_forward.9} parent=5 // pred_fallthru
      _
    %p814 = scmp.le.s32.totalorder 2, %s9
    // Predicated region
    $region37: #{generator_forward.9} parent=5 // pred_check
      %p815 = pneg %p814
    $region38: #{generator_forward.9} parent=5 // pred_check_branch
      %817 = sbr.rel (%p815) target = $region40
    $region39: #{generator_forward.9} parent=5 // pred_region
      %s818 = ssub.s32 %s9, 2
      // Predicated region
      $region41: #{generator_forward.9} parent=39 // pred_check
        %p819 = pneg %p132
      $region42: #{generator_forward.9} parent=39 // pred_check_branch
        %821 = sbr.rel (%p819) target = $region44
      $region43: #{generator_forward.9} parent=39 // pred_region
        %p822 = scmp.lt.s32.totalorder %s21, 3
        %s823 = scalar_select %p822, %s21, 3
        %p824 = scmp.lt.s32.totalorder %s20, 0
        %s825 = scalar_select %p824, %s20, 0
        %s826 = smul.addr %s825, 16
        %s827 = smul.addr %s823, 16
        %s828 = sadd.s32 %s826, %s827
        %s829 = smul.addr %s828, 8
        %s830 = scalar_lea.vmem %s3, %s829
      $region44: #{generator_forward.9} parent=39 // pred_fallthru
        _
    $region40: #{generator_forward.9} parent=5 // pred_fallthru
      _
  $region6: #{generator_forward.9} parent=0 // loop_footer
    %s13 = sadd.s32 1, %s9
  $region7: #{generator_forward.9} parent=0 // loop_footer_branch
    %8 = sbr.rel target = $region3
  $region8: #{generator_forward.9} parent=0 // loop_exit
    _

</llo_original>
